<compile_context>
chip_gen: v7x
topology: tpu7x:2x2x1
jax: 0.10.0
libtpu: 0.0.40
codegen_flags: <defaults>
</compile_context>

<pallas_src>
import numpy as np
import jax
import jax.numpy as jnp
from jax import lax
from jax.experimental import pallas as pl
from jax.experimental.pallas import tpu as pltpu  # noqa: F401  (TPU backend assumed)

# ---- small synthetic config ----
B, S, H = 2, 8, 32            # batch, seq, hidden
N_HEADS, HEAD_DIM = 4, 8      # H = N_HEADS * HEAD_DIM
INTER = 64                    # MLP intermediate size
RANK = 8                      # rank of the decomposed gate_proj
N_LAYERS = 2
VOCAB = 64
VOCAB_PAD = 128               # lane-dense lm_head output (sliced back to VOCAB)
T = B * S                     # batch folded into rows
EPS = 1e-6


def _rmsnorm(x, w):
    var = jnp.mean(x * x, axis=-1, keepdims=True)
    return x * lax.rsqrt(var + EPS) * w


def _mm(a, b):                 # [M,K] @ [K,N], fp32 accumulate on MXU
    return lax.dot_general(a, b, (((1,), (0,)), ((), ())),
                           preferred_element_type=jnp.float32)


def _mm_nt(a, b):              # [M,K] @ [N,K]^T
    return lax.dot_general(a, b, (((1,), (1,)), ((), ())),
                           preferred_element_type=jnp.float32)


# ---------------- fully fused stack kernel ----------------
def fused_llama_kernel(x_ref, cos_ref, sin_ref, rot_ref, bias_ref,
                       ln1_ref, wqkv_ref, wo_ref,
                       ln2_ref, ga_ref, gb_ref, wu_ref, wd_ref,
                       lnf_ref, wlm_ref, o_ref):
    x = x_ref[...]                           # [T, H], stays VMEM/vreg-resident

    # layer-invariant quantities, hoisted out of the (unrolled) layer loop
    cosf = cos_ref[...]                      # [T, H] (per-head-tiled, batch-folded)
    sinf = sin_ref[...]
    rot = rot_ref[...]                       # [H, H] block-diagonal rotate_half
    bias = bias_ref[...]                     # [T, T] causal + batch-block additive bias

    for li in range(N_LAYERS):               # static unroll over layers
        # --- attention block ---
        h1 = _rmsnorm(x, ln1_ref[li])                        # [T, H]
        qkv = _mm(h1, wqkv_ref[li])                          # [T, 3H], one MXU push
        q = qkv[:, :H]                                       # Wq pre-scaled by 1/sqrt(HD)
        k = qkv[:, H:2 * H]
        v = qkv[:, 2 * H:]
        # RoPE in concatenated layout: q*cos + (q @ R)*sin, R block-diag per head
        q = q * cosf + _mm(q, rot) * sinf
        k = k * cosf + _mm(k, rot) * sinf

        # per-head scores / softmax / PV: unavoidable per-head math as plain
        # 2-D matmuls on contiguous lane slices (no batched dot_general)
        parts = []
        for hh in range(N_HEADS):
            sl = slice(hh * HEAD_DIM, (hh + 1) * HEAD_DIM)
            s = _mm_nt(q[:, sl], k[:, sl]) + bias            # [T, T]
            p = jnp.exp(s - jnp.max(s, axis=-1, keepdims=True))
            p = p * pl.reciprocal(jnp.sum(p, axis=-1, keepdims=True), approx=False)
            parts.append(_mm(p, v[:, sl]))                   # [T, HD]
        attn = jnp.concatenate(parts, axis=-1)               # [T, H] lane concat
        x = x + _mm(attn, wo_ref[li])                        # o_proj: head-sum in MXU acc

        # --- MLP block with DECOMPOSED gate_proj: gate(x) = (x @ A) @ B ---
        h2 = _rmsnorm(x, ln2_ref[li])
        gate = _mm(_mm(h2, ga_ref[li]), gb_ref[li])          # low-rank gate_proj
        up = _mm(h2, wu_ref[li])
        x = x + _mm(gate * jax.nn.sigmoid(gate) * up, wd_ref[li])

    # --- final RMSNorm + lm_head (lane-dense, padded to 128) ---
    h = _rmsnorm(x, lnf_ref[...])
    o_ref[...] = _mm(h, wlm_ref[...])                        # [T, VOCAB_PAD]


# ---------------- wrapper ----------------
def prepare_fused_params(params):
    """One-time packing: fused (pre-scaled) QKV weights, stacked per-layer
    weights, and the padded lane-dense lm_head (hoisted out of the forward)."""
    scale = jnp.float32(1.0 / (HEAD_DIM ** 0.5))
    layers = params['layers']
    wqkv = jnp.stack([jnp.concatenate([lp['wq'] * scale, lp['wk'], lp['wv']], axis=1)
                      for lp in layers])                                    # [L,H,3H]
    return dict(
        embed=params['embed'],
        ln1=jnp.stack([lp['ln1'] for lp in layers]),                        # [L,1,H]
        wqkv=wqkv,
        wo=jnp.stack([lp['wo'] for lp in layers]),                          # [L,H,H]
        ln2=jnp.stack([lp['ln2'] for lp in layers]),
        ga=jnp.stack([lp['ga'] for lp in layers]),                          # [L,H,RANK]
        gb=jnp.stack([lp['gb'] for lp in layers]),                          # [L,RANK,INTER]
        wu=jnp.stack([lp['wu'] for lp in layers]),                          # [L,H,INTER]
        wd=jnp.stack([lp['wd'] for lp in layers]),                          # [L,INTER,H]
        lnf=params['ln_f'],
        lm_pad=jnp.zeros((H, VOCAB_PAD), jnp.float32).at[:, :VOCAB].set(params['lm_head']),
    )


def decomposed_llama_forward(input_ids, fused, cos_t, sin_t, rot_h, attn_bias):
    """Equivalent of DecomposedLlamaModel.forward: every layer's gate_proj is
    the decomposed (A, B) factorization; rest of the Llama stack unchanged.
    One fused pallas_call for the whole stack."""
    # glue: embedding gather + batch folding in plain JAX
    x = jnp.take(fused['embed'], input_ids.reshape(-1), axis=0)   # [T, H]

    # Gridless single invocation: everything (<1 MiB) is VMEM-resident.
    # At real Llama sizes: add a layer grid axis ("arbitrary", weight
    # BlockSpecs indexed by layer, x as resident accumulator), a "parallel"
    # row axis for the v7x second TensorCore, and bf16 MXU operands.
    out = pl.pallas_call(
        fused_llama_kernel,
        out_shape=jax.ShapeDtypeStruct((T, VOCAB_PAD), jnp.float32),
    )(x, cos_t, sin_t, rot_h, attn_bias,
      fused['ln1'], fused['wqkv'], fused['wo'],
      fused['ln2'], fused['ga'], fused['gb'], fused['wu'], fused['wd'],
      fused['lnf'], fused['lm_pad'])
    return out[:, :VOCAB].reshape(B, S, VOCAB)


# ---------------- pure-JAX reference (for correctness check) ----------------
def reference_forward(input_ids, params, cos_f, sin_f, rot):
    x = jnp.take(params['embed'], input_ids, axis=0)
    for lp in params['layers']:
        h1 = x * lax.rsqrt(jnp.mean(x * x, -1, keepdims=True) + EPS) * lp['ln1']
        q = h1 @ lp['wq']; k = h1 @ lp['wk']; v = h1 @ lp['wv']
        q = q * cos_f + (q @ rot) * sin_f
        k = k * cos_f + (k @ rot) * sin_f
        qh = q.reshape(B, S, N_HEADS, HEAD_DIM).transpose(0, 2, 1, 3)
        kh = k.reshape(B, S, N_HEADS, HEAD_DIM).transpose(0, 2, 1, 3)
        vh = v.reshape(B, S, N_HEADS, HEAD_DIM).transpose(0, 2, 1, 3)
        s = jnp.einsum('bhqd,bhkd->bhqk', qh, kh) / (HEAD_DIM ** 0.5)
        causal = jnp.tril(jnp.ones((S, S), bool))
        s = jnp.where(causal, s, -1e30)
        p = jax.nn.softmax(s, axis=-1)
        o = jnp.einsum('bhqk,bhkd->bhqd', p, vh).transpose(0, 2, 1, 3).reshape(B, S, H)
        x = x + o @ lp['wo']
        h2 = x * lax.rsqrt(jnp.mean(x * x, -1, keepdims=True) + EPS) * lp['ln2']
        gate = (h2 @ lp['ga']) @ lp['gb']
        up = h2 @ lp['wu']
        x = x + (jax.nn.silu(gate) * up) @ lp['wd']
    xf = x * lax.rsqrt(jnp.mean(x * x, -1, keepdims=True) + EPS) * params['ln_f']
    return xf @ params['lm_head']


# ---------------- deterministic parameter / table setup ----------------
def init_params(key):
    keys = jax.random.split(key, 2 + N_LAYERS)
    params = {
        'embed': jax.random.normal(keys[0], (VOCAB, H), jnp.float32) * 0.5,
        'ln_f': jnp.ones((1, H), jnp.float32),
        'lm_head': jax.random.normal(keys[1], (H, VOCAB), jnp.float32) * 0.1,
        'layers': [],
    }
    for i in range(N_LAYERS):
        lk = jax.random.split(keys[2 + i], 8)
        params['layers'].append({
            'ln1': jnp.ones((1, H), jnp.float32),
            'wq': jax.random.normal(lk[0], (H, H), jnp.float32) * 0.1,
            'wk': jax.random.normal(lk[1], (H, H), jnp.float32) * 0.1,
            'wv': jax.random.normal(lk[2], (H, H), jnp.float32) * 0.1,
            'wo': jax.random.normal(lk[3], (H, H), jnp.float32) * 0.1,
            'ln2': jnp.ones((1, H), jnp.float32),
            # decomposed gate_proj factors (replaces the original H x INTER gate_proj)
            'ga': jax.random.normal(lk[4], (H, RANK), jnp.float32) * 0.1,
            'gb': jax.random.normal(lk[5], (RANK, INTER), jnp.float32) * 0.1,
            'wu': jax.random.normal(lk[6], (H, INTER), jnp.float32) * 0.1,
            'wd': jax.random.normal(lk[7], (INTER, H), jnp.float32) * 0.1,
        })
    return params


def rope_tables():
    half = HEAD_DIM // 2
    inv_freq = 1.0 / (10000.0 ** (np.arange(half, dtype=np.float32) / half))
    pos = np.arange(S, dtype=np.float32)
    freqs = np.outer(pos, inv_freq)                       # [S, half]
    emb = np.concatenate([freqs, freqs], axis=-1)         # [S, HEAD_DIM]
    cos_hd, sin_hd = np.cos(emb), np.sin(emb)
    # rotate_half(q) == q @ Rh (per head); block-diag over heads: R = I_NH (x) Rh
    Rh = np.zeros((HEAD_DIM, HEAD_DIM), np.float32)
    for j in range(half):
        Rh[j + half, j] = -1.0
        Rh[j, j + half] = 1.0
    R = np.kron(np.eye(N_HEADS, dtype=np.float32), Rh)    # [H, H]
    cos_f = np.tile(cos_hd, (1, N_HEADS)).astype(np.float32)   # [S, H] (reference)
    sin_f = np.tile(sin_hd, (1, N_HEADS)).astype(np.float32)
    cos_t = np.tile(cos_f, (B, 1)).astype(np.float32)          # [T, H] (kernel, batch-folded)
    sin_t = np.tile(sin_f, (B, 1)).astype(np.float32)
    return (jnp.asarray(cos_f), jnp.asarray(sin_f), jnp.asarray(R),
            jnp.asarray(cos_t), jnp.asarray(sin_t))


def attention_bias():
    """Additive bias for batch-folded attention: 0 where (same sequence AND
    causal), -1e30 otherwise. Built once outside the kernel."""
    r = np.arange(T)
    same_seq = (r[:, None] // S) == (r[None, :] // S)
    causal = r[:, None] >= r[None, :]
    return jnp.asarray(np.where(same_seq & causal, 0.0, -1e30).astype(np.float32))


if __name__ == "__main__":
    key = jax.random.PRNGKey(0)
    pkey, dkey = jax.random.split(key)
    params = init_params(pkey)
    cos_f, sin_f, rot, cos_t, sin_t = rope_tables()
    bias = attention_bias()
    input_ids = jax.random.randint(dkey, (B, S), 0, VOCAB, dtype=jnp.int32)

    fused = prepare_fused_params(params)      # one-time packing (incl. padded lm_head)
    logits = decomposed_llama_forward(input_ids, fused, cos_t, sin_t, rot, bias)
    logits = jax.block_until_ready(logits)

    ref = jax.block_until_ready(reference_forward(input_ids, params, cos_f, sin_f, rot))
    assert logits.shape == (B, S, VOCAB)
    # exact softmax reciprocal + fp32 everywhere -> tight tolerance
    assert np.allclose(np.asarray(logits), np.asarray(ref), rtol=1e-3, atol=1e-3), \
        "Pallas output does not match pure-JAX reference"

    # TODO(synk): nn.DataParallel multi-GPU scatter/gather has no single-kernel
    # equivalent; it is orchestration, not compute, and is omitted.
    print("KERNEL_OK")
</pallas_src>

<mosaic_0001>
module attributes {stable_mosaic.version = 11 : i64} {
  func.func @fused_llama_kernel(%arg0: memref<16x32xf32, #tpu.memory_space<vmem>>, %arg1: memref<16x32xf32, #tpu.memory_space<vmem>>, %arg2: memref<16x32xf32, #tpu.memory_space<vmem>>, %arg3: memref<32x32xf32, #tpu.memory_space<vmem>>, %arg4: memref<16x16xf32, #tpu.memory_space<vmem>>, %arg5: memref<2x1x32xf32, #tpu.memory_space<vmem>>, %arg6: memref<2x32x96xf32, #tpu.memory_space<vmem>>, %arg7: memref<2x32x32xf32, #tpu.memory_space<vmem>>, %arg8: memref<2x1x32xf32, #tpu.memory_space<vmem>>, %arg9: memref<2x32x8xf32, #tpu.memory_space<vmem>>, %arg10: memref<2x8x64xf32, #tpu.memory_space<vmem>>, %arg11: memref<2x32x64xf32, #tpu.memory_space<vmem>>, %arg12: memref<2x64x32xf32, #tpu.memory_space<vmem>>, %arg13: memref<1x32xf32, #tpu.memory_space<vmem>>, %arg14: memref<32x128xf32, #tpu.memory_space<vmem>>, %arg15: memref<16x128xf32, #tpu.memory_space<vmem>>) attributes {dimension_semantics = [], scalar_prefetch = 0 : i64, scratch_operands = 0 : i64, tpu.core_type = #tpu.core_type<tc>} {
    %c0 = arith.constant 0 : index
    %c0_0 = arith.constant 0 : index
    %0 = vector.load %arg0[%c0, %c0_0] : memref<16x32xf32, #tpu.memory_space<vmem>>, vector<16x32xf32>
    %c0_1 = arith.constant 0 : index
    %c0_2 = arith.constant 0 : index
    %1 = vector.load %arg1[%c0_1, %c0_2] : memref<16x32xf32, #tpu.memory_space<vmem>>, vector<16x32xf32>
    %c0_3 = arith.constant 0 : index
    %c0_4 = arith.constant 0 : index
    %2 = vector.load %arg2[%c0_3, %c0_4] : memref<16x32xf32, #tpu.memory_space<vmem>>, vector<16x32xf32>
    %c0_5 = arith.constant 0 : index
    %c0_6 = arith.constant 0 : index
    %3 = vector.load %arg3[%c0_5, %c0_6] : memref<32x32xf32, #tpu.memory_space<vmem>>, vector<32x32xf32>
    %c0_7 = arith.constant 0 : index
    %c0_8 = arith.constant 0 : index
    %4 = vector.load %arg4[%c0_7, %c0_8] : memref<16x16xf32, #tpu.memory_space<vmem>>, vector<16x16xf32>
    %c0_9 = arith.constant 0 : index
    %c0_10 = arith.constant 0 : index
    %c0_11 = arith.constant 0 : index
    %5 = vector.load %arg5[%c0_9, %c0_10, %c0_11] : memref<2x1x32xf32, #tpu.memory_space<vmem>>, vector<1x1x32xf32>
    %6 = vector.shape_cast %5 : vector<1x1x32xf32> to vector<1x32xf32>
    %7 = arith.mulf %0, %0 : vector<16x32xf32>
    %cst = arith.constant dense<0.000000e+00> : vector<16xf32>
    %8 = vector.multi_reduction <add>, %7, %cst [1] : vector<16x32xf32> to vector<16xf32>
    %9 = vector.shape_cast %8 : vector<16xf32> to vector<16x1xf32>
    %cst_12 = arith.constant 3.200000e+01 : f32
    %10 = vector.broadcast %cst_12 : f32 to vector<16x1xf32>
    %11 = arith.divf %9, %10 : vector<16x1xf32>
    %cst_13 = arith.constant 9.99999997E-7 : f32
    %12 = vector.broadcast %cst_13 : f32 to vector<16x1xf32>
    %13 = arith.addf %11, %12 : vector<16x1xf32>
    %14 = math.rsqrt %13 : vector<16x1xf32>
    %15 = vector.broadcast %14 : vector<16x1xf32> to vector<16x32xf32>
    %16 = arith.mulf %0, %15 : vector<16x32xf32>
    %17 = vector.broadcast %6 : vector<1x32xf32> to vector<16x32xf32>
    %18 = arith.mulf %16, %17 : vector<16x32xf32>
    %c0_14 = arith.constant 0 : index
    %c0_15 = arith.constant 0 : index
    %c0_16 = arith.constant 0 : index
    %19 = vector.load %arg6[%c0_14, %c0_15, %c0_16] : memref<2x32x96xf32, #tpu.memory_space<vmem>>, vector<1x32x96xf32>
    %20 = vector.shape_cast %19 : vector<1x32x96xf32> to vector<32x96xf32>
    %cst_17 = arith.constant dense<0.000000e+00> : vector<16x96xf32>
    %21 = tpu.matmul %18, %20, %cst_17 {dimension_numbers = #tpu.dot_dimension_numbers<[1], [0], [0], [1], [0, 0, 1, 1], [], []>} : vector<16x32xf32>, vector<32x96xf32>, vector<16x96xf32> -> vector<16x96xf32>
    %22 = vector.extract_strided_slice %21 {offsets = [0, 0], sizes = [16, 32], strides = [1, 1]} : vector<16x96xf32> to vector<16x32xf32>
    %23 = vector.extract_strided_slice %21 {offsets = [0, 32], sizes = [16, 32], strides = [1, 1]} : vector<16x96xf32> to vector<16x32xf32>
    %24 = vector.extract_strided_slice %21 {offsets = [0, 64], sizes = [16, 32], strides = [1, 1]} : vector<16x96xf32> to vector<16x32xf32>
    %25 = arith.mulf %22, %1 : vector<16x32xf32>
    %cst_18 = arith.constant dense<0.000000e+00> : vector<16x32xf32>
    %26 = tpu.matmul %22, %3, %cst_18 {dimension_numbers = #tpu.dot_dimension_numbers<[1], [0], [0], [1], [0, 0, 1, 1], [], []>} : vector<16x32xf32>, vector<32x32xf32>, vector<16x32xf32> -> vector<16x32xf32>
    %27 = arith.mulf %26, %2 : vector<16x32xf32>
    %28 = arith.addf %25, %27 : vector<16x32xf32>
    %29 = arith.mulf %23, %1 : vector<16x32xf32>
    %cst_19 = arith.constant dense<0.000000e+00> : vector<16x32xf32>
    %30 = tpu.matmul %23, %3, %cst_19 {dimension_numbers = #tpu.dot_dimension_numbers<[1], [0], [0], [1], [0, 0, 1, 1], [], []>} : vector<16x32xf32>, vector<32x32xf32>, vector<16x32xf32> -> vector<16x32xf32>
    %31 = arith.mulf %30, %2 : vector<16x32xf32>
    %32 = arith.addf %29, %31 : vector<16x32xf32>
    %33 = vector.extract_strided_slice %28 {offsets = [0, 0], sizes = [16, 8], strides = [1, 1]} : vector<16x32xf32> to vector<16x8xf32>
    %34 = vector.extract_strided_slice %32 {offsets = [0, 0], sizes = [16, 8], strides = [1, 1]} : vector<16x32xf32> to vector<16x8xf32>
    %cst_20 = arith.constant dense<0.000000e+00> : vector<16x16xf32>
    %35 = tpu.matmul %33, %34, %cst_20 {dimension_numbers = #tpu.dot_dimension_numbers<[1], [1], [0], [0], [0, 0, 1, 0], [], []>} : vector<16x8xf32>, vector<16x8xf32>, vector<16x16xf32> -> vector<16x16xf32>
    %36 = arith.addf %35, %4 : vector<16x16xf32>
    %cst_21 = arith.constant dense<0xFF800000> : vector<16xf32>
    %37 = vector.multi_reduction <maximumf>, %36, %cst_21 [1] : vector<16x16xf32> to vector<16xf32>
    %38 = vector.shape_cast %37 : vector<16xf32> to vector<16x1xf32>
    %39 = vector.broadcast %38 : vector<16x1xf32> to vector<16x16xf32>
    %40 = arith.subf %36, %39 : vector<16x16xf32>
    %41 = math.exp %40 : vector<16x16xf32>
    %cst_22 = arith.constant dense<0.000000e+00> : vector<16xf32>
    %42 = vector.multi_reduction <add>, %41, %cst_22 [1] : vector<16x16xf32> to vector<16xf32>
    %43 = vector.shape_cast %42 : vector<16xf32> to vector<16x1xf32>
    %44 = tpu.reciprocal %43 : vector<16x1xf32> -> vector<16x1xf32>
    %45 = vector.broadcast %44 : vector<16x1xf32> to vector<16x16xf32>
    %46 = arith.mulf %41, %45 : vector<16x16xf32>
    %47 = vector.extract_strided_slice %24 {offsets = [0, 0], sizes = [16, 8], strides = [1, 1]} : vector<16x32xf32> to vector<16x8xf32>
    %cst_23 = arith.constant dense<0.000000e+00> : vector<16x8xf32>
    %48 = tpu.matmul %46, %47, %cst_23 {dimension_numbers = #tpu.dot_dimension_numbers<[1], [0], [0], [1], [0, 0, 1, 1], [], []>} : vector<16x16xf32>, vector<16x8xf32>, vector<16x8xf32> -> vector<16x8xf32>
    %49 = vector.extract_strided_slice %28 {offsets = [0, 8], sizes = [16, 8], strides = [1, 1]} : vector<16x32xf32> to vector<16x8xf32>
    %50 = vector.extract_strided_slice %32 {offsets = [0, 8], sizes = [16, 8], strides = [1, 1]} : vector<16x32xf32> to vector<16x8xf32>
    %cst_24 = arith.constant dense<0.000000e+00> : vector<16x16xf32>
    %51 = tpu.matmul %49, %50, %cst_24 {dimension_numbers = #tpu.dot_dimension_numbers<[1], [1], [0], [0], [0, 0, 1, 0], [], []>} : vector<16x8xf32>, vector<16x8xf32>, vector<16x16xf32> -> vector<16x16xf32>
    %52 = arith.addf %51, %4 : vector<16x16xf32>
    %cst_25 = arith.constant dense<0xFF800000> : vector<16xf32>
    %53 = vector.multi_reduction <maximumf>, %52, %cst_25 [1] : vector<16x16xf32> to vector<16xf32>
    %54 = vector.shape_cast %53 : vector<16xf32> to vector<16x1xf32>
    %55 = vector.broadcast %54 : vector<16x1xf32> to vector<16x16xf32>
    %56 = arith.subf %52, %55 : vector<16x16xf32>
    %57 = math.exp %56 : vector<16x16xf32>
    %cst_26 = arith.constant dense<0.000000e+00> : vector<16xf32>
    %58 = vector.multi_reduction <add>, %57, %cst_26 [1] : vector<16x16xf32> to vector<16xf32>
    %59 = vector.shape_cast %58 : vector<16xf32> to vector<16x1xf32>
    %60 = tpu.reciprocal %59 : vector<16x1xf32> -> vector<16x1xf32>
    %61 = vector.broadcast %60 : vector<16x1xf32> to vector<16x16xf32>
    %62 = arith.mulf %57, %61 : vector<16x16xf32>
    %63 = vector.extract_strided_slice %24 {offsets = [0, 8], sizes = [16, 8], strides = [1, 1]} : vector<16x32xf32> to vector<16x8xf32>
    %cst_27 = arith.constant dense<0.000000e+00> : vector<16x8xf32>
    %64 = tpu.matmul %62, %63, %cst_27 {dimension_numbers = #tpu.dot_dimension_numbers<[1], [0], [0], [1], [0, 0, 1, 1], [], []>} : vector<16x16xf32>, vector<16x8xf32>, vector<16x8xf32> -> vector<16x8xf32>
    %65 = vector.extract_strided_slice %28 {offsets = [0, 16], sizes = [16, 8], strides = [1, 1]} : vector<16x32xf32> to vector<16x8xf32>
    %66 = vector.extract_strided_slice %32 {offsets = [0, 16], sizes = [16, 8], strides = [1, 1]} : vector<16x32xf32> to vector<16x8xf32>
    %cst_28 = arith.constant dense<0.000000e+00> : vector<16x16xf32>
    %67 = tpu.matmul %65, %66, %cst_28 {dimension_numbers = #tpu.dot_dimension_numbers<[1], [1], [0], [0], [0, 0, 1, 0], [], []>} : vector<16x8xf32>, vector<16x8xf32>, vector<16x16xf32> -> vector<16x16xf32>
    %68 = arith.addf %67, %4 : vector<16x16xf32>
    %cst_29 = arith.constant dense<0xFF800000> : vector<16xf32>
    %69 = vector.multi_reduction <maximumf>, %68, %cst_29 [1] : vector<16x16xf32> to vector<16xf32>
    %70 = vector.shape_cast %69 : vector<16xf32> to vector<16x1xf32>
    %71 = vector.broadcast %70 : vector<16x1xf32> to vector<16x16xf32>
    %72 = arith.subf %68, %71 : vector<16x16xf32>
    %73 = math.exp %72 : vector<16x16xf32>
    %cst_30 = arith.constant dense<0.000000e+00> : vector<16xf32>
    %74 = vector.multi_reduction <add>, %73, %cst_30 [1] : vector<16x16xf32> to vector<16xf32>
    %75 = vector.shape_cast %74 : vector<16xf32> to vector<16x1xf32>
    %76 = tpu.reciprocal %75 : vector<16x1xf32> -> vector<16x1xf32>
    %77 = vector.broadcast %76 : vector<16x1xf32> to vector<16x16xf32>
    %78 = arith.mulf %73, %77 : vector<16x16xf32>
    %79 = vector.extract_strided_slice %24 {offsets = [0, 16], sizes = [16, 8], strides = [1, 1]} : vector<16x32xf32> to vector<16x8xf32>
    %cst_31 = arith.constant dense<0.000000e+00> : vector<16x8xf32>
    %80 = tpu.matmul %78, %79, %cst_31 {dimension_numbers = #tpu.dot_dimension_numbers<[1], [0], [0], [1], [0, 0, 1, 1], [], []>} : vector<16x16xf32>, vector<16x8xf32>, vector<16x8xf32> -> vector<16x8xf32>
    %81 = vector.extract_strided_slice %28 {offsets = [0, 24], sizes = [16, 8], strides = [1, 1]} : vector<16x32xf32> to vector<16x8xf32>
    %82 = vector.extract_strided_slice %32 {offsets = [0, 24], sizes = [16, 8], strides = [1, 1]} : vector<16x32xf32> to vector<16x8xf32>
    %cst_32 = arith.constant dense<0.000000e+00> : vector<16x16xf32>
    %83 = tpu.matmul %81, %82, %cst_32 {dimension_numbers = #tpu.dot_dimension_numbers<[1], [1], [0], [0], [0, 0, 1, 0], [], []>} : vector<16x8xf32>, vector<16x8xf32>, vector<16x16xf32> -> vector<16x16xf32>
    %84 = arith.addf %83, %4 : vector<16x16xf32>
    %cst_33 = arith.constant dense<0xFF800000> : vector<16xf32>
    %85 = vector.multi_reduction <maximumf>, %84, %cst_33 [1] : vector<16x16xf32> to vector<16xf32>
    %86 = vector.shape_cast %85 : vector<16xf32> to vector<16x1xf32>
    %87 = vector.broadcast %86 : vector<16x1xf32> to vector<16x16xf32>
    %88 = arith.subf %84, %87 : vector<16x16xf32>
    %89 = math.exp %88 : vector<16x16xf32>
    %cst_34 = arith.constant dense<0.000000e+00> : vector<16xf32>
    %90 = vector.multi_reduction <add>, %89, %cst_34 [1] : vector<16x16xf32> to vector<16xf32>
    %91 = vector.shape_cast %90 : vector<16xf32> to vector<16x1xf32>
    %92 = tpu.reciprocal %91 : vector<16x1xf32> -> vector<16x1xf32>
    %93 = vector.broadcast %92 : vector<16x1xf32> to vector<16x16xf32>
    %94 = arith.mulf %89, %93 : vector<16x16xf32>
    %95 = vector.extract_strided_slice %24 {offsets = [0, 24], sizes = [16, 8], strides = [1, 1]} : vector<16x32xf32> to vector<16x8xf32>
    %cst_35 = arith.constant dense<0.000000e+00> : vector<16x8xf32>
    %96 = tpu.matmul %94, %95, %cst_35 {dimension_numbers = #tpu.dot_dimension_numbers<[1], [0], [0], [1], [0, 0, 1, 1], [], []>} : vector<16x16xf32>, vector<16x8xf32>, vector<16x8xf32> -> vector<16x8xf32>
    %97 = tpu.concatenate %48, %64, %80, %96 in 1 : vector<16x8xf32>, vector<16x8xf32>, vector<16x8xf32>, vector<16x8xf32> -> vector<16x32xf32>
    %c0_36 = arith.constant 0 : index
    %c0_37 = arith.constant 0 : index
    %c0_38 = arith.constant 0 : index
    %98 = vector.load %arg7[%c0_36, %c0_37, %c0_38] : memref<2x32x32xf32, #tpu.memory_space<vmem>>, vector<1x32x32xf32>
    %99 = vector.shape_cast %98 : vector<1x32x32xf32> to vector<32x32xf32>
    %cst_39 = arith.constant dense<0.000000e+00> : vector<16x32xf32>
    %100 = tpu.matmul %97, %99, %cst_39 {dimension_numbers = #tpu.dot_dimension_numbers<[1], [0], [0], [1], [0, 0, 1, 1], [], []>} : vector<16x32xf32>, vector<32x32xf32>, vector<16x32xf32> -> vector<16x32xf32>
    %101 = arith.addf %0, %100 : vector<16x32xf32>
    %c0_40 = arith.constant 0 : index
    %c0_41 = arith.constant 0 : index
    %c0_42 = arith.constant 0 : index
    %102 = vector.load %arg8[%c0_40, %c0_41, %c0_42] : memref<2x1x32xf32, #tpu.memory_space<vmem>>, vector<1x1x32xf32>
    %103 = vector.shape_cast %102 : vector<1x1x32xf32> to vector<1x32xf32>
    %104 = arith.mulf %101, %101 : vector<16x32xf32>
    %cst_43 = arith.constant dense<0.000000e+00> : vector<16xf32>
    %105 = vector.multi_reduction <add>, %104, %cst_43 [1] : vector<16x32xf32> to vector<16xf32>
    %106 = vector.shape_cast %105 : vector<16xf32> to vector<16x1xf32>
    %cst_44 = arith.constant 3.200000e+01 : f32
    %107 = vector.broadcast %cst_44 : f32 to vector<16x1xf32>
    %108 = arith.divf %106, %107 : vector<16x1xf32>
    %cst_45 = arith.constant 9.99999997E-7 : f32
    %109 = vector.broadcast %cst_45 : f32 to vector<16x1xf32>
    %110 = arith.addf %108, %109 : vector<16x1xf32>
    %111 = math.rsqrt %110 : vector<16x1xf32>
    %112 = vector.broadcast %111 : vector<16x1xf32> to vector<16x32xf32>
    %113 = arith.mulf %101, %112 : vector<16x32xf32>
    %114 = vector.broadcast %103 : vector<1x32xf32> to vector<16x32xf32>
    %115 = arith.mulf %113, %114 : vector<16x32xf32>
    %c0_46 = arith.constant 0 : index
    %c0_47 = arith.constant 0 : index
    %c0_48 = arith.constant 0 : index
    %116 = vector.load %arg9[%c0_46, %c0_47, %c0_48] : memref<2x32x8xf32, #tpu.memory_space<vmem>>, vector<1x32x8xf32>
    %117 = vector.shape_cast %116 : vector<1x32x8xf32> to vector<32x8xf32>
    %cst_49 = arith.constant dense<0.000000e+00> : vector<16x8xf32>
    %118 = tpu.matmul %115, %117, %cst_49 {dimension_numbers = #tpu.dot_dimension_numbers<[1], [0], [0], [1], [0, 0, 1, 1], [], []>} : vector<16x32xf32>, vector<32x8xf32>, vector<16x8xf32> -> vector<16x8xf32>
    %c0_50 = arith.constant 0 : index
    %c0_51 = arith.constant 0 : index
    %c0_52 = arith.constant 0 : index
    %119 = vector.load %arg10[%c0_50, %c0_51, %c0_52] : memref<2x8x64xf32, #tpu.memory_space<vmem>>, vector<1x8x64xf32>
    %120 = vector.shape_cast %119 : vector<1x8x64xf32> to vector<8x64xf32>
    %cst_53 = arith.constant dense<0.000000e+00> : vector<16x64xf32>
    %121 = tpu.matmul %118, %120, %cst_53 {dimension_numbers = #tpu.dot_dimension_numbers<[1], [0], [0], [1], [0, 0, 1, 1], [], []>} : vector<16x8xf32>, vector<8x64xf32>, vector<16x64xf32> -> vector<16x64xf32>
    %c0_54 = arith.constant 0 : index
    %c0_55 = arith.constant 0 : index
    %c0_56 = arith.constant 0 : index
    %122 = vector.load %arg11[%c0_54, %c0_55, %c0_56] : memref<2x32x64xf32, #tpu.memory_space<vmem>>, vector<1x32x64xf32>
    %123 = vector.shape_cast %122 : vector<1x32x64xf32> to vector<32x64xf32>
    %cst_57 = arith.constant dense<0.000000e+00> : vector<16x64xf32>
    %124 = tpu.matmul %115, %123, %cst_57 {dimension_numbers = #tpu.dot_dimension_numbers<[1], [0], [0], [1], [0, 0, 1, 1], [], []>} : vector<16x32xf32>, vector<32x64xf32>, vector<16x64xf32> -> vector<16x64xf32>
    %125 = arith.negf %121 : vector<16x64xf32>
    %126 = math.exp %125 : vector<16x64xf32>
    %cst_58 = arith.constant 1.000000e+00 : f32
    %127 = vector.broadcast %cst_58 : f32 to vector<16x64xf32>
    %128 = arith.addf %127, %126 : vector<16x64xf32>
    %129 = arith.divf %127, %128 : vector<16x64xf32>
    %130 = arith.mulf %121, %129 : vector<16x64xf32>
    %131 = arith.mulf %130, %124 : vector<16x64xf32>
    %c0_59 = arith.constant 0 : index
    %c0_60 = arith.constant 0 : index
    %c0_61 = arith.constant 0 : index
    %132 = vector.load %arg12[%c0_59, %c0_60, %c0_61] : memref<2x64x32xf32, #tpu.memory_space<vmem>>, vector<1x64x32xf32>
    %133 = vector.shape_cast %132 : vector<1x64x32xf32> to vector<64x32xf32>
    %cst_62 = arith.constant dense<0.000000e+00> : vector<16x32xf32>
    %134 = tpu.matmul %131, %133, %cst_62 {dimension_numbers = #tpu.dot_dimension_numbers<[1], [0], [0], [1], [0, 0, 1, 1], [], []>} : vector<16x64xf32>, vector<64x32xf32>, vector<16x32xf32> -> vector<16x32xf32>
    %135 = arith.addf %101, %134 : vector<16x32xf32>
    %c1 = arith.constant 1 : index
    %c0_63 = arith.constant 0 : index
    %c0_64 = arith.constant 0 : index
    %136 = vector.load %arg5[%c1, %c0_63, %c0_64] : memref<2x1x32xf32, #tpu.memory_space<vmem>>, vector<1x1x32xf32>
    %137 = vector.shape_cast %136 : vector<1x1x32xf32> to vector<1x32xf32>
    %138 = arith.mulf %135, %135 : vector<16x32xf32>
    %cst_65 = arith.constant dense<0.000000e+00> : vector<16xf32>
    %139 = vector.multi_reduction <add>, %138, %cst_65 [1] : vector<16x32xf32> to vector<16xf32>
    %140 = vector.shape_cast %139 : vector<16xf32> to vector<16x1xf32>
    %cst_66 = arith.constant 3.200000e+01 : f32
    %141 = vector.broadcast %cst_66 : f32 to vector<16x1xf32>
    %142 = arith.divf %140, %141 : vector<16x1xf32>
    %cst_67 = arith.constant 9.99999997E-7 : f32
    %143 = vector.broadcast %cst_67 : f32 to vector<16x1xf32>
    %144 = arith.addf %142, %143 : vector<16x1xf32>
    %145 = math.rsqrt %144 : vector<16x1xf32>
    %146 = vector.broadcast %145 : vector<16x1xf32> to vector<16x32xf32>
    %147 = arith.mulf %135, %146 : vector<16x32xf32>
    %148 = vector.broadcast %137 : vector<1x32xf32> to vector<16x32xf32>
    %149 = arith.mulf %147, %148 : vector<16x32xf32>
    %c1_68 = arith.constant 1 : index
    %c0_69 = arith.constant 0 : index
    %c0_70 = arith.constant 0 : index
    %150 = vector.load %arg6[%c1_68, %c0_69, %c0_70] : memref<2x32x96xf32, #tpu.memory_space<vmem>>, vector<1x32x96xf32>
    %151 = vector.shape_cast %150 : vector<1x32x96xf32> to vector<32x96xf32>
    %cst_71 = arith.constant dense<0.000000e+00> : vector<16x96xf32>
    %152 = tpu.matmul %149, %151, %cst_71 {dimension_numbers = #tpu.dot_dimension_numbers<[1], [0], [0], [1], [0, 0, 1, 1], [], []>} : vector<16x32xf32>, vector<32x96xf32>, vector<16x96xf32> -> vector<16x96xf32>
    %153 = vector.extract_strided_slice %152 {offsets = [0, 0], sizes = [16, 32], strides = [1, 1]} : vector<16x96xf32> to vector<16x32xf32>
    %154 = vector.extract_strided_slice %152 {offsets = [0, 32], sizes = [16, 32], strides = [1, 1]} : vector<16x96xf32> to vector<16x32xf32>
    %155 = vector.extract_strided_slice %152 {offsets = [0, 64], sizes = [16, 32], strides = [1, 1]} : vector<16x96xf32> to vector<16x32xf32>
    %156 = arith.mulf %153, %1 : vector<16x32xf32>
    %cst_72 = arith.constant dense<0.000000e+00> : vector<16x32xf32>
    %157 = tpu.matmul %153, %3, %cst_72 {dimension_numbers = #tpu.dot_dimension_numbers<[1], [0], [0], [1], [0, 0, 1, 1], [], []>} : vector<16x32xf32>, vector<32x32xf32>, vector<16x32xf32> -> vector<16x32xf32>
    %158 = arith.mulf %157, %2 : vector<16x32xf32>
    %159 = arith.addf %156, %158 : vector<16x32xf32>
    %160 = arith.mulf %154, %1 : vector<16x32xf32>
    %cst_73 = arith.constant dense<0.000000e+00> : vector<16x32xf32>
    %161 = tpu.matmul %154, %3, %cst_73 {dimension_numbers = #tpu.dot_dimension_numbers<[1], [0], [0], [1], [0, 0, 1, 1], [], []>} : vector<16x32xf32>, vector<32x32xf32>, vector<16x32xf32> -> vector<16x32xf32>
    %162 = arith.mulf %161, %2 : vector<16x32xf32>
    %163 = arith.addf %160, %162 : vector<16x32xf32>
    %164 = vector.extract_strided_slice %159 {offsets = [0, 0], sizes = [16, 8], strides = [1, 1]} : vector<16x32xf32> to vector<16x8xf32>
    %165 = vector.extract_strided_slice %163 {offsets = [0, 0], sizes = [16, 8], strides = [1, 1]} : vector<16x32xf32> to vector<16x8xf32>
    %cst_74 = arith.constant dense<0.000000e+00> : vector<16x16xf32>
    %166 = tpu.matmul %164, %165, %cst_74 {dimension_numbers = #tpu.dot_dimension_numbers<[1], [1], [0], [0], [0, 0, 1, 0], [], []>} : vector<16x8xf32>, vector<16x8xf32>, vector<16x16xf32> -> vector<16x16xf32>
    %167 = arith.addf %166, %4 : vector<16x16xf32>
    %cst_75 = arith.constant dense<0xFF800000> : vector<16xf32>
    %168 = vector.multi_reduction <maximumf>, %167, %cst_75 [1] : vector<16x16xf32> to vector<16xf32>
    %169 = vector.shape_cast %168 : vector<16xf32> to vector<16x1xf32>
    %170 = vector.broadcast %169 : vector<16x1xf32> to vector<16x16xf32>
    %171 = arith.subf %167, %170 : vector<16x16xf32>
    %172 = math.exp %171 : vector<16x16xf32>
    %cst_76 = arith.constant dense<0.000000e+00> : vector<16xf32>
    %173 = vector.multi_reduction <add>, %172, %cst_76 [1] : vector<16x16xf32> to vector<16xf32>
    %174 = vector.shape_cast %173 : vector<16xf32> to vector<16x1xf32>
    %175 = tpu.reciprocal %174 : vector<16x1xf32> -> vector<16x1xf32>
    %176 = vector.broadcast %175 : vector<16x1xf32> to vector<16x16xf32>
    %177 = arith.mulf %172, %176 : vector<16x16xf32>
    %178 = vector.extract_strided_slice %155 {offsets = [0, 0], sizes = [16, 8], strides = [1, 1]} : vector<16x32xf32> to vector<16x8xf32>
    %cst_77 = arith.constant dense<0.000000e+00> : vector<16x8xf32>
    %179 = tpu.matmul %177, %178, %cst_77 {dimension_numbers = #tpu.dot_dimension_numbers<[1], [0], [0], [1], [0, 0, 1, 1], [], []>} : vector<16x16xf32>, vector<16x8xf32>, vector<16x8xf32> -> vector<16x8xf32>
    %180 = vector.extract_strided_slice %159 {offsets = [0, 8], sizes = [16, 8], strides = [1, 1]} : vector<16x32xf32> to vector<16x8xf32>
    %181 = vector.extract_strided_slice %163 {offsets = [0, 8], sizes = [16, 8], strides = [1, 1]} : vector<16x32xf32> to vector<16x8xf32>
    %cst_78 = arith.constant dense<0.000000e+00> : vector<16x16xf32>
    %182 = tpu.matmul %180, %181, %cst_78 {dimension_numbers = #tpu.dot_dimension_numbers<[1], [1], [0], [0], [0, 0, 1, 0], [], []>} : vector<16x8xf32>, vector<16x8xf32>, vector<16x16xf32> -> vector<16x16xf32>
    %183 = arith.addf %182, %4 : vector<16x16xf32>
    %cst_79 = arith.constant dense<0xFF800000> : vector<16xf32>
    %184 = vector.multi_reduction <maximumf>, %183, %cst_79 [1] : vector<16x16xf32> to vector<16xf32>
    %185 = vector.shape_cast %184 : vector<16xf32> to vector<16x1xf32>
    %186 = vector.broadcast %185 : vector<16x1xf32> to vector<16x16xf32>
    %187 = arith.subf %183, %186 : vector<16x16xf32>
    %188 = math.exp %187 : vector<16x16xf32>
    %cst_80 = arith.constant dense<0.000000e+00> : vector<16xf32>
    %189 = vector.multi_reduction <add>, %188, %cst_80 [1] : vector<16x16xf32> to vector<16xf32>
    %190 = vector.shape_cast %189 : vector<16xf32> to vector<16x1xf32>
    %191 = tpu.reciprocal %190 : vector<16x1xf32> -> vector<16x1xf32>
    %192 = vector.broadcast %191 : vector<16x1xf32> to vector<16x16xf32>
    %193 = arith.mulf %188, %192 : vector<16x16xf32>
    %194 = vector.extract_strided_slice %155 {offsets = [0, 8], sizes = [16, 8], strides = [1, 1]} : vector<16x32xf32> to vector<16x8xf32>
    %cst_81 = arith.constant dense<0.000000e+00> : vector<16x8xf32>
    %195 = tpu.matmul %193, %194, %cst_81 {dimension_numbers = #tpu.dot_dimension_numbers<[1], [0], [0], [1], [0, 0, 1, 1], [], []>} : vector<16x16xf32>, vector<16x8xf32>, vector<16x8xf32> -> vector<16x8xf32>
    %196 = vector.extract_strided_slice %159 {offsets = [0, 16], sizes = [16, 8], strides = [1, 1]} : vector<16x32xf32> to vector<16x8xf32>
    %197 = vector.extract_strided_slice %163 {offsets = [0, 16], sizes = [16, 8], strides = [1, 1]} : vector<16x32xf32> to vector<16x8xf32>
    %cst_82 = arith.constant dense<0.000000e+00> : vector<16x16xf32>
    %198 = tpu.matmul %196, %197, %cst_82 {dimension_numbers = #tpu.dot_dimension_numbers<[1], [1], [0], [0], [0, 0, 1, 0], [], []>} : vector<16x8xf32>, vector<16x8xf32>, vector<16x16xf32> -> vector<16x16xf32>
    %199 = arith.addf %198, %4 : vector<16x16xf32>
    %cst_83 = arith.constant dense<0xFF800000> : vector<16xf32>
    %200 = vector.multi_reduction <maximumf>, %199, %cst_83 [1] : vector<16x16xf32> to vector<16xf32>
    %201 = vector.shape_cast %200 : vector<16xf32> to vector<16x1xf32>
    %202 = vector.broadcast %201 : vector<16x1xf32> to vector<16x16xf32>
    %203 = arith.subf %199, %202 : vector<16x16xf32>
    %204 = math.exp %203 : vector<16x16xf32>
    %cst_84 = arith.constant dense<0.000000e+00> : vector<16xf32>
    %205 = vector.multi_reduction <add>, %204, %cst_84 [1] : vector<16x16xf32> to vector<16xf32>
    %206 = vector.shape_cast %205 : vector<16xf32> to vector<16x1xf32>
    %207 = tpu.reciprocal %206 : vector<16x1xf32> -> vector<16x1xf32>
    %208 = vector.broadcast %207 : vector<16x1xf32> to vector<16x16xf32>
    %209 = arith.mulf %204, %208 : vector<16x16xf32>
    %210 = vector.extract_strided_slice %155 {offsets = [0, 16], sizes = [16, 8], strides = [1, 1]} : vector<16x32xf32> to vector<16x8xf32>
    %cst_85 = arith.constant dense<0.000000e+00> : vector<16x8xf32>
    %211 = tpu.matmul %209, %210, %cst_85 {dimension_numbers = #tpu.dot_dimension_numbers<[1], [0], [0], [1], [0, 0, 1, 1], [], []>} : vector<16x16xf32>, vector<16x8xf32>, vector<16x8xf32> -> vector<16x8xf32>
    %212 = vector.extract_strided_slice %159 {offsets = [0, 24], sizes = [16, 8], strides = [1, 1]} : vector<16x32xf32> to vector<16x8xf32>
    %213 = vector.extract_strided_slice %163 {offsets = [0, 24], sizes = [16, 8], strides = [1, 1]} : vector<16x32xf32> to vector<16x8xf32>
    %cst_86 = arith.constant dense<0.000000e+00> : vector<16x16xf32>
    %214 = tpu.matmul %212, %213, %cst_86 {dimension_numbers = #tpu.dot_dimension_numbers<[1], [1], [0], [0], [0, 0, 1, 0], [], []>} : vector<16x8xf32>, vector<16x8xf32>, vector<16x16xf32> -> vector<16x16xf32>
    %215 = arith.addf %214, %4 : vector<16x16xf32>
    %cst_87 = arith.constant dense<0xFF800000> : vector<16xf32>
    %216 = vector.multi_reduction <maximumf>, %215, %cst_87 [1] : vector<16x16xf32> to vector<16xf32>
    %217 = vector.shape_cast %216 : vector<16xf32> to vector<16x1xf32>
    %218 = vector.broadcast %217 : vector<16x1xf32> to vector<16x16xf32>
    %219 = arith.subf %215, %218 : vector<16x16xf32>
    %220 = math.exp %219 : vector<16x16xf32>
    %cst_88 = arith.constant dense<0.000000e+00> : vector<16xf32>
    %221 = vector.multi_reduction <add>, %220, %cst_88 [1] : vector<16x16xf32> to vector<16xf32>
    %222 = vector.shape_cast %221 : vector<16xf32> to vector<16x1xf32>
    %223 = tpu.reciprocal %222 : vector<16x1xf32> -> vector<16x1xf32>
    %224 = vector.broadcast %223 : vector<16x1xf32> to vector<16x16xf32>
    %225 = arith.mulf %220, %224 : vector<16x16xf32>
    %226 = vector.extract_strided_slice %155 {offsets = [0, 24], sizes = [16, 8], strides = [1, 1]} : vector<16x32xf32> to vector<16x8xf32>
    %cst_89 = arith.constant dense<0.000000e+00> : vector<16x8xf32>
    %227 = tpu.matmul %225, %226, %cst_89 {dimension_numbers = #tpu.dot_dimension_numbers<[1], [0], [0], [1], [0, 0, 1, 1], [], []>} : vector<16x16xf32>, vector<16x8xf32>, vector<16x8xf32> -> vector<16x8xf32>
    %228 = tpu.concatenate %179, %195, %211, %227 in 1 : vector<16x8xf32>, vector<16x8xf32>, vector<16x8xf32>, vector<16x8xf32> -> vector<16x32xf32>
    %c1_90 = arith.constant 1 : index
    %c0_91 = arith.constant 0 : index
    %c0_92 = arith.constant 0 : index
    %229 = vector.load %arg7[%c1_90, %c0_91, %c0_92] : memref<2x32x32xf32, #tpu.memory_space<vmem>>, vector<1x32x32xf32>
    %230 = vector.shape_cast %229 : vector<1x32x32xf32> to vector<32x32xf32>
    %cst_93 = arith.constant dense<0.000000e+00> : vector<16x32xf32>
    %231 = tpu.matmul %228, %230, %cst_93 {dimension_numbers = #tpu.dot_dimension_numbers<[1], [0], [0], [1], [0, 0, 1, 1], [], []>} : vector<16x32xf32>, vector<32x32xf32>, vector<16x32xf32> -> vector<16x32xf32>
    %232 = arith.addf %135, %231 : vector<16x32xf32>
    %c1_94 = arith.constant 1 : index
    %c0_95 = arith.constant 0 : index
    %c0_96 = arith.constant 0 : index
    %233 = vector.load %arg8[%c1_94, %c0_95, %c0_96] : memref<2x1x32xf32, #tpu.memory_space<vmem>>, vector<1x1x32xf32>
    %234 = vector.shape_cast %233 : vector<1x1x32xf32> to vector<1x32xf32>
    %235 = arith.mulf %232, %232 : vector<16x32xf32>
    %cst_97 = arith.constant dense<0.000000e+00> : vector<16xf32>
    %236 = vector.multi_reduction <add>, %235, %cst_97 [1] : vector<16x32xf32> to vector<16xf32>
    %237 = vector.shape_cast %236 : vector<16xf32> to vector<16x1xf32>
    %cst_98 = arith.constant 3.200000e+01 : f32
    %238 = vector.broadcast %cst_98 : f32 to vector<16x1xf32>
    %239 = arith.divf %237, %238 : vector<16x1xf32>
    %cst_99 = arith.constant 9.99999997E-7 : f32
    %240 = vector.broadcast %cst_99 : f32 to vector<16x1xf32>
    %241 = arith.addf %239, %240 : vector<16x1xf32>
    %242 = math.rsqrt %241 : vector<16x1xf32>
    %243 = vector.broadcast %242 : vector<16x1xf32> to vector<16x32xf32>
    %244 = arith.mulf %232, %243 : vector<16x32xf32>
    %245 = vector.broadcast %234 : vector<1x32xf32> to vector<16x32xf32>
    %246 = arith.mulf %244, %245 : vector<16x32xf32>
    %c1_100 = arith.constant 1 : index
    %c0_101 = arith.constant 0 : index
    %c0_102 = arith.constant 0 : index
    %247 = vector.load %arg9[%c1_100, %c0_101, %c0_102] : memref<2x32x8xf32, #tpu.memory_space<vmem>>, vector<1x32x8xf32>
    %248 = vector.shape_cast %247 : vector<1x32x8xf32> to vector<32x8xf32>
    %cst_103 = arith.constant dense<0.000000e+00> : vector<16x8xf32>
    %249 = tpu.matmul %246, %248, %cst_103 {dimension_numbers = #tpu.dot_dimension_numbers<[1], [0], [0], [1], [0, 0, 1, 1], [], []>} : vector<16x32xf32>, vector<32x8xf32>, vector<16x8xf32> -> vector<16x8xf32>
    %c1_104 = arith.constant 1 : index
    %c0_105 = arith.constant 0 : index
    %c0_106 = arith.constant 0 : index
    %250 = vector.load %arg10[%c1_104, %c0_105, %c0_106] : memref<2x8x64xf32, #tpu.memory_space<vmem>>, vector<1x8x64xf32>
    %251 = vector.shape_cast %250 : vector<1x8x64xf32> to vector<8x64xf32>
    %cst_107 = arith.constant dense<0.000000e+00> : vector<16x64xf32>
    %252 = tpu.matmul %249, %251, %cst_107 {dimension_numbers = #tpu.dot_dimension_numbers<[1], [0], [0], [1], [0, 0, 1, 1], [], []>} : vector<16x8xf32>, vector<8x64xf32>, vector<16x64xf32> -> vector<16x64xf32>
    %c1_108 = arith.constant 1 : index
    %c0_109 = arith.constant 0 : index
    %c0_110 = arith.constant 0 : index
    %253 = vector.load %arg11[%c1_108, %c0_109, %c0_110] : memref<2x32x64xf32, #tpu.memory_space<vmem>>, vector<1x32x64xf32>
    %254 = vector.shape_cast %253 : vector<1x32x64xf32> to vector<32x64xf32>
    %cst_111 = arith.constant dense<0.000000e+00> : vector<16x64xf32>
    %255 = tpu.matmul %246, %254, %cst_111 {dimension_numbers = #tpu.dot_dimension_numbers<[1], [0], [0], [1], [0, 0, 1, 1], [], []>} : vector<16x32xf32>, vector<32x64xf32>, vector<16x64xf32> -> vector<16x64xf32>
    %256 = arith.negf %252 : vector<16x64xf32>
    %257 = math.exp %256 : vector<16x64xf32>
    %cst_112 = arith.constant 1.000000e+00 : f32
    %258 = vector.broadcast %cst_112 : f32 to vector<16x64xf32>
    %259 = arith.addf %258, %257 : vector<16x64xf32>
    %260 = arith.divf %258, %259 : vector<16x64xf32>
    %261 = arith.mulf %252, %260 : vector<16x64xf32>
    %262 = arith.mulf %261, %255 : vector<16x64xf32>
    %c1_113 = arith.constant 1 : index
    %c0_114 = arith.constant 0 : index
    %c0_115 = arith.constant 0 : index
    %263 = vector.load %arg12[%c1_113, %c0_114, %c0_115] : memref<2x64x32xf32, #tpu.memory_space<vmem>>, vector<1x64x32xf32>
    %264 = vector.shape_cast %263 : vector<1x64x32xf32> to vector<64x32xf32>
    %cst_116 = arith.constant dense<0.000000e+00> : vector<16x32xf32>
    %265 = tpu.matmul %262, %264, %cst_116 {dimension_numbers = #tpu.dot_dimension_numbers<[1], [0], [0], [1], [0, 0, 1, 1], [], []>} : vector<16x64xf32>, vector<64x32xf32>, vector<16x32xf32> -> vector<16x32xf32>
    %266 = arith.addf %232, %265 : vector<16x32xf32>
    %c0_117 = arith.constant 0 : index
    %c0_118 = arith.constant 0 : index
    %267 = vector.load %arg13[%c0_117, %c0_118] : memref<1x32xf32, #tpu.memory_space<vmem>>, vector<1x32xf32>
    %268 = arith.mulf %266, %266 : vector<16x32xf32>
    %cst_119 = arith.constant dense<0.000000e+00> : vector<16xf32>
    %269 = vector.multi_reduction <add>, %268, %cst_119 [1] : vector<16x32xf32> to vector<16xf32>
    %270 = vector.shape_cast %269 : vector<16xf32> to vector<16x1xf32>
    %cst_120 = arith.constant 3.200000e+01 : f32
    %271 = vector.broadcast %cst_120 : f32 to vector<16x1xf32>
    %272 = arith.divf %270, %271 : vector<16x1xf32>
    %cst_121 = arith.constant 9.99999997E-7 : f32
    %273 = vector.broadcast %cst_121 : f32 to vector<16x1xf32>
    %274 = arith.addf %272, %273 : vector<16x1xf32>
    %275 = math.rsqrt %274 : vector<16x1xf32>
    %276 = vector.broadcast %275 : vector<16x1xf32> to vector<16x32xf32>
    %277 = arith.mulf %266, %276 : vector<16x32xf32>
    %278 = vector.broadcast %267 : vector<1x32xf32> to vector<16x32xf32>
    %279 = arith.mulf %277, %278 : vector<16x32xf32>
    %c0_122 = arith.constant 0 : index
    %c0_123 = arith.constant 0 : index
    %280 = vector.load %arg14[%c0_122, %c0_123] : memref<32x128xf32, #tpu.memory_space<vmem>>, vector<32x128xf32>
    %cst_124 = arith.constant dense<0.000000e+00> : vector<16x128xf32>
    %281 = tpu.matmul %279, %280, %cst_124 {dimension_numbers = #tpu.dot_dimension_numbers<[1], [0], [0], [1], [0, 0, 1, 1], [], []>} : vector<16x32xf32>, vector<32x128xf32>, vector<16x128xf32> -> vector<16x128xf32>
    %c0_125 = arith.constant 0 : index
    %c0_126 = arith.constant 0 : index
    %282 = vector.load %arg15[%c0_125, %c0_126] : memref<16x128xf32, #tpu.memory_space<vmem>>, vector<16x128xf32>
    tpu.vector_store %arg15[%c0_125, %c0_126], %281 {strides = array<i32>} : memref<16x128xf32, #tpu.memory_space<vmem>>, vector<16x128xf32>,
    return
  }
}

</mosaic_0001>

<llo_original>
// kernel: tpu_custom_call.1
$region0: #{tpu_custom_call.1}
  #allocation0 [shape = 'u32[]', space=smem, size = 0x4, offset = 0x4, fixed_abs, tag = 'smem constant byte address 0x4 - core index']
  #allocation1 [shape = 'u32[144,128]{1,0:T(1,128)}', space=vmem, size = 0x12000, scoped, tag = 'internal scratch']
  %s0 = inlined_call_operand.hbm [shape: f32[16,32], index: 0, kind: input, shape index: {}]
  %s1 = inlined_call_operand.hbm [shape: f32[16,32], index: 1, kind: input, shape index: {}]
  %s2 = inlined_call_operand.hbm [shape: f32[16,32], index: 2, kind: input, shape index: {}]
  %s3 = inlined_call_operand.vmem [shape: f32[32,32], index: 3, kind: input, shape index: {}]
  %s4 = inlined_call_operand.hbm [shape: f32[16,16], index: 4, kind: input, shape index: {}]
  %s5 = inlined_call_operand.hbm [shape: f32[2,1,32], index: 5, kind: input, shape index: {}]
  %s6 = inlined_call_operand.vmem [shape: f32[2,32,96], index: 6, kind: input, shape index: {}]
  %s7 = inlined_call_operand.vmem [shape: f32[2,32,32], index: 7, kind: input, shape index: {}]
  %s8 = inlined_call_operand.hbm [shape: f32[2,1,32], index: 8, kind: input, shape index: {}]
  %s9 = inlined_call_operand.vmem [shape: f32[2,32,8], index: 9, kind: input, shape index: {}]
  %s10 = inlined_call_operand.hbm [shape: f32[2,8,64], index: 10, kind: input, shape index: {}]
  %s11 = inlined_call_operand.vmem [shape: f32[2,32,64], index: 11, kind: input, shape index: {}]
  %s12 = inlined_call_operand.vmem [shape: f32[2,64,32], index: 12, kind: input, shape index: {}]
  %s13 = inlined_call_operand.vmem [shape: f32[1,32], index: 13, kind: input, shape index: {}]
  %s14 = inlined_call_operand.vmem [shape: f32[32,128], index: 14, kind: input, shape index: {}]
  %s15 = inlined_call_operand.hbm [shape: f32[16,128], index: 15, kind: output, shape index: {}]
  %s16 = sld [smem:[#allocation0]]
  $region98: #{tpu_custom_call.1} parent=0
    _
  %s18 = ssub.s32 1, %s16
  %s19 = scalar_select 0, %s18, %s16
  $region1: #{tpu_custom_call.1} parent=0
    #allocation2 [shape = 'u8[8192]{0}', space=vmem, size = 0x2000, scoped, tag = 'input window, operand 0, single buffered']
    #allocation3 [shape = 's32[1]{0}', space=sflag, size = 0x4, scoped, tag = 'scoped memory for tpu_custom_call.1']
    #allocation4 [shape = 's32[1]{0}', space=sflag, size = 0x4, scoped, tag = 'scoped memory for tpu_custom_call.1']
    #allocation5 [shape = 'u8[8192]{0}', space=vmem, size = 0x2000, scoped, tag = 'input window, operand 1, single buffered']
    #allocation6 [shape = 's32[1]{0}', space=sflag, size = 0x4, scoped, tag = 'scoped memory for tpu_custom_call.1']
    #allocation7 [shape = 'u8[8192]{0}', space=vmem, size = 0x2000, scoped, tag = 'input window, operand 2, single buffered']
    #allocation8 [shape = 'u8[8192]{0}', space=vmem, size = 0x2000, scoped, tag = 'input window, operand 4, single buffered']
    #allocation9 [shape = 's32[1]{0}', space=sflag, size = 0x4, scoped, tag = 'scoped memory for tpu_custom_call.1']
    #allocation10 [shape = 'u8[1024]{0}', space=vmem, size = 0x400, scoped, tag = 'input window, operand 5, single buffered']
    #allocation11 [shape = 'u8[1024]{0}', space=vmem, size = 0x400, scoped, tag = 'input window, operand 8, single buffered']
    #allocation12 [shape = 's32[1]{0}', space=sflag, size = 0x4, scoped, tag = 'scoped memory for tpu_custom_call.1']
    #allocation13 [shape = 'u8[8192]{0}', space=vmem, size = 0x2000, scoped, tag = 'input window, operand 10, single buffered']
    #allocation14 [shape = 'u8[8192]{0}', space=vmem, size = 0x2000, scoped, tag = 'output window, operand 0, single buffered']
    %20 = vsyncpa [#allocation3], 0
    %21 = vsyncpa [#allocation6], 0
    %22 = vsyncpa [#allocation9], 0
    %23 = vsyncpa [#allocation12], 0
    %24 = vsyncpa [#allocation4], 0
    // Predicated region
    $region2: #{tpu_custom_call.1} parent=1 // pred_check
      _
    $region3: #{tpu_custom_call.1} parent=1 // pred_check_branch
      %26 = sbr.rel (0) target = $region5
    $region4: #{tpu_custom_call.1} parent=1 // pred_region
      %s28 = ssub.s32 256, 256
      %29 = vsyncadd [#allocation3], %s28
      %s30 = sshll.u32 [#allocation2], 4
      %s31 = int_to_ptr.vmem [resolvable:$true] %s30
      %36 = dma.hbm_to_vmem [thread:$0]  %s0, 256, %s31, [#allocation3], 128, 128, 8
    $region5: #{tpu_custom_call.1} parent=1 // pred_fallthru
      _
    // Predicated region
    $region6: #{tpu_custom_call.1} parent=1 // pred_check
      _
    $region7: #{tpu_custom_call.1} parent=1 // pred_check_branch
      %38 = sbr.rel (0) target = $region9
    $region8: #{tpu_custom_call.1} parent=1 // pred_region
      %s40 = ssub.s32 256, 256
      %41 = vsyncadd [#allocation6], %s40
      %s42 = sshll.u32 [#allocation5], 4
      %s43 = int_to_ptr.vmem [resolvable:$true] %s42
      %48 = dma.hbm_to_vmem [thread:$0]  %s1, 256, %s43, [#allocation6], 128, 128, 8
    $region9: #{tpu_custom_call.1} parent=1 // pred_fallthru
      _
    // Predicated region
    $region10: #{tpu_custom_call.1} parent=1 // pred_check
      _
    $region11: #{tpu_custom_call.1} parent=1 // pred_check_branch
      %50 = sbr.rel (0) target = $region13
    $region12: #{tpu_custom_call.1} parent=1 // pred_region
      %s52 = ssub.s32 256, 256
      %53 = vsyncadd [#allocation6], %s52
      %s54 = sshll.u32 [#allocation7], 4
      %s55 = int_to_ptr.vmem [resolvable:$true] %s54
      %60 = dma.hbm_to_vmem [thread:$0]  %s2, 256, %s55, [#allocation6], 128, 128, 8
    $region13: #{tpu_custom_call.1} parent=1 // pred_fallthru
      _
    // Predicated region
    $region14: #{tpu_custom_call.1} parent=1 // pred_check
      _
    $region15: #{tpu_custom_call.1} parent=1 // pred_check_branch
      %62 = sbr.rel (0) target = $region17
    $region16: #{tpu_custom_call.1} parent=1 // pred_region
      _
    $region17: #{tpu_custom_call.1} parent=1 // pred_fallthru
      _
    // Predicated region
    $region18: #{tpu_custom_call.1} parent=1 // pred_check
      _
    $region19: #{tpu_custom_call.1} parent=1 // pred_check_branch
      %64 = sbr.rel (0) target = $region21
    $region20: #{tpu_custom_call.1} parent=1 // pred_region
      %s66 = ssub.s32 256, 256
      %67 = vsyncadd [#allocation9], %s66
      %s68 = sshll.u32 [#allocation8], 4
      %s69 = int_to_ptr.vmem [resolvable:$true] %s68
      %74 = dma.hbm_to_vmem [thread:$0]  %s4, 256, %s69, [#allocation9], 128, 128, 8
    $region21: #{tpu_custom_call.1} parent=1 // pred_fallthru
      _
    // Predicated region
    $region22: #{tpu_custom_call.1} parent=1 // pred_check
      _
    $region23: #{tpu_custom_call.1} parent=1 // pred_check_branch
      %76 = sbr.rel (0) target = $region25
    $region24: #{tpu_custom_call.1} parent=1 // pred_region
      %s78 = ssub.s32 32, 32
      %79 = vsyncadd [#allocation9], %s78
      %s80 = sshll.u32 [#allocation10], 4
      %s81 = int_to_ptr.vmem [resolvable:$true] %s80
      %86 = dma.hbm_to_vmem [thread:$0]  %s5, 32, %s81, [#allocation9], 16, 16, 1
    $region25: #{tpu_custom_call.1} parent=1 // pred_fallthru
      _
    // Predicated region
    $region26: #{tpu_custom_call.1} parent=1 // pred_check
      _
    $region27: #{tpu_custom_call.1} parent=1 // pred_check_branch
      %88 = sbr.rel (0) target = $region29
    $region28: #{tpu_custom_call.1} parent=1 // pred_region
      _
    $region29: #{tpu_custom_call.1} parent=1 // pred_fallthru
      _
    // Predicated region
    $region30: #{tpu_custom_call.1} parent=1 // pred_check
      _
    $region31: #{tpu_custom_call.1} parent=1 // pred_check_branch
      %90 = sbr.rel (0) target = $region33
    $region32: #{tpu_custom_call.1} parent=1 // pred_region
      _
    $region33: #{tpu_custom_call.1} parent=1 // pred_fallthru
      _
    // Predicated region
    $region34: #{tpu_custom_call.1} parent=1 // pred_check
      _
    $region35: #{tpu_custom_call.1} parent=1 // pred_check_branch
      %92 = sbr.rel (0) target = $region37
    $region36: #{tpu_custom_call.1} parent=1 // pred_region
      %s94 = ssub.s32 32, 32
      %95 = vsyncadd [#allocation12], %s94
      %s96 = sshll.u32 [#allocation11], 4
      %s97 = int_to_ptr.vmem [resolvable:$true] %s96
      %102 = dma.hbm_to_vmem [thread:$0]  %s8, 32, %s97, [#allocation12], 16, 16, 1
    $region37: #{tpu_custom_call.1} parent=1 // pred_fallthru
      _
    // Predicated region
    $region38: #{tpu_custom_call.1} parent=1 // pred_check
      _
    $region39: #{tpu_custom_call.1} parent=1 // pred_check_branch
      %104 = sbr.rel (0) target = $region41
    $region40: #{tpu_custom_call.1} parent=1 // pred_region
      _
    $region41: #{tpu_custom_call.1} parent=1 // pred_fallthru
      _
    // Predicated region
    $region42: #{tpu_custom_call.1} parent=1 // pred_check
      _
    $region43: #{tpu_custom_call.1} parent=1 // pred_check_branch
      %106 = sbr.rel (0) target = $region45
    $region44: #{tpu_custom_call.1} parent=1 // pred_region
      %s108 = ssub.s32 256, 256
      %109 = vsyncadd [#allocation12], %s108
      %s110 = sshll.u32 [#allocation13], 4
      %s111 = int_to_ptr.vmem [resolvable:$true] %s110
      %116 = dma.hbm_to_vmem [thread:$0]  %s10, 256, %s111, [#allocation12], 128, 128, 8
    $region45: #{tpu_custom_call.1} parent=1 // pred_fallthru
      _
    // Predicated region
    $region46: #{tpu_custom_call.1} parent=1 // pred_check
      _
    $region47: #{tpu_custom_call.1} parent=1 // pred_check_branch
      %118 = sbr.rel (0) target = $region49
    $region48: #{tpu_custom_call.1} parent=1 // pred_region
      _
    $region49: #{tpu_custom_call.1} parent=1 // pred_fallthru
      _
    // Predicated region
    $region50: #{tpu_custom_call.1} parent=1 // pred_check
      _
    $region51: #{tpu_custom_call.1} parent=1 // pred_check_branch
      %120 = sbr.rel (0) target = $region53
    $region52: #{tpu_custom_call.1} parent=1 // pred_region
      _
    $region53: #{tpu_custom_call.1} parent=1 // pred_fallthru
      _
    // Predicated region
    $region54: #{tpu_custom_call.1} parent=1 // pred_check
      _
    $region55: #{tpu_custom_call.1} parent=1 // pred_check_branch
      %122 = sbr.rel (0) target = $region57
    $region56: #{tpu_custom_call.1} parent=1 // pred_region
      _
    $region57: #{tpu_custom_call.1} parent=1 // pred_fallthru
      _
    // Predicated region
    $region58: #{tpu_custom_call.1} parent=1 // pred_check
      _
    $region59: #{tpu_custom_call.1} parent=1 // pred_check_branch
      %124 = sbr.rel (0) target = $region61
    $region60: #{tpu_custom_call.1} parent=1 // pred_region
      _
    $region61: #{tpu_custom_call.1} parent=1 // pred_fallthru
      _
    // Predicated region
    $region62: #{tpu_custom_call.1} parent=1 // pred_check
      _
    $region63: #{tpu_custom_call.1} parent=1 // pred_check_branch
      %126 = sbr.rel (0) target = $region65
    $region64: #{tpu_custom_call.1} parent=1 // pred_region
      %127 = dma.done [#allocation3], 256
    $region65: #{tpu_custom_call.1} parent=1 // pred_fallthru
      _
    // Predicated region
    $region66: #{tpu_custom_call.1} parent=1 // pred_check
      _
    $region67: #{tpu_custom_call.1} parent=1 // pred_check_branch
      %129 = sbr.rel (0) target = $region69
    $region68: #{tpu_custom_call.1} parent=1 // pred_region
      %130 = dma.done [#allocation6], 256
    $region69: #{tpu_custom_call.1} parent=1 // pred_fallthru
      _
    // Predicated region
    $region70: #{tpu_custom_call.1} parent=1 // pred_check
      _
    $region71: #{tpu_custom_call.1} parent=1 // pred_check_branch
      %132 = sbr.rel (0) target = $region73
    $region72: #{tpu_custom_call.1} parent=1 // pred_region
      %133 = dma.done [#allocation6], 256
    $region73: #{tpu_custom_call.1} parent=1 // pred_fallthru
      _
    // Predicated region
    $region74: #{tpu_custom_call.1} parent=1 // pred_check
      _
    $region75: #{tpu_custom_call.1} parent=1 // pred_check_branch
      %135 = sbr.rel (0) target = $region77
    $region76: #{tpu_custom_call.1} parent=1 // pred_region
      %136 = dma.done [#allocation9], 256
    $region77: #{tpu_custom_call.1} parent=1 // pred_fallthru
      _
    // Predicated region
    $region78: #{tpu_custom_call.1} parent=1 // pred_check
      _
    $region79: #{tpu_custom_call.1} parent=1 // pred_check_branch
      %138 = sbr.rel (0) target = $region81
    $region80: #{tpu_custom_call.1} parent=1 // pred_region
      %139 = dma.done [#allocation9], 32
    $region81: #{tpu_custom_call.1} parent=1 // pred_fallthru
      _
    // Predicated region
    $region82: #{tpu_custom_call.1} parent=1 // pred_check
      _
    $region83: #{tpu_custom_call.1} parent=1 // pred_check_branch
      %141 = sbr.rel (0) target = $region85
    $region84: #{tpu_custom_call.1} parent=1 // pred_region
      %142 = dma.done [#allocation12], 32
    $region85: #{tpu_custom_call.1} parent=1 // pred_fallthru
      _
    // Predicated region
    $region86: #{tpu_custom_call.1} parent=1 // pred_check
      _
    $region87: #{tpu_custom_call.1} parent=1 // pred_check_branch
      %144 = sbr.rel (0) target = $region89
    $region88: #{tpu_custom_call.1} parent=1 // pred_region
      %145 = dma.done [#allocation12], 256
    $region89: #{tpu_custom_call.1} parent=1 // pred_fallthru
      _
    %v146 = vld [vmem:[#allocation2] sm:$0xff]
    %v147 = vld [vmem:[#allocation2 + $0x8] sm:$0xff]
    %v148 = vld [vmem:[#allocation5] sm:$0xff]
    %v149 = vld [vmem:[#allocation5 + $0x8] sm:$0xff]
    %v150 = vld [vmem:[#allocation7] sm:$0xff]
    %v151 = vld [vmem:[#allocation7 + $0x8] sm:$0xff]
    %v152 = vld [vmem:[%s3] sm:$0xff]
    %v153 = vld [vmem:[%s3 + $0x8] sm:$0xff]
    %v154 = vld [vmem:[%s3 + $0x10] sm:$0xff]
    %v155 = vld [vmem:[%s3 + $0x18] sm:$0xff]
    %v156 = vld [vmem:[#allocation8] sm:$0xff]
    %v157 = vld [vmem:[#allocation8 + $0x8] sm:$0xff]
    %v158 = vld [vmem:[#allocation10] sm:$0x1]
    %v159 = vmul.f32 %v146, %v146
    %v160 = vmul.f32 %v147, %v147
    %vm161 = vcmask 261120
    %v162 = vsel %vm161, %v159, 0.0
    %163 = vadd.xlane.f32.xlu0 %v162
    %v164 = vpop.xlane.xlu0 %163
    %v165 = vsel %vm161, %v160, 0.0
    %166 = vadd.xlane.f32.xlu0 %v165
    %v167 = vpop.xlane.xlu0 %166
    %v168 = vrcp.pop 32.0
    %v169 = vmul.f32 %v164, %v168
    %v170 = vmul.f32 %v167, %v168
    %v171 = vadd.f32 %v169, 1e-06
    %v172 = vadd.f32 %v170, 1e-06
    %v173 = vrsqrt.pop %v171
    %v174 = vrsqrt.pop %v172
    %v175 = vmul.f32 %v146, %v173
    %v176 = vmul.f32 %v147, %v174
    %v178 = vlaneseq
    %v179 = vshrl.u32 %v178, 7
    %v180 = vsub.s32 0, %v179
    %v181 = vrot.slane %v158, %v180
    %v183 = vmul.f32 %v175, %v181
    %v184 = vmul.f32 %v176, %v181
    %v185 = vld [vmem:[%s6] sm:$0xff]
    %v186 = vld [vmem:[%s6 + $0x8] sm:$0xff]
    %v187 = vld [vmem:[%s6 + $0x10] sm:$0xff]
    %v188 = vld [vmem:[%s6 + $0x18] sm:$0xff]
    %v190 = vsel %vm161, %v183, 0
    %v193 = vsel %vm161, %v184, 0
    %195 = vmatprep.subr.mxu0 0.0
    %196 = vmatpush1.msra.mxu0 %v185
    %197 = vmatprep.subr.mxu0 0.0
    %198 = vmatpush1.msra.mxu0 %v186
    %199 = vmatprep.subr.mxu0 0.0
    %200 = vmatpush1.msra.mxu0 %v187
    %201 = vmatprep.subr.mxu0 0.0
    %202 = vmatpush1.msra.mxu0 %v188
    %203 = vmatprep.subr.mxu0 0.0
    %204 = vmatpush1.msra.mxu0 0.0
    %205 = vmatprep.subr.mxu0 0.0
    %206 = vmatpush1.msra.mxu0 0.0
    %207 = vmatprep.subr.mxu0 0.0
    %208 = vmatpush1.msra.mxu0 0.0
    %209 = vmatprep.subr.mxu0 0.0
    %210 = vmatpush1.msra.mxu0 0.0
    %211 = vmatprep.subr.mxu0 0.0
    %212 = vmatpush1.msra.mxu0 0.0
    %213 = vmatprep.subr.mxu0 0.0
    %214 = vmatpush1.msra.mxu0 0.0
    %215 = vmatprep.subr.mxu0 0.0
    %216 = vmatpush1.msra.mxu0 0.0
    %217 = vmatprep.subr.mxu0 0.0
    %218 = vmatpush1.msra.mxu0 0.0
    %219 = vmatprep.subr.mxu0 0.0
    %220 = vmatpush1.msra.mxu0 0.0
    %221 = vmatprep.subr.mxu0 0.0
    %222 = vmatpush1.msra.mxu0 0.0
    %223 = vmatprep.subr.mxu0 0.0
    %224 = vmatpush1.msra.mxu0 0.0
    %225 = vmatprep.subr.mxu0 0.0
    %226 = vmatpush1.msra.mxu0 0.0
    %227 = vmatprep.subr.mxu0 0.0
    %228 = vmatpush1.msra.mxu0 0.0
    %229 = vmatprep.subr.mxu0 0.0
    %230 = vmatpush1.msra.mxu0 0.0
    %231 = vmatprep.subr.mxu0 0.0
    %232 = vmatpush1.msra.mxu0 0.0
    %233 = vmatprep.subr.mxu0 0.0
    %234 = vmatpush1.msra.mxu0 0.0
    %235 = vmatprep.subr.mxu0 0.0
    %236 = vmatpush1.msra.mxu0 0.0
    %237 = vmatprep.subr.mxu0 0.0
    %238 = vmatpush1.msra.mxu0 0.0
    %239 = vmatprep.subr.mxu0 0.0
    %240 = vmatpush1.msra.mxu0 0.0
    %241 = vmatprep.subr.mxu0 0.0
    %242 = vmatpush1.msra.mxu0 0.0
    %243 = vmatprep.subr.mxu0 0.0
    %244 = vmatpush1.msra.mxu0 0.0
    %245 = vmatprep.subr.mxu0 0.0
    %246 = vmatpush1.msra.mxu0 0.0
    %247 = vmatprep.subr.mxu0 0.0
    %248 = vmatpush1.msra.mxu0 0.0
    %249 = vmatprep.subr.mxu0 0.0
    %250 = vmatpush1.msra.mxu0 0.0
    %251 = vmatprep.subr.mxu0 0.0
    %252 = vmatpush1.msra.mxu0 0.0
    %253 = vmatprep.subr.mxu0 0.0
    %254 = vmatpush1.msra.mxu0 0.0
    %255 = vmatprep.subr.mxu0 0.0
    %256 = vmatpush1.msra.mxu0 0.0
    %257 = vmatprep.subr.mxu0 0.0
    %258 = vmatpush1.msra.mxu0 0.0
    %259 = vmatprep.mubr.f32.mxu0 0.0
    %260 = vmatmul.mubr.f32.gmra.mrb[0].mxu0 %v190
    %v261 = vpop.f32.mrb[0].mxu0
    %v262 = vadd.f32 0.0, %v261
    %v263 = vpop.f32.mrb[0].mxu0
    %264 = vmatprep.mubr.f32.mxu0 0.0
    %265 = vmatmul.mubr.f32.gmra.mrb[0].mxu0 %v193
    %v266 = vpop.f32.mrb[0].mxu0
    %v267 = vadd.f32 0.0, %v266
    %v268 = vpop.f32.mrb[0].mxu0
    %269 = vdwg.mxu0
    %v270 = vmul.f32 %v262, %v148
    %v271 = vmul.f32 %v267, %v149
    %v273 = vsel %vm161, %v262, 0
    %v276 = vsel %vm161, %v267, 0
    %278 = vmatprep.subr.mxu0 0.0
    %279 = vmatpush1.msra.mxu0 %v152
    %280 = vmatprep.subr.mxu0 0.0
    %281 = vmatpush1.msra.mxu0 %v153
    %282 = vmatprep.subr.mxu0 0.0
    %283 = vmatpush1.msra.mxu0 %v154
    %284 = vmatprep.subr.mxu0 0.0
    %285 = vmatpush1.msra.mxu0 %v155
    %286 = vmatprep.subr.mxu0 0.0
    %287 = vmatpush1.msra.mxu0 0.0
    %288 = vmatprep.subr.mxu0 0.0
    %289 = vmatpush1.msra.mxu0 0.0
    %290 = vmatprep.subr.mxu0 0.0
    %291 = vmatpush1.msra.mxu0 0.0
    %292 = vmatprep.subr.mxu0 0.0
    %293 = vmatpush1.msra.mxu0 0.0
    %294 = vmatprep.subr.mxu0 0.0
    %295 = vmatpush1.msra.mxu0 0.0
    %296 = vmatprep.subr.mxu0 0.0
    %297 = vmatpush1.msra.mxu0 0.0
    %298 = vmatprep.subr.mxu0 0.0
    %299 = vmatpush1.msra.mxu0 0.0
    %300 = vmatprep.subr.mxu0 0.0
    %301 = vmatpush1.msra.mxu0 0.0
    %302 = vmatprep.subr.mxu0 0.0
    %303 = vmatpush1.msra.mxu0 0.0
    %304 = vmatprep.subr.mxu0 0.0
    %305 = vmatpush1.msra.mxu0 0.0
    %306 = vmatprep.subr.mxu0 0.0
    %307 = vmatpush1.msra.mxu0 0.0
    %308 = vmatprep.subr.mxu0 0.0
    %309 = vmatpush1.msra.mxu0 0.0
    %310 = vmatprep.subr.mxu0 0.0
    %311 = vmatpush1.msra.mxu0 0.0
    %312 = vmatprep.subr.mxu0 0.0
    %313 = vmatpush1.msra.mxu0 0.0
    %314 = vmatprep.subr.mxu0 0.0
    %315 = vmatpush1.msra.mxu0 0.0
    %316 = vmatprep.subr.mxu0 0.0
    %317 = vmatpush1.msra.mxu0 0.0
    %318 = vmatprep.subr.mxu0 0.0
    %319 = vmatpush1.msra.mxu0 0.0
    %320 = vmatprep.subr.mxu0 0.0
    %321 = vmatpush1.msra.mxu0 0.0
    %322 = vmatprep.subr.mxu0 0.0
    %323 = vmatpush1.msra.mxu0 0.0
    %324 = vmatprep.subr.mxu0 0.0
    %325 = vmatpush1.msra.mxu0 0.0
    %326 = vmatprep.subr.mxu0 0.0
    %327 = vmatpush1.msra.mxu0 0.0
    %328 = vmatprep.subr.mxu0 0.0
    %329 = vmatpush1.msra.mxu0 0.0
    %330 = vmatprep.subr.mxu0 0.0
    %331 = vmatpush1.msra.mxu0 0.0
    %332 = vmatprep.subr.mxu0 0.0
    %333 = vmatpush1.msra.mxu0 0.0
    %334 = vmatprep.subr.mxu0 0.0
    %335 = vmatpush1.msra.mxu0 0.0
    %336 = vmatprep.subr.mxu0 0.0
    %337 = vmatpush1.msra.mxu0 0.0
    %338 = vmatprep.subr.mxu0 0.0
    %339 = vmatpush1.msra.mxu0 0.0
    %340 = vmatprep.subr.mxu0 0.0
    %341 = vmatpush1.msra.mxu0 0.0
    %342 = vmatprep.mubr.f32.mxu0 0.0
    %343 = vmatmul.mubr.f32.gmra.mrb[0].mxu0 %v273
    %v344 = vpop.f32.mrb[0].mxu0
    %v345 = vadd.f32 0.0, %v344
    %v346 = vpop.f32.mrb[0].mxu0
    %347 = vmatprep.mubr.f32.mxu0 0.0
    %348 = vmatmul.mubr.f32.gmra.mrb[0].mxu0 %v276
    %v349 = vpop.f32.mrb[0].mxu0
    %v350 = vadd.f32 0.0, %v349
    %v351 = vpop.f32.mrb[0].mxu0
    %352 = vdwg.mxu0
    %v353 = vmul.f32 %v345, %v150
    %v354 = vmul.f32 %v350, %v151
    %v355 = vadd.f32 %v270, %v353
    %v356 = vadd.f32 %v271, %v354
    %359 = vrot.lane.b32.xlu0 %v148, 32
    %v360 = vpop.permute.xlu0 %359
    %361 = vrot.lane.b32.xlu0 %v149, 32
    %v362 = vpop.permute.xlu0 %361
    %v365 = vmul.f32 %v262, %v360
    %v366 = vmul.f32 %v267, %v362
    %367 = vrot.lane.b32.xlu0 %v262, 96
    %v368 = vpop.permute.xlu0 %367
    %369 = vrot.lane.b32.xlu0 %v267, 96
    %v370 = vpop.permute.xlu0 %369
    %v371 = vsel %vm161, %v368, 0
    %v373 = vsel %vm161, %v370, 0
    %375 = vmatprep.subr.mxu0 0.0
    %376 = vmatpush1.msra.mxu0 %v152
    %377 = vmatprep.subr.mxu0 0.0
    %378 = vmatpush1.msra.mxu0 %v153
    %379 = vmatprep.subr.mxu0 0.0
    %380 = vmatpush1.msra.mxu0 %v154
    %381 = vmatprep.subr.mxu0 0.0
    %382 = vmatpush1.msra.mxu0 %v155
    %383 = vmatprep.subr.mxu0 0.0
    %384 = vmatpush1.msra.mxu0 0.0
    %385 = vmatprep.subr.mxu0 0.0
    %386 = vmatpush1.msra.mxu0 0.0
    %387 = vmatprep.subr.mxu0 0.0
    %388 = vmatpush1.msra.mxu0 0.0
    %389 = vmatprep.subr.mxu0 0.0
    %390 = vmatpush1.msra.mxu0 0.0
    %391 = vmatprep.subr.mxu0 0.0
    %392 = vmatpush1.msra.mxu0 0.0
    %393 = vmatprep.subr.mxu0 0.0
    %394 = vmatpush1.msra.mxu0 0.0
    %395 = vmatprep.subr.mxu0 0.0
    %396 = vmatpush1.msra.mxu0 0.0
    %397 = vmatprep.subr.mxu0 0.0
    %398 = vmatpush1.msra.mxu0 0.0
    %399 = vmatprep.subr.mxu0 0.0
    %400 = vmatpush1.msra.mxu0 0.0
    %401 = vmatprep.subr.mxu0 0.0
    %402 = vmatpush1.msra.mxu0 0.0
    %403 = vmatprep.subr.mxu0 0.0
    %404 = vmatpush1.msra.mxu0 0.0
    %405 = vmatprep.subr.mxu0 0.0
    %406 = vmatpush1.msra.mxu0 0.0
    %407 = vmatprep.subr.mxu0 0.0
    %408 = vmatpush1.msra.mxu0 0.0
    %409 = vmatprep.subr.mxu0 0.0
    %410 = vmatpush1.msra.mxu0 0.0
    %411 = vmatprep.subr.mxu0 0.0
    %412 = vmatpush1.msra.mxu0 0.0
    %413 = vmatprep.subr.mxu0 0.0
    %414 = vmatpush1.msra.mxu0 0.0
    %415 = vmatprep.subr.mxu0 0.0
    %416 = vmatpush1.msra.mxu0 0.0
    %417 = vmatprep.subr.mxu0 0.0
    %418 = vmatpush1.msra.mxu0 0.0
    %419 = vmatprep.subr.mxu0 0.0
    %420 = vmatpush1.msra.mxu0 0.0
    %421 = vmatprep.subr.mxu0 0.0
    %422 = vmatpush1.msra.mxu0 0.0
    %423 = vmatprep.subr.mxu0 0.0
    %424 = vmatpush1.msra.mxu0 0.0
    %425 = vmatprep.subr.mxu0 0.0
    %426 = vmatpush1.msra.mxu0 0.0
    %427 = vmatprep.subr.mxu0 0.0
    %428 = vmatpush1.msra.mxu0 0.0
    %429 = vmatprep.subr.mxu0 0.0
    %430 = vmatpush1.msra.mxu0 0.0
    %431 = vmatprep.subr.mxu0 0.0
    %432 = vmatpush1.msra.mxu0 0.0
    %433 = vmatprep.subr.mxu0 0.0
    %434 = vmatpush1.msra.mxu0 0.0
    %435 = vmatprep.subr.mxu0 0.0
    %436 = vmatpush1.msra.mxu0 0.0
    %437 = vmatprep.subr.mxu0 0.0
    %438 = vmatpush1.msra.mxu0 0.0
    %439 = vmatprep.mubr.f32.mxu0 0.0
    %440 = vmatmul.mubr.f32.gmra.mrb[0].mxu0 %v371
    %v441 = vpop.f32.mrb[0].mxu0
    %v442 = vadd.f32 0.0, %v441
    %v443 = vpop.f32.mrb[0].mxu0
    %444 = vmatprep.mubr.f32.mxu0 0.0
    %445 = vmatmul.mubr.f32.gmra.mrb[0].mxu0 %v373
    %v446 = vpop.f32.mrb[0].mxu0
    %v447 = vadd.f32 0.0, %v446
    %v448 = vpop.f32.mrb[0].mxu0
    %449 = vdwg.mxu0
    %v450 = vmul.f32 %v442, %v150
    %v451 = vmul.f32 %v447, %v151
    %454 = vrot.lane.b32.xlu0 %v450, 32
    %v455 = vpop.permute.xlu0 %454
    %456 = vrot.lane.b32.xlu0 %v451, 32
    %v457 = vpop.permute.xlu0 %456
    %v460 = vadd.f32 %v365, %v455
    %v461 = vadd.f32 %v366, %v457
    %464 = vrot.lane.b32.xlu0 %v460, 96
    %v465 = vpop.permute.xlu0 %464
    %466 = vrot.lane.b32.xlu0 %v461, 96
    %v467 = vpop.permute.xlu0 %466
    %vm468 = vcmask 64512
    %v470 = vsel %vm468, %v355, 0
    %v473 = vsel %vm468, %v356, 0
    %v475 = vsel %vm468, %v465, 0
    %v477 = vsel %vm468, %v467, 0
    %479 = vmatprep.subr.mxu0 0.0
    %480 = vmatpush1.xpose.msra.mxu0 %v475
    %481 = vmatprep.subr.mxu0 0.0
    %482 = vmatpush1.xpose.msra.mxu0 %v477
    %483 = vmatprep.subr.mxu0 0.0
    %484 = vmatpush1.xpose.msra.mxu0 0.0
    %485 = vmatprep.subr.mxu0 0.0
    %486 = vmatpush1.xpose.msra.mxu0 0.0
    %487 = vmatprep.subr.mxu0 0.0
    %488 = vmatpush1.xpose.msra.mxu0 0.0
    %489 = vmatprep.subr.mxu0 0.0
    %490 = vmatpush1.xpose.msra.mxu0 0.0
    %491 = vmatprep.subr.mxu0 0.0
    %492 = vmatpush1.xpose.msra.mxu0 0.0
    %493 = vmatprep.subr.mxu0 0.0
    %494 = vmatpush1.xpose.msra.mxu0 0.0
    %495 = vmatprep.subr.mxu0 0.0
    %496 = vmatpush1.xpose.msra.mxu0 0.0
    %497 = vmatprep.subr.mxu0 0.0
    %498 = vmatpush1.xpose.msra.mxu0 0.0
    %499 = vmatprep.subr.mxu0 0.0
    %500 = vmatpush1.xpose.msra.mxu0 0.0
    %501 = vmatprep.subr.mxu0 0.0
    %502 = vmatpush1.xpose.msra.mxu0 0.0
    %503 = vmatprep.subr.mxu0 0.0
    %504 = vmatpush1.xpose.msra.mxu0 0.0
    %505 = vmatprep.subr.mxu0 0.0
    %506 = vmatpush1.xpose.msra.mxu0 0.0
    %507 = vmatprep.subr.mxu0 0.0
    %508 = vmatpush1.xpose.msra.mxu0 0.0
    %509 = vmatprep.subr.mxu0 0.0
    %510 = vmatpush1.xpose.msra.mxu0 0.0
    %511 = vmatprep.subr.mxu0 0.0
    %512 = vmatpush1.xpose.msra.mxu0 0.0
    %513 = vmatprep.subr.mxu0 0.0
    %514 = vmatpush1.xpose.msra.mxu0 0.0
    %515 = vmatprep.subr.mxu0 0.0
    %516 = vmatpush1.xpose.msra.mxu0 0.0
    %517 = vmatprep.subr.mxu0 0.0
    %518 = vmatpush1.xpose.msra.mxu0 0.0
    %519 = vmatprep.subr.mxu0 0.0
    %520 = vmatpush1.xpose.msra.mxu0 0.0
    %521 = vmatprep.subr.mxu0 0.0
    %522 = vmatpush1.xpose.msra.mxu0 0.0
    %523 = vmatprep.subr.mxu0 0.0
    %524 = vmatpush1.xpose.msra.mxu0 0.0
    %525 = vmatprep.subr.mxu0 0.0
    %526 = vmatpush1.xpose.msra.mxu0 0.0
    %527 = vmatprep.subr.mxu0 0.0
    %528 = vmatpush1.xpose.msra.mxu0 0.0
    %529 = vmatprep.subr.mxu0 0.0
    %530 = vmatpush1.xpose.msra.mxu0 0.0
    %531 = vmatprep.subr.mxu0 0.0
    %532 = vmatpush1.xpose.msra.mxu0 0.0
    %533 = vmatprep.subr.mxu0 0.0
    %534 = vmatpush1.xpose.msra.mxu0 0.0
    %535 = vmatprep.subr.mxu0 0.0
    %536 = vmatpush1.xpose.msra.mxu0 0.0
    %537 = vmatprep.subr.mxu0 0.0
    %538 = vmatpush1.xpose.msra.mxu0 0.0
    %539 = vmatprep.subr.mxu0 0.0
    %540 = vmatpush1.xpose.msra.mxu0 0.0
    %541 = vmatprep.subr.mxu0 0.0
    %542 = vmatpush1.xpose.msra.mxu0 0.0
    %543 = vmatprep.mubr.f32.mxu0 0.0
    %544 = vmatmul.mubr.f32.gmra.mrb[0].mxu0 %v470
    %v545 = vpop.f32.mrb[0].mxu0
    %v546 = vadd.f32 %v156, %v545
    %v547 = vpop.f32.mrb[0].mxu0
    %548 = vmatprep.mubr.f32.mxu0 0.0
    %549 = vmatmul.mubr.f32.gmra.mrb[0].mxu0 %v473
    %v550 = vpop.f32.mrb[0].mxu0
    %v551 = vadd.f32 %v157, %v550
    %v552 = vpop.f32.mrb[0].mxu0
    %553 = vdwg.mxu0
    %vm554 = vcmask 130048
    %v555 = vsel %vm554, %v546, -inf
    %556 = vmax.xlane.f32.xlu0 %v555
    %v557 = vpop.xlane.xlu0 %556
    %v558 = vsel %vm554, %v551, -inf
    %559 = vmax.xlane.f32.xlu0 %v558
    %v560 = vpop.xlane.xlu0 %559
    %v561 = vsub.f32 %v546, %v557
    %v562 = vsub.f32 %v551, %v560
    %v563 = vmul.f32 %v561, 1.442695
    %v564 = vpow.pop %v563
    %v565 = vmul.f32 %v562, 1.442695
    %v566 = vpow.pop %v565
    %v567 = vsel %vm554, %v564, 0.0
    %568 = vadd.xlane.f32.xlu0 %v567
    %v569 = vpop.xlane.xlu0 %568
    %v570 = vsel %vm554, %v566, 0.0
    %571 = vadd.xlane.f32.xlu0 %v570
    %v572 = vpop.xlane.xlu0 %571
    %v573 = vrcp.pop %v569
    %v574 = vrcp.pop %v572
    %v575 = vmul.f32 %v564, %v573
    %v576 = vmul.f32 %v566, %v574
    %577 = vrot.lane.b32.xlu0 %v262, 64
    %v578 = vpop.permute.xlu0 %577
    %579 = vrot.lane.b32.xlu0 %v267, 64
    %v580 = vpop.permute.xlu0 %579
    %v584 = vsel %vm554, %v575, 0
    %v587 = vsel %vm554, %v576, 0
    %589 = vmatprep.subr.mxu0 0.0
    %590 = vmatpush1.msra.mxu0 %v578
    %591 = vmatprep.subr.mxu0 0.0
    %592 = vmatpush1.msra.mxu0 %v580
    %593 = vmatprep.subr.mxu0 0.0
    %594 = vmatpush1.msra.mxu0 0.0
    %595 = vmatprep.subr.mxu0 0.0
    %596 = vmatpush1.msra.mxu0 0.0
    %597 = vmatprep.subr.mxu0 0.0
    %598 = vmatpush1.msra.mxu0 0.0
    %599 = vmatprep.subr.mxu0 0.0
    %600 = vmatpush1.msra.mxu0 0.0
    %601 = vmatprep.subr.mxu0 0.0
    %602 = vmatpush1.msra.mxu0 0.0
    %603 = vmatprep.subr.mxu0 0.0
    %604 = vmatpush1.msra.mxu0 0.0
    %605 = vmatprep.subr.mxu0 0.0
    %606 = vmatpush1.msra.mxu0 0.0
    %607 = vmatprep.subr.mxu0 0.0
    %608 = vmatpush1.msra.mxu0 0.0
    %609 = vmatprep.subr.mxu0 0.0
    %610 = vmatpush1.msra.mxu0 0.0
    %611 = vmatprep.subr.mxu0 0.0
    %612 = vmatpush1.msra.mxu0 0.0
    %613 = vmatprep.subr.mxu0 0.0
    %614 = vmatpush1.msra.mxu0 0.0
    %615 = vmatprep.subr.mxu0 0.0
    %616 = vmatpush1.msra.mxu0 0.0
    %617 = vmatprep.subr.mxu0 0.0
    %618 = vmatpush1.msra.mxu0 0.0
    %619 = vmatprep.subr.mxu0 0.0
    %620 = vmatpush1.msra.mxu0 0.0
    %621 = vmatprep.subr.mxu0 0.0
    %622 = vmatpush1.msra.mxu0 0.0
    %623 = vmatprep.subr.mxu0 0.0
    %624 = vmatpush1.msra.mxu0 0.0
    %625 = vmatprep.subr.mxu0 0.0
    %626 = vmatpush1.msra.mxu0 0.0
    %627 = vmatprep.subr.mxu0 0.0
    %628 = vmatpush1.msra.mxu0 0.0
    %629 = vmatprep.subr.mxu0 0.0
    %630 = vmatpush1.msra.mxu0 0.0
    %631 = vmatprep.subr.mxu0 0.0
    %632 = vmatpush1.msra.mxu0 0.0
    %633 = vmatprep.subr.mxu0 0.0
    %634 = vmatpush1.msra.mxu0 0.0
    %635 = vmatprep.subr.mxu0 0.0
    %636 = vmatpush1.msra.mxu0 0.0
    %637 = vmatprep.subr.mxu0 0.0
    %638 = vmatpush1.msra.mxu0 0.0
    %639 = vmatprep.subr.mxu0 0.0
    %640 = vmatpush1.msra.mxu0 0.0
    %641 = vmatprep.subr.mxu0 0.0
    %642 = vmatpush1.msra.mxu0 0.0
    %643 = vmatprep.subr.mxu0 0.0
    %644 = vmatpush1.msra.mxu0 0.0
    %645 = vmatprep.subr.mxu0 0.0
    %646 = vmatpush1.msra.mxu0 0.0
    %647 = vmatprep.subr.mxu0 0.0
    %648 = vmatpush1.msra.mxu0 0.0
    %649 = vmatprep.subr.mxu0 0.0
    %650 = vmatpush1.msra.mxu0 0.0
    %651 = vmatprep.subr.mxu0 0.0
    %652 = vmatpush1.msra.mxu0 0.0
    %653 = vmatprep.mubr.f32.mxu0 0.0
    %654 = vmatmul.mubr.f32.gmra.mrb[0].mxu0 %v584
    %v655 = vpop.f32.mrb[0].mxu0
    %v656 = vadd.f32 0.0, %v655
    %v657 = vpop.f32.mrb[0].mxu0
    %658 = vmatprep.mubr.f32.mxu0 0.0
    %659 = vmatmul.mubr.f32.gmra.mrb[0].mxu0 %v587
    %v660 = vpop.f32.mrb[0].mxu0
    %v661 = vadd.f32 0.0, %v660
    %v662 = vpop.f32.mrb[0].mxu0
    %663 = vdwg.mxu0
    %664 = vrot.lane.b32.xlu0 %v355, 120
    %v665 = vpop.permute.xlu0 %664
    %666 = vrot.lane.b32.xlu0 %v356, 120
    %v667 = vpop.permute.xlu0 %666
    %668 = vrot.lane.b32.xlu0 %v460, 88
    %v669 = vpop.permute.xlu0 %668
    %670 = vrot.lane.b32.xlu0 %v461, 88
    %v671 = vpop.permute.xlu0 %670
    %v672 = vsel %vm468, %v665, 0
    %v674 = vsel %vm468, %v667, 0
    %v676 = vsel %vm468, %v669, 0
    %v678 = vsel %vm468, %v671, 0
    %680 = vmatprep.subr.mxu0 0.0
    %681 = vmatpush1.xpose.msra.mxu0 %v676
    %682 = vmatprep.subr.mxu0 0.0
    %683 = vmatpush1.xpose.msra.mxu0 %v678
    %684 = vmatprep.subr.mxu0 0.0
    %685 = vmatpush1.xpose.msra.mxu0 0.0
    %686 = vmatprep.subr.mxu0 0.0
    %687 = vmatpush1.xpose.msra.mxu0 0.0
    %688 = vmatprep.subr.mxu0 0.0
    %689 = vmatpush1.xpose.msra.mxu0 0.0
    %690 = vmatprep.subr.mxu0 0.0
    %691 = vmatpush1.xpose.msra.mxu0 0.0
    %692 = vmatprep.subr.mxu0 0.0
    %693 = vmatpush1.xpose.msra.mxu0 0.0
    %694 = vmatprep.subr.mxu0 0.0
    %695 = vmatpush1.xpose.msra.mxu0 0.0
    %696 = vmatprep.subr.mxu0 0.0
    %697 = vmatpush1.xpose.msra.mxu0 0.0
    %698 = vmatprep.subr.mxu0 0.0
    %699 = vmatpush1.xpose.msra.mxu0 0.0
    %700 = vmatprep.subr.mxu0 0.0
    %701 = vmatpush1.xpose.msra.mxu0 0.0
    %702 = vmatprep.subr.mxu0 0.0
    %703 = vmatpush1.xpose.msra.mxu0 0.0
    %704 = vmatprep.subr.mxu0 0.0
    %705 = vmatpush1.xpose.msra.mxu0 0.0
    %706 = vmatprep.subr.mxu0 0.0
    %707 = vmatpush1.xpose.msra.mxu0 0.0
    %708 = vmatprep.subr.mxu0 0.0
    %709 = vmatpush1.xpose.msra.mxu0 0.0
    %710 = vmatprep.subr.mxu0 0.0
    %711 = vmatpush1.xpose.msra.mxu0 0.0
    %712 = vmatprep.subr.mxu0 0.0
    %713 = vmatpush1.xpose.msra.mxu0 0.0
    %714 = vmatprep.subr.mxu0 0.0
    %715 = vmatpush1.xpose.msra.mxu0 0.0
    %716 = vmatprep.subr.mxu0 0.0
    %717 = vmatpush1.xpose.msra.mxu0 0.0
    %718 = vmatprep.subr.mxu0 0.0
    %719 = vmatpush1.xpose.msra.mxu0 0.0
    %720 = vmatprep.subr.mxu0 0.0
    %721 = vmatpush1.xpose.msra.mxu0 0.0
    %722 = vmatprep.subr.mxu0 0.0
    %723 = vmatpush1.xpose.msra.mxu0 0.0
    %724 = vmatprep.subr.mxu0 0.0
    %725 = vmatpush1.xpose.msra.mxu0 0.0
    %726 = vmatprep.subr.mxu0 0.0
    %727 = vmatpush1.xpose.msra.mxu0 0.0
    %728 = vmatprep.subr.mxu0 0.0
    %729 = vmatpush1.xpose.msra.mxu0 0.0
    %730 = vmatprep.subr.mxu0 0.0
    %731 = vmatpush1.xpose.msra.mxu0 0.0
    %732 = vmatprep.subr.mxu0 0.0
    %733 = vmatpush1.xpose.msra.mxu0 0.0
    %734 = vmatprep.subr.mxu0 0.0
    %735 = vmatpush1.xpose.msra.mxu0 0.0
    %736 = vmatprep.subr.mxu0 0.0
    %737 = vmatpush1.xpose.msra.mxu0 0.0
    %738 = vmatprep.subr.mxu0 0.0
    %739 = vmatpush1.xpose.msra.mxu0 0.0
    %740 = vmatprep.subr.mxu0 0.0
    %741 = vmatpush1.xpose.msra.mxu0 0.0
    %742 = vmatprep.subr.mxu0 0.0
    %743 = vmatpush1.xpose.msra.mxu0 0.0
    %744 = vmatprep.mubr.f32.mxu0 0.0
    %745 = vmatmul.mubr.f32.gmra.mrb[0].mxu0 %v672
    %v746 = vpop.f32.mrb[0].mxu0
    %v747 = vadd.f32 %v156, %v746
    %v748 = vpop.f32.mrb[0].mxu0
    %749 = vmatprep.mubr.f32.mxu0 0.0
    %750 = vmatmul.mubr.f32.gmra.mrb[0].mxu0 %v674
    %v751 = vpop.f32.mrb[0].mxu0
    %v752 = vadd.f32 %v157, %v751
    %v753 = vpop.f32.mrb[0].mxu0
    %754 = vdwg.mxu0
    %v755 = vsel %vm554, %v747, -inf
    %756 = vmax.xlane.f32.xlu0 %v755
    %v757 = vpop.xlane.xlu0 %756
    %v758 = vsel %vm554, %v752, -inf
    %759 = vmax.xlane.f32.xlu0 %v758
    %v760 = vpop.xlane.xlu0 %759
    %v761 = vsub.f32 %v747, %v757
    %v762 = vsub.f32 %v752, %v760
    %v763 = vmul.f32 %v761, 1.442695
    %v764 = vpow.pop %v763
    %v765 = vmul.f32 %v762, 1.442695
    %v766 = vpow.pop %v765
    %v767 = vsel %vm554, %v764, 0.0
    %768 = vadd.xlane.f32.xlu0 %v767
    %v769 = vpop.xlane.xlu0 %768
    %v770 = vsel %vm554, %v766, 0.0
    %771 = vadd.xlane.f32.xlu0 %v770
    %v772 = vpop.xlane.xlu0 %771
    %v773 = vrcp.pop %v769
    %v774 = vrcp.pop %v772
    %v775 = vmul.f32 %v764, %v773
    %v776 = vmul.f32 %v766, %v774
    %777 = vrot.lane.b32.xlu0 %v262, 56
    %v778 = vpop.permute.xlu0 %777
    %779 = vrot.lane.b32.xlu0 %v267, 56
    %v780 = vpop.permute.xlu0 %779
    %v784 = vsel %vm554, %v775, 0
    %v787 = vsel %vm554, %v776, 0
    %789 = vmatprep.subr.mxu0 0.0
    %790 = vmatpush1.msra.mxu0 %v778
    %791 = vmatprep.subr.mxu0 0.0
    %792 = vmatpush1.msra.mxu0 %v780
    %793 = vmatprep.subr.mxu0 0.0
    %794 = vmatpush1.msra.mxu0 0.0
    %795 = vmatprep.subr.mxu0 0.0
    %796 = vmatpush1.msra.mxu0 0.0
    %797 = vmatprep.subr.mxu0 0.0
    %798 = vmatpush1.msra.mxu0 0.0
    %799 = vmatprep.subr.mxu0 0.0
    %800 = vmatpush1.msra.mxu0 0.0
    %801 = vmatprep.subr.mxu0 0.0
    %802 = vmatpush1.msra.mxu0 0.0
    %803 = vmatprep.subr.mxu0 0.0
    %804 = vmatpush1.msra.mxu0 0.0
    %805 = vmatprep.subr.mxu0 0.0
    %806 = vmatpush1.msra.mxu0 0.0
    %807 = vmatprep.subr.mxu0 0.0
    %808 = vmatpush1.msra.mxu0 0.0
    %809 = vmatprep.subr.mxu0 0.0
    %810 = vmatpush1.msra.mxu0 0.0
    %811 = vmatprep.subr.mxu0 0.0
    %812 = vmatpush1.msra.mxu0 0.0
    %813 = vmatprep.subr.mxu0 0.0
    %814 = vmatpush1.msra.mxu0 0.0
    %815 = vmatprep.subr.mxu0 0.0
    %816 = vmatpush1.msra.mxu0 0.0
    %817 = vmatprep.subr.mxu0 0.0
    %818 = vmatpush1.msra.mxu0 0.0
    %819 = vmatprep.subr.mxu0 0.0
    %820 = vmatpush1.msra.mxu0 0.0
    %821 = vmatprep.subr.mxu0 0.0
    %822 = vmatpush1.msra.mxu0 0.0
    %823 = vmatprep.subr.mxu0 0.0
    %824 = vmatpush1.msra.mxu0 0.0
    %825 = vmatprep.subr.mxu0 0.0
    %826 = vmatpush1.msra.mxu0 0.0
    %827 = vmatprep.subr.mxu0 0.0
    %828 = vmatpush1.msra.mxu0 0.0
    %829 = vmatprep.subr.mxu0 0.0
    %830 = vmatpush1.msra.mxu0 0.0
    %831 = vmatprep.subr.mxu0 0.0
    %832 = vmatpush1.msra.mxu0 0.0
    %833 = vmatprep.subr.mxu0 0.0
    %834 = vmatpush1.msra.mxu0 0.0
    %835 = vmatprep.subr.mxu0 0.0
    %836 = vmatpush1.msra.mxu0 0.0
    %837 = vmatprep.subr.mxu0 0.0
    %838 = vmatpush1.msra.mxu0 0.0
    %839 = vmatprep.subr.mxu0 0.0
    %840 = vmatpush1.msra.mxu0 0.0
    %841 = vmatprep.subr.mxu0 0.0
    %842 = vmatpush1.msra.mxu0 0.0
    %843 = vmatprep.subr.mxu0 0.0
    %844 = vmatpush1.msra.mxu0 0.0
    %845 = vmatprep.subr.mxu0 0.0
    %846 = vmatpush1.msra.mxu0 0.0
    %847 = vmatprep.subr.mxu0 0.0
    %848 = vmatpush1.msra.mxu0 0.0
    %849 = vmatprep.subr.mxu0 0.0
    %850 = vmatpush1.msra.mxu0 0.0
    %851 = vmatprep.subr.mxu0 0.0
    %852 = vmatpush1.msra.mxu0 0.0
    %853 = vmatprep.mubr.f32.mxu0 0.0
    %854 = vmatmul.mubr.f32.gmra.mrb[0].mxu0 %v784
    %v855 = vpop.f32.mrb[0].mxu0
    %v856 = vadd.f32 0.0, %v855
    %v857 = vpop.f32.mrb[0].mxu0
    %858 = vmatprep.mubr.f32.mxu0 0.0
    %859 = vmatmul.mubr.f32.gmra.mrb[0].mxu0 %v787
    %v860 = vpop.f32.mrb[0].mxu0
    %v861 = vadd.f32 0.0, %v860
    %v862 = vpop.f32.mrb[0].mxu0
    %863 = vdwg.mxu0
    %864 = vrot.lane.b32.xlu0 %v355, 112
    %v865 = vpop.permute.xlu0 %864
    %866 = vrot.lane.b32.xlu0 %v356, 112
    %v867 = vpop.permute.xlu0 %866
    %868 = vrot.lane.b32.xlu0 %v460, 80
    %v869 = vpop.permute.xlu0 %868
    %870 = vrot.lane.b32.xlu0 %v461, 80
    %v871 = vpop.permute.xlu0 %870
    %v872 = vsel %vm468, %v865, 0
    %v874 = vsel %vm468, %v867, 0
    %v876 = vsel %vm468, %v869, 0
    %v878 = vsel %vm468, %v871, 0
    %880 = vmatprep.subr.mxu0 0.0
    %881 = vmatpush1.xpose.msra.mxu0 %v876
    %882 = vmatprep.subr.mxu0 0.0
    %883 = vmatpush1.xpose.msra.mxu0 %v878
    %884 = vmatprep.subr.mxu0 0.0
    %885 = vmatpush1.xpose.msra.mxu0 0.0
    %886 = vmatprep.subr.mxu0 0.0
    %887 = vmatpush1.xpose.msra.mxu0 0.0
    %888 = vmatprep.subr.mxu0 0.0
    %889 = vmatpush1.xpose.msra.mxu0 0.0
    %890 = vmatprep.subr.mxu0 0.0
    %891 = vmatpush1.xpose.msra.mxu0 0.0
    %892 = vmatprep.subr.mxu0 0.0
    %893 = vmatpush1.xpose.msra.mxu0 0.0
    %894 = vmatprep.subr.mxu0 0.0
    %895 = vmatpush1.xpose.msra.mxu0 0.0
    %896 = vmatprep.subr.mxu0 0.0
    %897 = vmatpush1.xpose.msra.mxu0 0.0
    %898 = vmatprep.subr.mxu0 0.0
    %899 = vmatpush1.xpose.msra.mxu0 0.0
    %900 = vmatprep.subr.mxu0 0.0
    %901 = vmatpush1.xpose.msra.mxu0 0.0
    %902 = vmatprep.subr.mxu0 0.0
    %903 = vmatpush1.xpose.msra.mxu0 0.0
    %904 = vmatprep.subr.mxu0 0.0
    %905 = vmatpush1.xpose.msra.mxu0 0.0
    %906 = vmatprep.subr.mxu0 0.0
    %907 = vmatpush1.xpose.msra.mxu0 0.0
    %908 = vmatprep.subr.mxu0 0.0
    %909 = vmatpush1.xpose.msra.mxu0 0.0
    %910 = vmatprep.subr.mxu0 0.0
    %911 = vmatpush1.xpose.msra.mxu0 0.0
    %912 = vmatprep.subr.mxu0 0.0
    %913 = vmatpush1.xpose.msra.mxu0 0.0
    %914 = vmatprep.subr.mxu0 0.0
    %915 = vmatpush1.xpose.msra.mxu0 0.0
    %916 = vmatprep.subr.mxu0 0.0
    %917 = vmatpush1.xpose.msra.mxu0 0.0
    %918 = vmatprep.subr.mxu0 0.0
    %919 = vmatpush1.xpose.msra.mxu0 0.0
    %920 = vmatprep.subr.mxu0 0.0
    %921 = vmatpush1.xpose.msra.mxu0 0.0
    %922 = vmatprep.subr.mxu0 0.0
    %923 = vmatpush1.xpose.msra.mxu0 0.0
    %924 = vmatprep.subr.mxu0 0.0
    %925 = vmatpush1.xpose.msra.mxu0 0.0
    %926 = vmatprep.subr.mxu0 0.0
    %927 = vmatpush1.xpose.msra.mxu0 0.0
    %928 = vmatprep.subr.mxu0 0.0
    %929 = vmatpush1.xpose.msra.mxu0 0.0
    %930 = vmatprep.subr.mxu0 0.0
    %931 = vmatpush1.xpose.msra.mxu0 0.0
    %932 = vmatprep.subr.mxu0 0.0
    %933 = vmatpush1.xpose.msra.mxu0 0.0
    %934 = vmatprep.subr.mxu0 0.0
    %935 = vmatpush1.xpose.msra.mxu0 0.0
    %936 = vmatprep.subr.mxu0 0.0
    %937 = vmatpush1.xpose.msra.mxu0 0.0
    %938 = vmatprep.subr.mxu0 0.0
    %939 = vmatpush1.xpose.msra.mxu0 0.0
    %940 = vmatprep.subr.mxu0 0.0
    %941 = vmatpush1.xpose.msra.mxu0 0.0
    %942 = vmatprep.subr.mxu0 0.0
    %943 = vmatpush1.xpose.msra.mxu0 0.0
    %944 = vmatprep.mubr.f32.mxu0 0.0
    %945 = vmatmul.mubr.f32.gmra.mrb[0].mxu0 %v872
    %v946 = vpop.f32.mrb[0].mxu0
    %v947 = vadd.f32 %v156, %v946
    %v948 = vpop.f32.mrb[0].mxu0
    %949 = vmatprep.mubr.f32.mxu0 0.0
    %950 = vmatmul.mubr.f32.gmra.mrb[0].mxu0 %v874
    %v951 = vpop.f32.mrb[0].mxu0
    %v952 = vadd.f32 %v157, %v951
    %v953 = vpop.f32.mrb[0].mxu0
    %954 = vdwg.mxu0
    %v955 = vsel %vm554, %v947, -inf
    %956 = vmax.xlane.f32.xlu0 %v955
    %v957 = vpop.xlane.xlu0 %956
    %v958 = vsel %vm554, %v952, -inf
    %959 = vmax.xlane.f32.xlu0 %v958
    %v960 = vpop.xlane.xlu0 %959
    %v961 = vsub.f32 %v947, %v957
    %v962 = vsub.f32 %v952, %v960
    %v963 = vmul.f32 %v961, 1.442695
    %v964 = vpow.pop %v963
    %v965 = vmul.f32 %v962, 1.442695
    %v966 = vpow.pop %v965
    %v967 = vsel %vm554, %v964, 0.0
    %968 = vadd.xlane.f32.xlu0 %v967
    %v969 = vpop.xlane.xlu0 %968
    %v970 = vsel %vm554, %v966, 0.0
    %971 = vadd.xlane.f32.xlu0 %v970
    %v972 = vpop.xlane.xlu0 %971
    %v973 = vrcp.pop %v969
    %v974 = vrcp.pop %v972
    %v975 = vmul.f32 %v964, %v973
    %v976 = vmul.f32 %v966, %v974
    %977 = vrot.lane.b32.xlu0 %v262, 48
    %v978 = vpop.permute.xlu0 %977
    %979 = vrot.lane.b32.xlu0 %v267, 48
    %v980 = vpop.permute.xlu0 %979
    %v984 = vsel %vm554, %v975, 0
    %v987 = vsel %vm554, %v976, 0
    %989 = vmatprep.subr.mxu0 0.0
    %990 = vmatpush1.msra.mxu0 %v978
    %991 = vmatprep.subr.mxu0 0.0
    %992 = vmatpush1.msra.mxu0 %v980
    %993 = vmatprep.subr.mxu0 0.0
    %994 = vmatpush1.msra.mxu0 0.0
    %995 = vmatprep.subr.mxu0 0.0
    %996 = vmatpush1.msra.mxu0 0.0
    %997 = vmatprep.subr.mxu0 0.0
    %998 = vmatpush1.msra.mxu0 0.0
    %999 = vmatprep.subr.mxu0 0.0
    %1000 = vmatpush1.msra.mxu0 0.0
    %1001 = vmatprep.subr.mxu0 0.0
    %1002 = vmatpush1.msra.mxu0 0.0
    %1003 = vmatprep.subr.mxu0 0.0
    %1004 = vmatpush1.msra.mxu0 0.0
    %1005 = vmatprep.subr.mxu0 0.0
    %1006 = vmatpush1.msra.mxu0 0.0
    %1007 = vmatprep.subr.mxu0 0.0
    %1008 = vmatpush1.msra.mxu0 0.0
    %1009 = vmatprep.subr.mxu0 0.0
    %1010 = vmatpush1.msra.mxu0 0.0
    %1011 = vmatprep.subr.mxu0 0.0
    %1012 = vmatpush1.msra.mxu0 0.0
    %1013 = vmatprep.subr.mxu0 0.0
    %1014 = vmatpush1.msra.mxu0 0.0
    %1015 = vmatprep.subr.mxu0 0.0
    %1016 = vmatpush1.msra.mxu0 0.0
    %1017 = vmatprep.subr.mxu0 0.0
    %1018 = vmatpush1.msra.mxu0 0.0
    %1019 = vmatprep.subr.mxu0 0.0
    %1020 = vmatpush1.msra.mxu0 0.0
    %1021 = vmatprep.subr.mxu0 0.0
    %1022 = vmatpush1.msra.mxu0 0.0
    %1023 = vmatprep.subr.mxu0 0.0
    %1024 = vmatpush1.msra.mxu0 0.0
    %1025 = vmatprep.subr.mxu0 0.0
    %1026 = vmatpush1.msra.mxu0 0.0
    %1027 = vmatprep.subr.mxu0 0.0
    %1028 = vmatpush1.msra.mxu0 0.0
    %1029 = vmatprep.subr.mxu0 0.0
    %1030 = vmatpush1.msra.mxu0 0.0
    %1031 = vmatprep.subr.mxu0 0.0
    %1032 = vmatpush1.msra.mxu0 0.0
    %1033 = vmatprep.subr.mxu0 0.0
    %1034 = vmatpush1.msra.mxu0 0.0
    %1035 = vmatprep.subr.mxu0 0.0
    %1036 = vmatpush1.msra.mxu0 0.0
    %1037 = vmatprep.subr.mxu0 0.0
    %1038 = vmatpush1.msra.mxu0 0.0
    %1039 = vmatprep.subr.mxu0 0.0
    %1040 = vmatpush1.msra.mxu0 0.0
    %1041 = vmatprep.subr.mxu0 0.0
    %1042 = vmatpush1.msra.mxu0 0.0
    %1043 = vmatprep.subr.mxu0 0.0
    %1044 = vmatpush1.msra.mxu0 0.0
    %1045 = vmatprep.subr.mxu0 0.0
    %1046 = vmatpush1.msra.mxu0 0.0
    %1047 = vmatprep.subr.mxu0 0.0
    %1048 = vmatpush1.msra.mxu0 0.0
    %1049 = vmatprep.subr.mxu0 0.0
    %1050 = vmatpush1.msra.mxu0 0.0
    %1051 = vmatprep.subr.mxu0 0.0
    %1052 = vmatpush1.msra.mxu0 0.0
    %1053 = vmatprep.mubr.f32.mxu0 0.0
    %1054 = vmatmul.mubr.f32.gmra.mrb[0].mxu0 %v984
    %v1055 = vpop.f32.mrb[0].mxu0
    %v1056 = vadd.f32 0.0, %v1055
    %v1057 = vpop.f32.mrb[0].mxu0
    %1058 = vmatprep.mubr.f32.mxu0 0.0
    %1059 = vmatmul.mubr.f32.gmra.mrb[0].mxu0 %v987
    %v1060 = vpop.f32.mrb[0].mxu0
    %v1061 = vadd.f32 0.0, %v1060
    %v1062 = vpop.f32.mrb[0].mxu0
    %1063 = vdwg.mxu0
    %1064 = vrot.lane.b32.xlu0 %v355, 104
    %v1065 = vpop.permute.xlu0 %1064
    %1066 = vrot.lane.b32.xlu0 %v356, 104
    %v1067 = vpop.permute.xlu0 %1066
    %1068 = vrot.lane.b32.xlu0 %v460, 72
    %v1069 = vpop.permute.xlu0 %1068
    %1070 = vrot.lane.b32.xlu0 %v461, 72
    %v1071 = vpop.permute.xlu0 %1070
    %v1072 = vsel %vm468, %v1065, 0
    %v1074 = vsel %vm468, %v1067, 0
    %v1076 = vsel %vm468, %v1069, 0
    %v1078 = vsel %vm468, %v1071, 0
    %1080 = vmatprep.subr.mxu0 0.0
    %1081 = vmatpush1.xpose.msra.mxu0 %v1076
    %1082 = vmatprep.subr.mxu0 0.0
    %1083 = vmatpush1.xpose.msra.mxu0 %v1078
    %1084 = vmatprep.subr.mxu0 0.0
    %1085 = vmatpush1.xpose.msra.mxu0 0.0
    %1086 = vmatprep.subr.mxu0 0.0
    %1087 = vmatpush1.xpose.msra.mxu0 0.0
    %1088 = vmatprep.subr.mxu0 0.0
    %1089 = vmatpush1.xpose.msra.mxu0 0.0
    %1090 = vmatprep.subr.mxu0 0.0
    %1091 = vmatpush1.xpose.msra.mxu0 0.0
    %1092 = vmatprep.subr.mxu0 0.0
    %1093 = vmatpush1.xpose.msra.mxu0 0.0
    %1094 = vmatprep.subr.mxu0 0.0
    %1095 = vmatpush1.xpose.msra.mxu0 0.0
    %1096 = vmatprep.subr.mxu0 0.0
    %1097 = vmatpush1.xpose.msra.mxu0 0.0
    %1098 = vmatprep.subr.mxu0 0.0
    %1099 = vmatpush1.xpose.msra.mxu0 0.0
    %1100 = vmatprep.subr.mxu0 0.0
    %1101 = vmatpush1.xpose.msra.mxu0 0.0
    %1102 = vmatprep.subr.mxu0 0.0
    %1103 = vmatpush1.xpose.msra.mxu0 0.0
    %1104 = vmatprep.subr.mxu0 0.0
    %1105 = vmatpush1.xpose.msra.mxu0 0.0
    %1106 = vmatprep.subr.mxu0 0.0
    %1107 = vmatpush1.xpose.msra.mxu0 0.0
    %1108 = vmatprep.subr.mxu0 0.0
    %1109 = vmatpush1.xpose.msra.mxu0 0.0
    %1110 = vmatprep.subr.mxu0 0.0
    %1111 = vmatpush1.xpose.msra.mxu0 0.0
    %1112 = vmatprep.subr.mxu0 0.0
    %1113 = vmatpush1.xpose.msra.mxu0 0.0
    %1114 = vmatprep.subr.mxu0 0.0
    %1115 = vmatpush1.xpose.msra.mxu0 0.0
    %1116 = vmatprep.subr.mxu0 0.0
    %1117 = vmatpush1.xpose.msra.mxu0 0.0
    %1118 = vmatprep.subr.mxu0 0.0
    %1119 = vmatpush1.xpose.msra.mxu0 0.0
    %1120 = vmatprep.subr.mxu0 0.0
    %1121 = vmatpush1.xpose.msra.mxu0 0.0
    %1122 = vmatprep.subr.mxu0 0.0
    %1123 = vmatpush1.xpose.msra.mxu0 0.0
    %1124 = vmatprep.subr.mxu0 0.0
    %1125 = vmatpush1.xpose.msra.mxu0 0.0
    %1126 = vmatprep.subr.mxu0 0.0
    %1127 = vmatpush1.xpose.msra.mxu0 0.0
    %1128 = vmatprep.subr.mxu0 0.0
    %1129 = vmatpush1.xpose.msra.mxu0 0.0
    %1130 = vmatprep.subr.mxu0 0.0
    %1131 = vmatpush1.xpose.msra.mxu0 0.0
    %1132 = vmatprep.subr.mxu0 0.0
    %1133 = vmatpush1.xpose.msra.mxu0 0.0
    %1134 = vmatprep.subr.mxu0 0.0
    %1135 = vmatpush1.xpose.msra.mxu0 0.0
    %1136 = vmatprep.subr.mxu0 0.0
    %1137 = vmatpush1.xpose.msra.mxu0 0.0
    %1138 = vmatprep.subr.mxu0 0.0
    %1139 = vmatpush1.xpose.msra.mxu0 0.0
    %1140 = vmatprep.subr.mxu0 0.0
    %1141 = vmatpush1.xpose.msra.mxu0 0.0
    %1142 = vmatprep.subr.mxu0 0.0
    %1143 = vmatpush1.xpose.msra.mxu0 0.0
    %1144 = vmatprep.mubr.f32.mxu0 0.0
    %1145 = vmatmul.mubr.f32.gmra.mrb[0].mxu0 %v1072
    %v1146 = vpop.f32.mrb[0].mxu0
    %v1147 = vadd.f32 %v156, %v1146
    %v1148 = vpop.f32.mrb[0].mxu0
    %1149 = vmatprep.mubr.f32.mxu0 0.0
    %1150 = vmatmul.mubr.f32.gmra.mrb[0].mxu0 %v1074
    %v1151 = vpop.f32.mrb[0].mxu0
    %v1152 = vadd.f32 %v157, %v1151
    %v1153 = vpop.f32.mrb[0].mxu0
    %1154 = vdwg.mxu0
    %v1155 = vsel %vm554, %v1147, -inf
    %1156 = vmax.xlane.f32.xlu0 %v1155
    %v1157 = vpop.xlane.xlu0 %1156
    %v1158 = vsel %vm554, %v1152, -inf
    %1159 = vmax.xlane.f32.xlu0 %v1158
    %v1160 = vpop.xlane.xlu0 %1159
    %v1161 = vsub.f32 %v1147, %v1157
    %v1162 = vsub.f32 %v1152, %v1160
    %v1163 = vmul.f32 %v1161, 1.442695
    %v1164 = vpow.pop %v1163
    %v1165 = vmul.f32 %v1162, 1.442695
    %v1166 = vpow.pop %v1165
    %v1167 = vsel %vm554, %v1164, 0.0
    %1168 = vadd.xlane.f32.xlu0 %v1167
    %v1169 = vpop.xlane.xlu0 %1168
    %v1170 = vsel %vm554, %v1166, 0.0
    %1171 = vadd.xlane.f32.xlu0 %v1170
    %v1172 = vpop.xlane.xlu0 %1171
    %v1173 = vrcp.pop %v1169
    %v1174 = vrcp.pop %v1172
    %v1175 = vmul.f32 %v1164, %v1173
    %v1176 = vmul.f32 %v1166, %v1174
    %1177 = vrot.lane.b32.xlu0 %v262, 40
    %v1178 = vpop.permute.xlu0 %1177
    %1179 = vrot.lane.b32.xlu0 %v267, 40
    %v1180 = vpop.permute.xlu0 %1179
    %v1184 = vsel %vm554, %v1175, 0
    %v1187 = vsel %vm554, %v1176, 0
    %1189 = vmatprep.subr.mxu0 0.0
    %1190 = vmatpush1.msra.mxu0 %v1178
    %1191 = vmatprep.subr.mxu0 0.0
    %1192 = vmatpush1.msra.mxu0 %v1180
    %1193 = vmatprep.subr.mxu0 0.0
    %1194 = vmatpush1.msra.mxu0 0.0
    %1195 = vmatprep.subr.mxu0 0.0
    %1196 = vmatpush1.msra.mxu0 0.0
    %1197 = vmatprep.subr.mxu0 0.0
    %1198 = vmatpush1.msra.mxu0 0.0
    %1199 = vmatprep.subr.mxu0 0.0
    %1200 = vmatpush1.msra.mxu0 0.0
    %1201 = vmatprep.subr.mxu0 0.0
    %1202 = vmatpush1.msra.mxu0 0.0
    %1203 = vmatprep.subr.mxu0 0.0
    %1204 = vmatpush1.msra.mxu0 0.0
    %1205 = vmatprep.subr.mxu0 0.0
    %1206 = vmatpush1.msra.mxu0 0.0
    %1207 = vmatprep.subr.mxu0 0.0
    %1208 = vmatpush1.msra.mxu0 0.0
    %1209 = vmatprep.subr.mxu0 0.0
    %1210 = vmatpush1.msra.mxu0 0.0
    %1211 = vmatprep.subr.mxu0 0.0
    %1212 = vmatpush1.msra.mxu0 0.0
    %1213 = vmatprep.subr.mxu0 0.0
    %1214 = vmatpush1.msra.mxu0 0.0
    %1215 = vmatprep.subr.mxu0 0.0
    %1216 = vmatpush1.msra.mxu0 0.0
    %1217 = vmatprep.subr.mxu0 0.0
    %1218 = vmatpush1.msra.mxu0 0.0
    %1219 = vmatprep.subr.mxu0 0.0
    %1220 = vmatpush1.msra.mxu0 0.0
    %1221 = vmatprep.subr.mxu0 0.0
    %1222 = vmatpush1.msra.mxu0 0.0
    %1223 = vmatprep.subr.mxu0 0.0
    %1224 = vmatpush1.msra.mxu0 0.0
    %1225 = vmatprep.subr.mxu0 0.0
    %1226 = vmatpush1.msra.mxu0 0.0
    %1227 = vmatprep.subr.mxu0 0.0
    %1228 = vmatpush1.msra.mxu0 0.0
    %1229 = vmatprep.subr.mxu0 0.0
    %1230 = vmatpush1.msra.mxu0 0.0
    %1231 = vmatprep.subr.mxu0 0.0
    %1232 = vmatpush1.msra.mxu0 0.0
    %1233 = vmatprep.subr.mxu0 0.0
    %1234 = vmatpush1.msra.mxu0 0.0
    %1235 = vmatprep.subr.mxu0 0.0
    %1236 = vmatpush1.msra.mxu0 0.0
    %1237 = vmatprep.subr.mxu0 0.0
    %1238 = vmatpush1.msra.mxu0 0.0
    %1239 = vmatprep.subr.mxu0 0.0
    %1240 = vmatpush1.msra.mxu0 0.0
    %1241 = vmatprep.subr.mxu0 0.0
    %1242 = vmatpush1.msra.mxu0 0.0
    %1243 = vmatprep.subr.mxu0 0.0
    %1244 = vmatpush1.msra.mxu0 0.0
    %1245 = vmatprep.subr.mxu0 0.0
    %1246 = vmatpush1.msra.mxu0 0.0
    %1247 = vmatprep.subr.mxu0 0.0
    %1248 = vmatpush1.msra.mxu0 0.0
    %1249 = vmatprep.subr.mxu0 0.0
    %1250 = vmatpush1.msra.mxu0 0.0
    %1251 = vmatprep.subr.mxu0 0.0
    %1252 = vmatpush1.msra.mxu0 0.0
    %1253 = vmatprep.mubr.f32.mxu0 0.0
    %1254 = vmatmul.mubr.f32.gmra.mrb[0].mxu0 %v1184
    %v1255 = vpop.f32.mrb[0].mxu0
    %v1256 = vadd.f32 0.0, %v1255
    %v1257 = vpop.f32.mrb[0].mxu0
    %1258 = vmatprep.mubr.f32.mxu0 0.0
    %1259 = vmatmul.mubr.f32.gmra.mrb[0].mxu0 %v1187
    %v1260 = vpop.f32.mrb[0].mxu0
    %v1261 = vadd.f32 0.0, %v1260
    %v1262 = vpop.f32.mrb[0].mxu0
    %1263 = vdwg.mxu0
    %1266 = vrot.lane.b32.xlu0 %v856, 8
    %v1267 = vpop.permute.xlu0 %1266
    %1268 = vrot.lane.b32.xlu0 %v861, 8
    %v1269 = vpop.permute.xlu0 %1268
    %1274 = vrot.lane.b32.xlu0 %v1056, 16
    %v1275 = vpop.permute.xlu0 %1274
    %1276 = vrot.lane.b32.xlu0 %v1061, 16
    %v1277 = vpop.permute.xlu0 %1276
    %1282 = vrot.lane.b32.xlu0 %v1256, 24
    %v1283 = vpop.permute.xlu0 %1282
    %1284 = vrot.lane.b32.xlu0 %v1261, 24
    %v1285 = vpop.permute.xlu0 %1284
    %v1288 = vsel %vm468, %v656, %v1267
    %v1289 = vsel %vm468, %v661, %v1269
    %v1290 = vsel %vm554, %v1288, %v1275
    %v1291 = vsel %vm554, %v1289, %v1277
    %vm1292 = vcmask 195584
    %v1293 = vsel %vm1292, %v1290, %v1283
    %v1294 = vsel %vm1292, %v1291, %v1285
    %v1295 = vld [vmem:[%s7] sm:$0xff]
    %v1296 = vld [vmem:[%s7 + $0x8] sm:$0xff]
    %v1297 = vld [vmem:[%s7 + $0x10] sm:$0xff]
    %v1298 = vld [vmem:[%s7 + $0x18] sm:$0xff]
    %v1300 = vsel %vm161, %v1293, 0
    %v1303 = vsel %vm161, %v1294, 0
    %1305 = vmatprep.subr.mxu0 0.0
    %1306 = vmatpush1.msra.mxu0 %v1295
    %1307 = vmatprep.subr.mxu0 0.0
    %1308 = vmatpush1.msra.mxu0 %v1296
    %1309 = vmatprep.subr.mxu0 0.0
    %1310 = vmatpush1.msra.mxu0 %v1297
    %1311 = vmatprep.subr.mxu0 0.0
    %1312 = vmatpush1.msra.mxu0 %v1298
    %1313 = vmatprep.subr.mxu0 0.0
    %1314 = vmatpush1.msra.mxu0 0.0
    %1315 = vmatprep.subr.mxu0 0.0
    %1316 = vmatpush1.msra.mxu0 0.0
    %1317 = vmatprep.subr.mxu0 0.0
    %1318 = vmatpush1.msra.mxu0 0.0
    %1319 = vmatprep.subr.mxu0 0.0
    %1320 = vmatpush1.msra.mxu0 0.0
    %1321 = vmatprep.subr.mxu0 0.0
    %1322 = vmatpush1.msra.mxu0 0.0
    %1323 = vmatprep.subr.mxu0 0.0
    %1324 = vmatpush1.msra.mxu0 0.0
    %1325 = vmatprep.subr.mxu0 0.0
    %1326 = vmatpush1.msra.mxu0 0.0
    %1327 = vmatprep.subr.mxu0 0.0
    %1328 = vmatpush1.msra.mxu0 0.0
    %1329 = vmatprep.subr.mxu0 0.0
    %1330 = vmatpush1.msra.mxu0 0.0
    %1331 = vmatprep.subr.mxu0 0.0
    %1332 = vmatpush1.msra.mxu0 0.0
    %1333 = vmatprep.subr.mxu0 0.0
    %1334 = vmatpush1.msra.mxu0 0.0
    %1335 = vmatprep.subr.mxu0 0.0
    %1336 = vmatpush1.msra.mxu0 0.0
    %1337 = vmatprep.subr.mxu0 0.0
    %1338 = vmatpush1.msra.mxu0 0.0
    %1339 = vmatprep.subr.mxu0 0.0
    %1340 = vmatpush1.msra.mxu0 0.0
    %1341 = vmatprep.subr.mxu0 0.0
    %1342 = vmatpush1.msra.mxu0 0.0
    %1343 = vmatprep.subr.mxu0 0.0
    %1344 = vmatpush1.msra.mxu0 0.0
    %1345 = vmatprep.subr.mxu0 0.0
    %1346 = vmatpush1.msra.mxu0 0.0
    %1347 = vmatprep.subr.mxu0 0.0
    %1348 = vmatpush1.msra.mxu0 0.0
    %1349 = vmatprep.subr.mxu0 0.0
    %1350 = vmatpush1.msra.mxu0 0.0
    %1351 = vmatprep.subr.mxu0 0.0
    %1352 = vmatpush1.msra.mxu0 0.0
    %1353 = vmatprep.subr.mxu0 0.0
    %1354 = vmatpush1.msra.mxu0 0.0
    %1355 = vmatprep.subr.mxu0 0.0
    %1356 = vmatpush1.msra.mxu0 0.0
    %1357 = vmatprep.subr.mxu0 0.0
    %1358 = vmatpush1.msra.mxu0 0.0
    %1359 = vmatprep.subr.mxu0 0.0
    %1360 = vmatpush1.msra.mxu0 0.0
    %1361 = vmatprep.subr.mxu0 0.0
    %1362 = vmatpush1.msra.mxu0 0.0
    %1363 = vmatprep.subr.mxu0 0.0
    %1364 = vmatpush1.msra.mxu0 0.0
    %1365 = vmatprep.subr.mxu0 0.0
    %1366 = vmatpush1.msra.mxu0 0.0
    %1367 = vmatprep.subr.mxu0 0.0
    %1368 = vmatpush1.msra.mxu0 0.0
    %1369 = vmatprep.mubr.f32.mxu0 0.0
    %1370 = vmatmul.mubr.f32.gmra.mrb[0].mxu0 %v1300
    %v1371 = vpop.f32.mrb[0].mxu0
    %v1372 = vadd.f32 0.0, %v1371
    %v1373 = vpop.f32.mrb[0].mxu0
    %1374 = vmatprep.mubr.f32.mxu0 0.0
    %1375 = vmatmul.mubr.f32.gmra.mrb[0].mxu0 %v1303
    %v1376 = vpop.f32.mrb[0].mxu0
    %v1377 = vadd.f32 0.0, %v1376
    %v1378 = vpop.f32.mrb[0].mxu0
    %1379 = vdwg.mxu0
    %v1380 = vadd.f32 %v146, %v1372
    %v1381 = vadd.f32 %v147, %v1377
    %v1382 = vld [vmem:[#allocation11] sm:$0x1]
    %v1383 = vmul.f32 %v1380, %v1380
    %v1384 = vmul.f32 %v1381, %v1381
    %v1385 = vsel %vm161, %v1383, 0.0
    %1386 = vadd.xlane.f32.xlu0 %v1385
    %v1387 = vpop.xlane.xlu0 %1386
    %v1388 = vsel %vm161, %v1384, 0.0
    %1389 = vadd.xlane.f32.xlu0 %v1388
    %v1390 = vpop.xlane.xlu0 %1389
    %v1391 = vmul.f32 %v1387, %v168
    %v1392 = vmul.f32 %v1390, %v168
    %v1393 = vadd.f32 %v1391, 1e-06
    %v1394 = vadd.f32 %v1392, 1e-06
    %v1395 = vrsqrt.pop %v1393
    %v1396 = vrsqrt.pop %v1394
    %v1397 = vmul.f32 %v1380, %v1395
    %v1398 = vmul.f32 %v1381, %v1396
    %v1400 = vlaneseq
    %v1401 = vshrl.u32 %v1400, 7
    %v1402 = vsub.s32 0, %v1401
    %v1403 = vrot.slane %v1382, %v1402
    %v1405 = vmul.f32 %v1397, %v1403
    %v1406 = vmul.f32 %v1398, %v1403
    %v1407 = vld [vmem:[%s9] sm:$0xff]
    %v1408 = vld [vmem:[%s9 + $0x8] sm:$0xff]
    %v1409 = vld [vmem:[%s9 + $0x10] sm:$0xff]
    %v1410 = vld [vmem:[%s9 + $0x18] sm:$0xff]
    %v1412 = vsel %vm161, %v1405, 0
    %v1415 = vsel %vm161, %v1406, 0
    %1417 = vmatprep.subr.mxu0 0.0
    %1418 = vmatpush1.msra.mxu0 %v1407
    %1419 = vmatprep.subr.mxu0 0.0
    %1420 = vmatpush1.msra.mxu0 %v1408
    %1421 = vmatprep.subr.mxu0 0.0
    %1422 = vmatpush1.msra.mxu0 %v1409
    %1423 = vmatprep.subr.mxu0 0.0
    %1424 = vmatpush1.msra.mxu0 %v1410
    %1425 = vmatprep.subr.mxu0 0.0
    %1426 = vmatpush1.msra.mxu0 0.0
    %1427 = vmatprep.subr.mxu0 0.0
    %1428 = vmatpush1.msra.mxu0 0.0
    %1429 = vmatprep.subr.mxu0 0.0
    %1430 = vmatpush1.msra.mxu0 0.0
    %1431 = vmatprep.subr.mxu0 0.0
    %1432 = vmatpush1.msra.mxu0 0.0
    %1433 = vmatprep.subr.mxu0 0.0
    %1434 = vmatpush1.msra.mxu0 0.0
    %1435 = vmatprep.subr.mxu0 0.0
    %1436 = vmatpush1.msra.mxu0 0.0
    %1437 = vmatprep.subr.mxu0 0.0
    %1438 = vmatpush1.msra.mxu0 0.0
    %1439 = vmatprep.subr.mxu0 0.0
    %1440 = vmatpush1.msra.mxu0 0.0
    %1441 = vmatprep.subr.mxu0 0.0
    %1442 = vmatpush1.msra.mxu0 0.0
    %1443 = vmatprep.subr.mxu0 0.0
    %1444 = vmatpush1.msra.mxu0 0.0
    %1445 = vmatprep.subr.mxu0 0.0
    %1446 = vmatpush1.msra.mxu0 0.0
    %1447 = vmatprep.subr.mxu0 0.0
    %1448 = vmatpush1.msra.mxu0 0.0
    %1449 = vmatprep.subr.mxu0 0.0
    %1450 = vmatpush1.msra.mxu0 0.0
    %1451 = vmatprep.subr.mxu0 0.0
    %1452 = vmatpush1.msra.mxu0 0.0
    %1453 = vmatprep.subr.mxu0 0.0
    %1454 = vmatpush1.msra.mxu0 0.0
    %1455 = vmatprep.subr.mxu0 0.0
    %1456 = vmatpush1.msra.mxu0 0.0
    %1457 = vmatprep.subr.mxu0 0.0
    %1458 = vmatpush1.msra.mxu0 0.0
    %1459 = vmatprep.subr.mxu0 0.0
    %1460 = vmatpush1.msra.mxu0 0.0
    %1461 = vmatprep.subr.mxu0 0.0
    %1462 = vmatpush1.msra.mxu0 0.0
    %1463 = vmatprep.subr.mxu0 0.0
    %1464 = vmatpush1.msra.mxu0 0.0
    %1465 = vmatprep.subr.mxu0 0.0
    %1466 = vmatpush1.msra.mxu0 0.0
    %1467 = vmatprep.subr.mxu0 0.0
    %1468 = vmatpush1.msra.mxu0 0.0
    %1469 = vmatprep.subr.mxu0 0.0
    %1470 = vmatpush1.msra.mxu0 0.0
    %1471 = vmatprep.subr.mxu0 0.0
    %1472 = vmatpush1.msra.mxu0 0.0
    %1473 = vmatprep.subr.mxu0 0.0
    %1474 = vmatpush1.msra.mxu0 0.0
    %1475 = vmatprep.subr.mxu0 0.0
    %1476 = vmatpush1.msra.mxu0 0.0
    %1477 = vmatprep.subr.mxu0 0.0
    %1478 = vmatpush1.msra.mxu0 0.0
    %1479 = vmatprep.subr.mxu0 0.0
    %1480 = vmatpush1.msra.mxu0 0.0
    %1481 = vmatprep.mubr.f32.mxu0 0.0
    %1482 = vmatmul.mubr.f32.gmra.mrb[0].mxu0 %v1412
    %v1483 = vpop.f32.mrb[0].mxu0
    %v1484 = vadd.f32 0.0, %v1483
    %v1485 = vpop.f32.mrb[0].mxu0
    %1486 = vmatprep.mubr.f32.mxu0 0.0
    %1487 = vmatmul.mubr.f32.gmra.mrb[0].mxu0 %v1415
    %v1488 = vpop.f32.mrb[0].mxu0
    %v1489 = vadd.f32 0.0, %v1488
    %v1490 = vpop.f32.mrb[0].mxu0
    %1491 = vdwg.mxu0
    %v1492 = vld [vmem:[#allocation13] sm:$0xff]
    %v1494 = vsel %vm468, %v1484, 0
    %v1497 = vsel %vm468, %v1489, 0
    %1499 = vmatprep.subr.mxu0 0.0
    %1500 = vmatpush1.msra.mxu0 %v1492
    %1501 = vmatprep.subr.mxu0 0.0
    %1502 = vmatpush1.msra.mxu0 0.0
    %1503 = vmatprep.subr.mxu0 0.0
    %1504 = vmatpush1.msra.mxu0 0.0
    %1505 = vmatprep.subr.mxu0 0.0
    %1506 = vmatpush1.msra.mxu0 0.0
    %1507 = vmatprep.subr.mxu0 0.0
    %1508 = vmatpush1.msra.mxu0 0.0
    %1509 = vmatprep.subr.mxu0 0.0
    %1510 = vmatpush1.msra.mxu0 0.0
    %1511 = vmatprep.subr.mxu0 0.0
    %1512 = vmatpush1.msra.mxu0 0.0
    %1513 = vmatprep.subr.mxu0 0.0
    %1514 = vmatpush1.msra.mxu0 0.0
    %1515 = vmatprep.subr.mxu0 0.0
    %1516 = vmatpush1.msra.mxu0 0.0
    %1517 = vmatprep.subr.mxu0 0.0
    %1518 = vmatpush1.msra.mxu0 0.0
    %1519 = vmatprep.subr.mxu0 0.0
    %1520 = vmatpush1.msra.mxu0 0.0
    %1521 = vmatprep.subr.mxu0 0.0
    %1522 = vmatpush1.msra.mxu0 0.0
    %1523 = vmatprep.subr.mxu0 0.0
    %1524 = vmatpush1.msra.mxu0 0.0
    %1525 = vmatprep.subr.mxu0 0.0
    %1526 = vmatpush1.msra.mxu0 0.0
    %1527 = vmatprep.subr.mxu0 0.0
    %1528 = vmatpush1.msra.mxu0 0.0
    %1529 = vmatprep.subr.mxu0 0.0
    %1530 = vmatpush1.msra.mxu0 0.0
    %1531 = vmatprep.subr.mxu0 0.0
    %1532 = vmatpush1.msra.mxu0 0.0
    %1533 = vmatprep.subr.mxu0 0.0
    %1534 = vmatpush1.msra.mxu0 0.0
    %1535 = vmatprep.subr.mxu0 0.0
    %1536 = vmatpush1.msra.mxu0 0.0
    %1537 = vmatprep.subr.mxu0 0.0
    %1538 = vmatpush1.msra.mxu0 0.0
    %1539 = vmatprep.subr.mxu0 0.0
    %1540 = vmatpush1.msra.mxu0 0.0
    %1541 = vmatprep.subr.mxu0 0.0
    %1542 = vmatpush1.msra.mxu0 0.0
    %1543 = vmatprep.subr.mxu0 0.0
    %1544 = vmatpush1.msra.mxu0 0.0
    %1545 = vmatprep.subr.mxu0 0.0
    %1546 = vmatpush1.msra.mxu0 0.0
    %1547 = vmatprep.subr.mxu0 0.0
    %1548 = vmatpush1.msra.mxu0 0.0
    %1549 = vmatprep.subr.mxu0 0.0
    %1550 = vmatpush1.msra.mxu0 0.0
    %1551 = vmatprep.subr.mxu0 0.0
    %1552 = vmatpush1.msra.mxu0 0.0
    %1553 = vmatprep.subr.mxu0 0.0
    %1554 = vmatpush1.msra.mxu0 0.0
    %1555 = vmatprep.subr.mxu0 0.0
    %1556 = vmatpush1.msra.mxu0 0.0
    %1557 = vmatprep.subr.mxu0 0.0
    %1558 = vmatpush1.msra.mxu0 0.0
    %1559 = vmatprep.subr.mxu0 0.0
    %1560 = vmatpush1.msra.mxu0 0.0
    %1561 = vmatprep.subr.mxu0 0.0
    %1562 = vmatpush1.msra.mxu0 0.0
    %1563 = vmatprep.mubr.f32.mxu0 0.0
    %1564 = vmatmul.mubr.f32.gmra.mrb[0].mxu0 %v1494
    %v1565 = vpop.f32.mrb[0].mxu0
    %v1566 = vadd.f32 0.0, %v1565
    %v1567 = vpop.f32.mrb[0].mxu0
    %1568 = vmatprep.mubr.f32.mxu0 0.0
    %1569 = vmatmul.mubr.f32.gmra.mrb[0].mxu0 %v1497
    %v1570 = vpop.f32.mrb[0].mxu0
    %v1571 = vadd.f32 0.0, %v1570
    %v1572 = vpop.f32.mrb[0].mxu0
    %1573 = vdwg.mxu0
    %v1574 = vld [vmem:[%s11] sm:$0xff]
    %v1575 = vld [vmem:[%s11 + $0x8] sm:$0xff]
    %v1576 = vld [vmem:[%s11 + $0x10] sm:$0xff]
    %v1577 = vld [vmem:[%s11 + $0x18] sm:$0xff]
    %1578 = vmatprep.subr.mxu0 0.0
    %1579 = vmatpush1.msra.mxu0 %v1574
    %1580 = vmatprep.subr.mxu0 0.0
    %1581 = vmatpush1.msra.mxu0 %v1575
    %1582 = vmatprep.subr.mxu0 0.0
    %1583 = vmatpush1.msra.mxu0 %v1576
    %1584 = vmatprep.subr.mxu0 0.0
    %1585 = vmatpush1.msra.mxu0 %v1577
    %1586 = vmatprep.subr.mxu0 0.0
    %1587 = vmatpush1.msra.mxu0 0.0
    %1588 = vmatprep.subr.mxu0 0.0
    %1589 = vmatpush1.msra.mxu0 0.0
    %1590 = vmatprep.subr.mxu0 0.0
    %1591 = vmatpush1.msra.mxu0 0.0
    %1592 = vmatprep.subr.mxu0 0.0
    %1593 = vmatpush1.msra.mxu0 0.0
    %1594 = vmatprep.subr.mxu0 0.0
    %1595 = vmatpush1.msra.mxu0 0.0
    %1596 = vmatprep.subr.mxu0 0.0
    %1597 = vmatpush1.msra.mxu0 0.0
    %1598 = vmatprep.subr.mxu0 0.0
    %1599 = vmatpush1.msra.mxu0 0.0
    %1600 = vmatprep.subr.mxu0 0.0
    %1601 = vmatpush1.msra.mxu0 0.0
    %1602 = vmatprep.subr.mxu0 0.0
    %1603 = vmatpush1.msra.mxu0 0.0
    %1604 = vmatprep.subr.mxu0 0.0
    %1605 = vmatpush1.msra.mxu0 0.0
    %1606 = vmatprep.subr.mxu0 0.0
    %1607 = vmatpush1.msra.mxu0 0.0
    %1608 = vmatprep.subr.mxu0 0.0
    %1609 = vmatpush1.msra.mxu0 0.0
    %1610 = vmatprep.subr.mxu0 0.0
    %1611 = vmatpush1.msra.mxu0 0.0
    %1612 = vmatprep.subr.mxu0 0.0
    %1613 = vmatpush1.msra.mxu0 0.0
    %1614 = vmatprep.subr.mxu0 0.0
    %1615 = vmatpush1.msra.mxu0 0.0
    %1616 = vmatprep.subr.mxu0 0.0
    %1617 = vmatpush1.msra.mxu0 0.0
    %1618 = vmatprep.subr.mxu0 0.0
    %1619 = vmatpush1.msra.mxu0 0.0
    %1620 = vmatprep.subr.mxu0 0.0
    %1621 = vmatpush1.msra.mxu0 0.0
    %1622 = vmatprep.subr.mxu0 0.0
    %1623 = vmatpush1.msra.mxu0 0.0
    %1624 = vmatprep.subr.mxu0 0.0
    %1625 = vmatpush1.msra.mxu0 0.0
    %1626 = vmatprep.subr.mxu0 0.0
    %1627 = vmatpush1.msra.mxu0 0.0
    %1628 = vmatprep.subr.mxu0 0.0
    %1629 = vmatpush1.msra.mxu0 0.0
    %1630 = vmatprep.subr.mxu0 0.0
    %1631 = vmatpush1.msra.mxu0 0.0
    %1632 = vmatprep.subr.mxu0 0.0
    %1633 = vmatpush1.msra.mxu0 0.0
    %1634 = vmatprep.subr.mxu0 0.0
    %1635 = vmatpush1.msra.mxu0 0.0
    %1636 = vmatprep.subr.mxu0 0.0
    %1637 = vmatpush1.msra.mxu0 0.0
    %1638 = vmatprep.subr.mxu0 0.0
    %1639 = vmatpush1.msra.mxu0 0.0
    %1640 = vmatprep.subr.mxu0 0.0
    %1641 = vmatpush1.msra.mxu0 0.0
    %1642 = vmatprep.mubr.f32.mxu0 0.0
    %1643 = vmatmul.mubr.f32.gmra.mrb[0].mxu0 %v1412
    %v1644 = vpop.f32.mrb[0].mxu0
    %v1645 = vadd.f32 0.0, %v1644
    %v1646 = vpop.f32.mrb[0].mxu0
    %1647 = vmatprep.mubr.f32.mxu0 0.0
    %1648 = vmatmul.mubr.f32.gmra.mrb[0].mxu0 %v1415
    %v1649 = vpop.f32.mrb[0].mxu0
    %v1650 = vadd.f32 0.0, %v1649
    %v1651 = vpop.f32.mrb[0].mxu0
    %1652 = vdwg.mxu0
    %v1653 = vxor.u32 %v1566, 2147483648
    %v1654 = vxor.u32 %v1571, 2147483648
    %v1655 = vmul.f32 %v1653, 1.442695
    %v1656 = vpow.pop %v1655
    %v1657 = vmul.f32 %v1654, 1.442695
    %v1658 = vpow.pop %v1657
    %v1659 = vadd.f32 %v1656, 1.0
    %v1660 = vadd.f32 %v1658, 1.0
    %v1661 = vrcp.pop %v1659
    %v1662 = vmul.f32 1.0, %v1661
    %v1663 = vrcp.pop %v1660
    %v1664 = vmul.f32 1.0, %v1663
    %v1665 = vmul.f32 %v1566, %v1662
    %v1666 = vmul.f32 %v1571, %v1664
    %v1667 = vmul.f32 %v1665, %v1645
    %v1668 = vmul.f32 %v1666, %v1650
    %v1669 = vld [vmem:[%s12] sm:$0xff]
    %v1670 = vld [vmem:[%s12 + $0x8] sm:$0xff]
    %v1671 = vld [vmem:[%s12 + $0x10] sm:$0xff]
    %v1672 = vld [vmem:[%s12 + $0x18] sm:$0xff]
    %v1673 = vld [vmem:[%s12 + $0x20] sm:$0xff]
    %v1674 = vld [vmem:[%s12 + $0x28] sm:$0xff]
    %v1675 = vld [vmem:[%s12 + $0x30] sm:$0xff]
    %v1676 = vld [vmem:[%s12 + $0x38] sm:$0xff]
    %vm1677 = vcmask 523264
    %v1679 = vsel %vm1677, %v1667, 0
    %v1682 = vsel %vm1677, %v1668, 0
    %1684 = vmatprep.subr.mxu0 0.0
    %1685 = vmatpush1.msra.mxu0 %v1669
    %1686 = vmatprep.subr.mxu0 0.0
    %1687 = vmatpush1.msra.mxu0 %v1670
    %1688 = vmatprep.subr.mxu0 0.0
    %1689 = vmatpush1.msra.mxu0 %v1671
    %1690 = vmatprep.subr.mxu0 0.0
    %1691 = vmatpush1.msra.mxu0 %v1672
    %1692 = vmatprep.subr.mxu0 0.0
    %1693 = vmatpush1.msra.mxu0 %v1673
    %1694 = vmatprep.subr.mxu0 0.0
    %1695 = vmatpush1.msra.mxu0 %v1674
    %1696 = vmatprep.subr.mxu0 0.0
    %1697 = vmatpush1.msra.mxu0 %v1675
    %1698 = vmatprep.subr.mxu0 0.0
    %1699 = vmatpush1.msra.mxu0 %v1676
    %1700 = vmatprep.subr.mxu0 0.0
    %1701 = vmatpush1.msra.mxu0 0.0
    %1702 = vmatprep.subr.mxu0 0.0
    %1703 = vmatpush1.msra.mxu0 0.0
    %1704 = vmatprep.subr.mxu0 0.0
    %1705 = vmatpush1.msra.mxu0 0.0
    %1706 = vmatprep.subr.mxu0 0.0
    %1707 = vmatpush1.msra.mxu0 0.0
    %1708 = vmatprep.subr.mxu0 0.0
    %1709 = vmatpush1.msra.mxu0 0.0
    %1710 = vmatprep.subr.mxu0 0.0
    %1711 = vmatpush1.msra.mxu0 0.0
    %1712 = vmatprep.subr.mxu0 0.0
    %1713 = vmatpush1.msra.mxu0 0.0
    %1714 = vmatprep.subr.mxu0 0.0
    %1715 = vmatpush1.msra.mxu0 0.0
    %1716 = vmatprep.subr.mxu0 0.0
    %1717 = vmatpush1.msra.mxu0 0.0
    %1718 = vmatprep.subr.mxu0 0.0
    %1719 = vmatpush1.msra.mxu0 0.0
    %1720 = vmatprep.subr.mxu0 0.0
    %1721 = vmatpush1.msra.mxu0 0.0
    %1722 = vmatprep.subr.mxu0 0.0
    %1723 = vmatpush1.msra.mxu0 0.0
    %1724 = vmatprep.subr.mxu0 0.0
    %1725 = vmatpush1.msra.mxu0 0.0
    %1726 = vmatprep.subr.mxu0 0.0
    %1727 = vmatpush1.msra.mxu0 0.0
    %1728 = vmatprep.subr.mxu0 0.0
    %1729 = vmatpush1.msra.mxu0 0.0
    %1730 = vmatprep.subr.mxu0 0.0
    %1731 = vmatpush1.msra.mxu0 0.0
    %1732 = vmatprep.subr.mxu0 0.0
    %1733 = vmatpush1.msra.mxu0 0.0
    %1734 = vmatprep.subr.mxu0 0.0
    %1735 = vmatpush1.msra.mxu0 0.0
    %1736 = vmatprep.subr.mxu0 0.0
    %1737 = vmatpush1.msra.mxu0 0.0
    %1738 = vmatprep.subr.mxu0 0.0
    %1739 = vmatpush1.msra.mxu0 0.0
    %1740 = vmatprep.subr.mxu0 0.0
    %1741 = vmatpush1.msra.mxu0 0.0
    %1742 = vmatprep.subr.mxu0 0.0
    %1743 = vmatpush1.msra.mxu0 0.0
    %1744 = vmatprep.subr.mxu0 0.0
    %1745 = vmatpush1.msra.mxu0 0.0
    %1746 = vmatprep.subr.mxu0 0.0
    %1747 = vmatpush1.msra.mxu0 0.0
    %1748 = vmatprep.mubr.f32.mxu0 0.0
    %1749 = vmatmul.mubr.f32.gmra.mrb[0].mxu0 %v1679
    %v1750 = vpop.f32.mrb[0].mxu0
    %v1751 = vadd.f32 0.0, %v1750
    %v1752 = vpop.f32.mrb[0].mxu0
    %1753 = vmatprep.mubr.f32.mxu0 0.0
    %1754 = vmatmul.mubr.f32.gmra.mrb[0].mxu0 %v1682
    %v1755 = vpop.f32.mrb[0].mxu0
    %v1756 = vadd.f32 0.0, %v1755
    %v1757 = vpop.f32.mrb[0].mxu0
    %1758 = vdwg.mxu0
    %v1759 = vadd.f32 %v1380, %v1751
    %v1760 = vadd.f32 %v1381, %v1756
    %s1761 = scalar_lea.vmem [#allocation10], 1
    %v1762 = vld [vmem:[%s1761] sm:$0x1]
    %v1763 = vmul.f32 %v1759, %v1759
    %v1764 = vmul.f32 %v1760, %v1760
    %v1765 = vsel %vm161, %v1763, 0.0
    %1766 = vadd.xlane.f32.xlu0 %v1765
    %v1767 = vpop.xlane.xlu0 %1766
    %v1768 = vsel %vm161, %v1764, 0.0
    %1769 = vadd.xlane.f32.xlu0 %v1768
    %v1770 = vpop.xlane.xlu0 %1769
    %v1771 = vmul.f32 %v1767, %v168
    %v1772 = vmul.f32 %v1770, %v168
    %v1773 = vadd.f32 %v1771, 1e-06
    %v1774 = vadd.f32 %v1772, 1e-06
    %v1775 = vrsqrt.pop %v1773
    %v1776 = vrsqrt.pop %v1774
    %v1777 = vmul.f32 %v1759, %v1775
    %v1778 = vmul.f32 %v1760, %v1776
    %v1780 = vlaneseq
    %v1781 = vshrl.u32 %v1780, 7
    %v1782 = vsub.s32 0, %v1781
    %v1783 = vrot.slane %v1762, %v1782
    %v1785 = vmul.f32 %v1777, %v1783
    %v1786 = vmul.f32 %v1778, %v1783
    %s1787 = scalar_lea.vmem %s6, 32
    %v1788 = vld [vmem:[%s1787] sm:$0xff]
    %v1789 = vld [vmem:[%s1787 + $0x8] sm:$0xff]
    %v1790 = vld [vmem:[%s1787 + $0x10] sm:$0xff]
    %v1791 = vld [vmem:[%s1787 + $0x18] sm:$0xff]
    %v1793 = vsel %vm161, %v1785, 0
    %v1796 = vsel %vm161, %v1786, 0
    %1798 = vmatprep.subr.mxu0 0.0
    %1799 = vmatpush1.msra.mxu0 %v1788
    %1800 = vmatprep.subr.mxu0 0.0
    %1801 = vmatpush1.msra.mxu0 %v1789
    %1802 = vmatprep.subr.mxu0 0.0
    %1803 = vmatpush1.msra.mxu0 %v1790
    %1804 = vmatprep.subr.mxu0 0.0
    %1805 = vmatpush1.msra.mxu0 %v1791
    %1806 = vmatprep.subr.mxu0 0.0
    %1807 = vmatpush1.msra.mxu0 0.0
    %1808 = vmatprep.subr.mxu0 0.0
    %1809 = vmatpush1.msra.mxu0 0.0
    %1810 = vmatprep.subr.mxu0 0.0
    %1811 = vmatpush1.msra.mxu0 0.0
    %1812 = vmatprep.subr.mxu0 0.0
    %1813 = vmatpush1.msra.mxu0 0.0
    %1814 = vmatprep.subr.mxu0 0.0
    %1815 = vmatpush1.msra.mxu0 0.0
    %1816 = vmatprep.subr.mxu0 0.0
    %1817 = vmatpush1.msra.mxu0 0.0
    %1818 = vmatprep.subr.mxu0 0.0
    %1819 = vmatpush1.msra.mxu0 0.0
    %1820 = vmatprep.subr.mxu0 0.0
    %1821 = vmatpush1.msra.mxu0 0.0
    %1822 = vmatprep.subr.mxu0 0.0
    %1823 = vmatpush1.msra.mxu0 0.0
    %1824 = vmatprep.subr.mxu0 0.0
    %1825 = vmatpush1.msra.mxu0 0.0
    %1826 = vmatprep.subr.mxu0 0.0
    %1827 = vmatpush1.msra.mxu0 0.0
    %1828 = vmatprep.subr.mxu0 0.0
    %1829 = vmatpush1.msra.mxu0 0.0
    %1830 = vmatprep.subr.mxu0 0.0
    %1831 = vmatpush1.msra.mxu0 0.0
    %1832 = vmatprep.subr.mxu0 0.0
    %1833 = vmatpush1.msra.mxu0 0.0
    %1834 = vmatprep.subr.mxu0 0.0
    %1835 = vmatpush1.msra.mxu0 0.0
    %1836 = vmatprep.subr.mxu0 0.0
    %1837 = vmatpush1.msra.mxu0 0.0
    %1838 = vmatprep.subr.mxu0 0.0
    %1839 = vmatpush1.msra.mxu0 0.0
    %1840 = vmatprep.subr.mxu0 0.0
    %1841 = vmatpush1.msra.mxu0 0.0
    %1842 = vmatprep.subr.mxu0 0.0
    %1843 = vmatpush1.msra.mxu0 0.0
    %1844 = vmatprep.subr.mxu0 0.0
    %1845 = vmatpush1.msra.mxu0 0.0
    %1846 = vmatprep.subr.mxu0 0.0
    %1847 = vmatpush1.msra.mxu0 0.0
    %1848 = vmatprep.subr.mxu0 0.0
    %1849 = vmatpush1.msra.mxu0 0.0
    %1850 = vmatprep.subr.mxu0 0.0
    %1851 = vmatpush1.msra.mxu0 0.0
    %1852 = vmatprep.subr.mxu0 0.0
    %1853 = vmatpush1.msra.mxu0 0.0
    %1854 = vmatprep.subr.mxu0 0.0
    %1855 = vmatpush1.msra.mxu0 0.0
    %1856 = vmatprep.subr.mxu0 0.0
    %1857 = vmatpush1.msra.mxu0 0.0
    %1858 = vmatprep.subr.mxu0 0.0
    %1859 = vmatpush1.msra.mxu0 0.0
    %1860 = vmatprep.subr.mxu0 0.0
    %1861 = vmatpush1.msra.mxu0 0.0
    %1862 = vmatprep.mubr.f32.mxu0 0.0
    %1863 = vmatmul.mubr.f32.gmra.mrb[0].mxu0 %v1793
    %v1864 = vpop.f32.mrb[0].mxu0
    %v1865 = vadd.f32 0.0, %v1864
    %v1866 = vpop.f32.mrb[0].mxu0
    %1867 = vmatprep.mubr.f32.mxu0 0.0
    %1868 = vmatmul.mubr.f32.gmra.mrb[0].mxu0 %v1796
    %v1869 = vpop.f32.mrb[0].mxu0
    %v1870 = vadd.f32 0.0, %v1869
    %v1871 = vpop.f32.mrb[0].mxu0
    %1872 = vdwg.mxu0
    %v1873 = vmul.f32 %v1865, %v148
    %v1874 = vmul.f32 %v1870, %v149
    %v1876 = vsel %vm161, %v1865, 0
    %v1879 = vsel %vm161, %v1870, 0
    %1881 = vmatprep.subr.mxu0 0.0
    %1882 = vmatpush1.msra.mxu0 %v152
    %1883 = vmatprep.subr.mxu0 0.0
    %1884 = vmatpush1.msra.mxu0 %v153
    %1885 = vmatprep.subr.mxu0 0.0
    %1886 = vmatpush1.msra.mxu0 %v154
    %1887 = vmatprep.subr.mxu0 0.0
    %1888 = vmatpush1.msra.mxu0 %v155
    %1889 = vmatprep.subr.mxu0 0.0
    %1890 = vmatpush1.msra.mxu0 0.0
    %1891 = vmatprep.subr.mxu0 0.0
    %1892 = vmatpush1.msra.mxu0 0.0
    %1893 = vmatprep.subr.mxu0 0.0
    %1894 = vmatpush1.msra.mxu0 0.0
    %1895 = vmatprep.subr.mxu0 0.0
    %1896 = vmatpush1.msra.mxu0 0.0
    %1897 = vmatprep.subr.mxu0 0.0
    %1898 = vmatpush1.msra.mxu0 0.0
    %1899 = vmatprep.subr.mxu0 0.0
    %1900 = vmatpush1.msra.mxu0 0.0
    %1901 = vmatprep.subr.mxu0 0.0
    %1902 = vmatpush1.msra.mxu0 0.0
    %1903 = vmatprep.subr.mxu0 0.0
    %1904 = vmatpush1.msra.mxu0 0.0
    %1905 = vmatprep.subr.mxu0 0.0
    %1906 = vmatpush1.msra.mxu0 0.0
    %1907 = vmatprep.subr.mxu0 0.0
    %1908 = vmatpush1.msra.mxu0 0.0
    %1909 = vmatprep.subr.mxu0 0.0
    %1910 = vmatpush1.msra.mxu0 0.0
    %1911 = vmatprep.subr.mxu0 0.0
    %1912 = vmatpush1.msra.mxu0 0.0
    %1913 = vmatprep.subr.mxu0 0.0
    %1914 = vmatpush1.msra.mxu0 0.0
    %1915 = vmatprep.subr.mxu0 0.0
    %1916 = vmatpush1.msra.mxu0 0.0
    %1917 = vmatprep.subr.mxu0 0.0
    %1918 = vmatpush1.msra.mxu0 0.0
    %1919 = vmatprep.subr.mxu0 0.0
    %1920 = vmatpush1.msra.mxu0 0.0
    %1921 = vmatprep.subr.mxu0 0.0
    %1922 = vmatpush1.msra.mxu0 0.0
    %1923 = vmatprep.subr.mxu0 0.0
    %1924 = vmatpush1.msra.mxu0 0.0
    %1925 = vmatprep.subr.mxu0 0.0
    %1926 = vmatpush1.msra.mxu0 0.0
    %1927 = vmatprep.subr.mxu0 0.0
    %1928 = vmatpush1.msra.mxu0 0.0
    %1929 = vmatprep.subr.mxu0 0.0
    %1930 = vmatpush1.msra.mxu0 0.0
    %1931 = vmatprep.subr.mxu0 0.0
    %1932 = vmatpush1.msra.mxu0 0.0
    %1933 = vmatprep.subr.mxu0 0.0
    %1934 = vmatpush1.msra.mxu0 0.0
    %1935 = vmatprep.subr.mxu0 0.0
    %1936 = vmatpush1.msra.mxu0 0.0
    %1937 = vmatprep.subr.mxu0 0.0
    %1938 = vmatpush1.msra.mxu0 0.0
    %1939 = vmatprep.subr.mxu0 0.0
    %1940 = vmatpush1.msra.mxu0 0.0
    %1941 = vmatprep.subr.mxu0 0.0
    %1942 = vmatpush1.msra.mxu0 0.0
    %1943 = vmatprep.subr.mxu0 0.0
    %1944 = vmatpush1.msra.mxu0 0.0
    %1945 = vmatprep.mubr.f32.mxu0 0.0
    %1946 = vmatmul.mubr.f32.gmra.mrb[0].mxu0 %v1876
    %v1947 = vpop.f32.mrb[0].mxu0
    %v1948 = vadd.f32 0.0, %v1947
    %v1949 = vpop.f32.mrb[0].mxu0
    %1950 = vmatprep.mubr.f32.mxu0 0.0
    %1951 = vmatmul.mubr.f32.gmra.mrb[0].mxu0 %v1879
    %v1952 = vpop.f32.mrb[0].mxu0
    %v1953 = vadd.f32 0.0, %v1952
    %v1954 = vpop.f32.mrb[0].mxu0
    %1955 = vdwg.mxu0
    %v1956 = vmul.f32 %v1948, %v150
    %v1957 = vmul.f32 %v1953, %v151
    %v1958 = vadd.f32 %v1873, %v1956
    %v1959 = vadd.f32 %v1874, %v1957
    %v1960 = vmul.f32 %v1865, %v360
    %v1961 = vmul.f32 %v1870, %v362
    %1962 = vrot.lane.b32.xlu0 %v1865, 96
    %v1963 = vpop.permute.xlu0 %1962
    %1964 = vrot.lane.b32.xlu0 %v1870, 96
    %v1965 = vpop.permute.xlu0 %1964
    %v1966 = vsel %vm161, %v1963, 0
    %v1968 = vsel %vm161, %v1965, 0
    %1970 = vmatprep.subr.mxu0 0.0
    %1971 = vmatpush1.msra.mxu0 %v152
    %1972 = vmatprep.subr.mxu0 0.0
    %1973 = vmatpush1.msra.mxu0 %v153
    %1974 = vmatprep.subr.mxu0 0.0
    %1975 = vmatpush1.msra.mxu0 %v154
    %1976 = vmatprep.subr.mxu0 0.0
    %1977 = vmatpush1.msra.mxu0 %v155
    %1978 = vmatprep.subr.mxu0 0.0
    %1979 = vmatpush1.msra.mxu0 0.0
    %1980 = vmatprep.subr.mxu0 0.0
    %1981 = vmatpush1.msra.mxu0 0.0
    %1982 = vmatprep.subr.mxu0 0.0
    %1983 = vmatpush1.msra.mxu0 0.0
    %1984 = vmatprep.subr.mxu0 0.0
    %1985 = vmatpush1.msra.mxu0 0.0
    %1986 = vmatprep.subr.mxu0 0.0
    %1987 = vmatpush1.msra.mxu0 0.0
    %1988 = vmatprep.subr.mxu0 0.0
    %1989 = vmatpush1.msra.mxu0 0.0
    %1990 = vmatprep.subr.mxu0 0.0
    %1991 = vmatpush1.msra.mxu0 0.0
    %1992 = vmatprep.subr.mxu0 0.0
    %1993 = vmatpush1.msra.mxu0 0.0
    %1994 = vmatprep.subr.mxu0 0.0
    %1995 = vmatpush1.msra.mxu0 0.0
    %1996 = vmatprep.subr.mxu0 0.0
    %1997 = vmatpush1.msra.mxu0 0.0
    %1998 = vmatprep.subr.mxu0 0.0
    %1999 = vmatpush1.msra.mxu0 0.0
    %2000 = vmatprep.subr.mxu0 0.0
    %2001 = vmatpush1.msra.mxu0 0.0
    %2002 = vmatprep.subr.mxu0 0.0
    %2003 = vmatpush1.msra.mxu0 0.0
    %2004 = vmatprep.subr.mxu0 0.0
    %2005 = vmatpush1.msra.mxu0 0.0
    %2006 = vmatprep.subr.mxu0 0.0
    %2007 = vmatpush1.msra.mxu0 0.0
    %2008 = vmatprep.subr.mxu0 0.0
    %2009 = vmatpush1.msra.mxu0 0.0
    %2010 = vmatprep.subr.mxu0 0.0
    %2011 = vmatpush1.msra.mxu0 0.0
    %2012 = vmatprep.subr.mxu0 0.0
    %2013 = vmatpush1.msra.mxu0 0.0
    %2014 = vmatprep.subr.mxu0 0.0
    %2015 = vmatpush1.msra.mxu0 0.0
    %2016 = vmatprep.subr.mxu0 0.0
    %2017 = vmatpush1.msra.mxu0 0.0
    %2018 = vmatprep.subr.mxu0 0.0
    %2019 = vmatpush1.msra.mxu0 0.0
    %2020 = vmatprep.subr.mxu0 0.0
    %2021 = vmatpush1.msra.mxu0 0.0
    %2022 = vmatprep.subr.mxu0 0.0
    %2023 = vmatpush1.msra.mxu0 0.0
    %2024 = vmatprep.subr.mxu0 0.0
    %2025 = vmatpush1.msra.mxu0 0.0
    %2026 = vmatprep.subr.mxu0 0.0
    %2027 = vmatpush1.msra.mxu0 0.0
    %2028 = vmatprep.subr.mxu0 0.0
    %2029 = vmatpush1.msra.mxu0 0.0
    %2030 = vmatprep.subr.mxu0 0.0
    %2031 = vmatpush1.msra.mxu0 0.0
    %2032 = vmatprep.subr.mxu0 0.0
    %2033 = vmatpush1.msra.mxu0 0.0
    %2034 = vmatprep.mubr.f32.mxu0 0.0
    %2035 = vmatmul.mubr.f32.gmra.mrb[0].mxu0 %v1966
    %v2036 = vpop.f32.mrb[0].mxu0
    %v2037 = vadd.f32 0.0, %v2036
    %v2038 = vpop.f32.mrb[0].mxu0
    %2039 = vmatprep.mubr.f32.mxu0 0.0
    %2040 = vmatmul.mubr.f32.gmra.mrb[0].mxu0 %v1968
    %v2041 = vpop.f32.mrb[0].mxu0
    %v2042 = vadd.f32 0.0, %v2041
    %v2043 = vpop.f32.mrb[0].mxu0
    %2044 = vdwg.mxu0
    %v2045 = vmul.f32 %v2037, %v150
    %v2046 = vmul.f32 %v2042, %v151
    %2049 = vrot.lane.b32.xlu0 %v2045, 32
    %v2050 = vpop.permute.xlu0 %2049
    %2051 = vrot.lane.b32.xlu0 %v2046, 32
    %v2052 = vpop.permute.xlu0 %2051
    %v2055 = vadd.f32 %v1960, %v2050
    %v2056 = vadd.f32 %v1961, %v2052
    %2059 = vrot.lane.b32.xlu0 %v2055, 96
    %v2060 = vpop.permute.xlu0 %2059
    %2061 = vrot.lane.b32.xlu0 %v2056, 96
    %v2062 = vpop.permute.xlu0 %2061
    %v2064 = vsel %vm468, %v1958, 0
    %v2067 = vsel %vm468, %v1959, 0
    %v2069 = vsel %vm468, %v2060, 0
    %v2071 = vsel %vm468, %v2062, 0
    %2073 = vmatprep.subr.mxu0 0.0
    %2074 = vmatpush1.xpose.msra.mxu0 %v2069
    %2075 = vmatprep.subr.mxu0 0.0
    %2076 = vmatpush1.xpose.msra.mxu0 %v2071
    %2077 = vmatprep.subr.mxu0 0.0
    %2078 = vmatpush1.xpose.msra.mxu0 0.0
    %2079 = vmatprep.subr.mxu0 0.0
    %2080 = vmatpush1.xpose.msra.mxu0 0.0
    %2081 = vmatprep.subr.mxu0 0.0
    %2082 = vmatpush1.xpose.msra.mxu0 0.0
    %2083 = vmatprep.subr.mxu0 0.0
    %2084 = vmatpush1.xpose.msra.mxu0 0.0
    %2085 = vmatprep.subr.mxu0 0.0
    %2086 = vmatpush1.xpose.msra.mxu0 0.0
    %2087 = vmatprep.subr.mxu0 0.0
    %2088 = vmatpush1.xpose.msra.mxu0 0.0
    %2089 = vmatprep.subr.mxu0 0.0
    %2090 = vmatpush1.xpose.msra.mxu0 0.0
    %2091 = vmatprep.subr.mxu0 0.0
    %2092 = vmatpush1.xpose.msra.mxu0 0.0
    %2093 = vmatprep.subr.mxu0 0.0
    %2094 = vmatpush1.xpose.msra.mxu0 0.0
    %2095 = vmatprep.subr.mxu0 0.0
    %2096 = vmatpush1.xpose.msra.mxu0 0.0
    %2097 = vmatprep.subr.mxu0 0.0
    %2098 = vmatpush1.xpose.msra.mxu0 0.0
    %2099 = vmatprep.subr.mxu0 0.0
    %2100 = vmatpush1.xpose.msra.mxu0 0.0
    %2101 = vmatprep.subr.mxu0 0.0
    %2102 = vmatpush1.xpose.msra.mxu0 0.0
    %2103 = vmatprep.subr.mxu0 0.0
    %2104 = vmatpush1.xpose.msra.mxu0 0.0
    %2105 = vmatprep.subr.mxu0 0.0
    %2106 = vmatpush1.xpose.msra.mxu0 0.0
    %2107 = vmatprep.subr.mxu0 0.0
    %2108 = vmatpush1.xpose.msra.mxu0 0.0
    %2109 = vmatprep.subr.mxu0 0.0
    %2110 = vmatpush1.xpose.msra.mxu0 0.0
    %2111 = vmatprep.subr.mxu0 0.0
    %2112 = vmatpush1.xpose.msra.mxu0 0.0
    %2113 = vmatprep.subr.mxu0 0.0
    %2114 = vmatpush1.xpose.msra.mxu0 0.0
    %2115 = vmatprep.subr.mxu0 0.0
    %2116 = vmatpush1.xpose.msra.mxu0 0.0
    %2117 = vmatprep.subr.mxu0 0.0
    %2118 = vmatpush1.xpose.msra.mxu0 0.0
    %2119 = vmatprep.subr.mxu0 0.0
    %2120 = vmatpush1.xpose.msra.mxu0 0.0
    %2121 = vmatprep.subr.mxu0 0.0
    %2122 = vmatpush1.xpose.msra.mxu0 0.0
    %2123 = vmatprep.subr.mxu0 0.0
    %2124 = vmatpush1.xpose.msra.mxu0 0.0
    %2125 = vmatprep.subr.mxu0 0.0
    %2126 = vmatpush1.xpose.msra.mxu0 0.0
    %2127 = vmatprep.subr.mxu0 0.0
    %2128 = vmatpush1.xpose.msra.mxu0 0.0
    %2129 = vmatprep.subr.mxu0 0.0
    %2130 = vmatpush1.xpose.msra.mxu0 0.0
    %2131 = vmatprep.subr.mxu0 0.0
    %2132 = vmatpush1.xpose.msra.mxu0 0.0
    %2133 = vmatprep.subr.mxu0 0.0
    %2134 = vmatpush1.xpose.msra.mxu0 0.0
    %2135 = vmatprep.subr.mxu0 0.0
    %2136 = vmatpush1.xpose.msra.mxu0 0.0
    %2137 = vmatprep.mubr.f32.mxu0 0.0
    %2138 = vmatmul.mubr.f32.gmra.mrb[0].mxu0 %v2064
    %v2139 = vpop.f32.mrb[0].mxu0
    %v2140 = vadd.f32 %v156, %v2139
    %v2141 = vpop.f32.mrb[0].mxu0
    %2142 = vmatprep.mubr.f32.mxu0 0.0
    %2143 = vmatmul.mubr.f32.gmra.mrb[0].mxu0 %v2067
    %v2144 = vpop.f32.mrb[0].mxu0
    %v2145 = vadd.f32 %v157, %v2144
    %v2146 = vpop.f32.mrb[0].mxu0
    %2147 = vdwg.mxu0
    %v2148 = vsel %vm554, %v2140, -inf
    %2149 = vmax.xlane.f32.xlu0 %v2148
    %v2150 = vpop.xlane.xlu0 %2149
    %v2151 = vsel %vm554, %v2145, -inf
    %2152 = vmax.xlane.f32.xlu0 %v2151
    %v2153 = vpop.xlane.xlu0 %2152
    %v2154 = vsub.f32 %v2140, %v2150
    %v2155 = vsub.f32 %v2145, %v2153
    %v2156 = vmul.f32 %v2154, 1.442695
    %v2157 = vpow.pop %v2156
    %v2158 = vmul.f32 %v2155, 1.442695
    %v2159 = vpow.pop %v2158
    %v2160 = vsel %vm554, %v2157, 0.0
    %2161 = vadd.xlane.f32.xlu0 %v2160
    %v2162 = vpop.xlane.xlu0 %2161
    %v2163 = vsel %vm554, %v2159, 0.0
    %2164 = vadd.xlane.f32.xlu0 %v2163
    %v2165 = vpop.xlane.xlu0 %2164
    %v2166 = vrcp.pop %v2162
    %v2167 = vrcp.pop %v2165
    %v2168 = vmul.f32 %v2157, %v2166
    %v2169 = vmul.f32 %v2159, %v2167
    %2170 = vrot.lane.b32.xlu0 %v1865, 64
    %v2171 = vpop.permute.xlu0 %2170
    %2172 = vrot.lane.b32.xlu0 %v1870, 64
    %v2173 = vpop.permute.xlu0 %2172
    %v2177 = vsel %vm554, %v2168, 0
    %v2180 = vsel %vm554, %v2169, 0
    %2182 = vmatprep.subr.mxu0 0.0
    %2183 = vmatpush1.msra.mxu0 %v2171
    %2184 = vmatprep.subr.mxu0 0.0
    %2185 = vmatpush1.msra.mxu0 %v2173
    %2186 = vmatprep.subr.mxu0 0.0
    %2187 = vmatpush1.msra.mxu0 0.0
    %2188 = vmatprep.subr.mxu0 0.0
    %2189 = vmatpush1.msra.mxu0 0.0
    %2190 = vmatprep.subr.mxu0 0.0
    %2191 = vmatpush1.msra.mxu0 0.0
    %2192 = vmatprep.subr.mxu0 0.0
    %2193 = vmatpush1.msra.mxu0 0.0
    %2194 = vmatprep.subr.mxu0 0.0
    %2195 = vmatpush1.msra.mxu0 0.0
    %2196 = vmatprep.subr.mxu0 0.0
    %2197 = vmatpush1.msra.mxu0 0.0
    %2198 = vmatprep.subr.mxu0 0.0
    %2199 = vmatpush1.msra.mxu0 0.0
    %2200 = vmatprep.subr.mxu0 0.0
    %2201 = vmatpush1.msra.mxu0 0.0
    %2202 = vmatprep.subr.mxu0 0.0
    %2203 = vmatpush1.msra.mxu0 0.0
    %2204 = vmatprep.subr.mxu0 0.0
    %2205 = vmatpush1.msra.mxu0 0.0
    %2206 = vmatprep.subr.mxu0 0.0
    %2207 = vmatpush1.msra.mxu0 0.0
    %2208 = vmatprep.subr.mxu0 0.0
    %2209 = vmatpush1.msra.mxu0 0.0
    %2210 = vmatprep.subr.mxu0 0.0
    %2211 = vmatpush1.msra.mxu0 0.0
    %2212 = vmatprep.subr.mxu0 0.0
    %2213 = vmatpush1.msra.mxu0 0.0
    %2214 = vmatprep.subr.mxu0 0.0
    %2215 = vmatpush1.msra.mxu0 0.0
    %2216 = vmatprep.subr.mxu0 0.0
    %2217 = vmatpush1.msra.mxu0 0.0
    %2218 = vmatprep.subr.mxu0 0.0
    %2219 = vmatpush1.msra.mxu0 0.0
    %2220 = vmatprep.subr.mxu0 0.0
    %2221 = vmatpush1.msra.mxu0 0.0
    %2222 = vmatprep.subr.mxu0 0.0
    %2223 = vmatpush1.msra.mxu0 0.0
    %2224 = vmatprep.subr.mxu0 0.0
    %2225 = vmatpush1.msra.mxu0 0.0
    %2226 = vmatprep.subr.mxu0 0.0
    %2227 = vmatpush1.msra.mxu0 0.0
    %2228 = vmatprep.subr.mxu0 0.0
    %2229 = vmatpush1.msra.mxu0 0.0
    %2230 = vmatprep.subr.mxu0 0.0
    %2231 = vmatpush1.msra.mxu0 0.0
    %2232 = vmatprep.subr.mxu0 0.0
    %2233 = vmatpush1.msra.mxu0 0.0
    %2234 = vmatprep.subr.mxu0 0.0
    %2235 = vmatpush1.msra.mxu0 0.0
    %2236 = vmatprep.subr.mxu0 0.0
    %2237 = vmatpush1.msra.mxu0 0.0
    %2238 = vmatprep.subr.mxu0 0.0
    %2239 = vmatpush1.msra.mxu0 0.0
    %2240 = vmatprep.subr.mxu0 0.0
    %2241 = vmatpush1.msra.mxu0 0.0
    %2242 = vmatprep.subr.mxu0 0.0
    %2243 = vmatpush1.msra.mxu0 0.0
    %2244 = vmatprep.subr.mxu0 0.0
    %2245 = vmatpush1.msra.mxu0 0.0
    %2246 = vmatprep.mubr.f32.mxu0 0.0
    %2247 = vmatmul.mubr.f32.gmra.mrb[0].mxu0 %v2177
    %v2248 = vpop.f32.mrb[0].mxu0
    %v2249 = vadd.f32 0.0, %v2248
    %v2250 = vpop.f32.mrb[0].mxu0
    %2251 = vmatprep.mubr.f32.mxu0 0.0
    %2252 = vmatmul.mubr.f32.gmra.mrb[0].mxu0 %v2180
    %v2253 = vpop.f32.mrb[0].mxu0
    %v2254 = vadd.f32 0.0, %v2253
    %v2255 = vpop.f32.mrb[0].mxu0
    %2256 = vdwg.mxu0
    %2257 = vrot.lane.b32.xlu0 %v1958, 120
    %v2258 = vpop.permute.xlu0 %2257
    %2259 = vrot.lane.b32.xlu0 %v1959, 120
    %v2260 = vpop.permute.xlu0 %2259
    %2261 = vrot.lane.b32.xlu0 %v2055, 88
    %v2262 = vpop.permute.xlu0 %2261
    %2263 = vrot.lane.b32.xlu0 %v2056, 88
    %v2264 = vpop.permute.xlu0 %2263
    %v2265 = vsel %vm468, %v2258, 0
    %v2267 = vsel %vm468, %v2260, 0
    %v2269 = vsel %vm468, %v2262, 0
    %v2271 = vsel %vm468, %v2264, 0
    %2273 = vmatprep.subr.mxu0 0.0
    %2274 = vmatpush1.xpose.msra.mxu0 %v2269
    %2275 = vmatprep.subr.mxu0 0.0
    %2276 = vmatpush1.xpose.msra.mxu0 %v2271
    %2277 = vmatprep.subr.mxu0 0.0
    %2278 = vmatpush1.xpose.msra.mxu0 0.0
    %2279 = vmatprep.subr.mxu0 0.0
    %2280 = vmatpush1.xpose.msra.mxu0 0.0
    %2281 = vmatprep.subr.mxu0 0.0
    %2282 = vmatpush1.xpose.msra.mxu0 0.0
    %2283 = vmatprep.subr.mxu0 0.0
    %2284 = vmatpush1.xpose.msra.mxu0 0.0
    %2285 = vmatprep.subr.mxu0 0.0
    %2286 = vmatpush1.xpose.msra.mxu0 0.0
    %2287 = vmatprep.subr.mxu0 0.0
    %2288 = vmatpush1.xpose.msra.mxu0 0.0
    %2289 = vmatprep.subr.mxu0 0.0
    %2290 = vmatpush1.xpose.msra.mxu0 0.0
    %2291 = vmatprep.subr.mxu0 0.0
    %2292 = vmatpush1.xpose.msra.mxu0 0.0
    %2293 = vmatprep.subr.mxu0 0.0
    %2294 = vmatpush1.xpose.msra.mxu0 0.0
    %2295 = vmatprep.subr.mxu0 0.0
    %2296 = vmatpush1.xpose.msra.mxu0 0.0
    %2297 = vmatprep.subr.mxu0 0.0
    %2298 = vmatpush1.xpose.msra.mxu0 0.0
    %2299 = vmatprep.subr.mxu0 0.0
    %2300 = vmatpush1.xpose.msra.mxu0 0.0
    %2301 = vmatprep.subr.mxu0 0.0
    %2302 = vmatpush1.xpose.msra.mxu0 0.0
    %2303 = vmatprep.subr.mxu0 0.0
    %2304 = vmatpush1.xpose.msra.mxu0 0.0
    %2305 = vmatprep.subr.mxu0 0.0
    %2306 = vmatpush1.xpose.msra.mxu0 0.0
    %2307 = vmatprep.subr.mxu0 0.0
    %2308 = vmatpush1.xpose.msra.mxu0 0.0
    %2309 = vmatprep.subr.mxu0 0.0
    %2310 = vmatpush1.xpose.msra.mxu0 0.0
    %2311 = vmatprep.subr.mxu0 0.0
    %2312 = vmatpush1.xpose.msra.mxu0 0.0
    %2313 = vmatprep.subr.mxu0 0.0
    %2314 = vmatpush1.xpose.msra.mxu0 0.0
    %2315 = vmatprep.subr.mxu0 0.0
    %2316 = vmatpush1.xpose.msra.mxu0 0.0
    %2317 = vmatprep.subr.mxu0 0.0
    %2318 = vmatpush1.xpose.msra.mxu0 0.0
    %2319 = vmatprep.subr.mxu0 0.0
    %2320 = vmatpush1.xpose.msra.mxu0 0.0
    %2321 = vmatprep.subr.mxu0 0.0
    %2322 = vmatpush1.xpose.msra.mxu0 0.0
    %2323 = vmatprep.subr.mxu0 0.0
    %2324 = vmatpush1.xpose.msra.mxu0 0.0
    %2325 = vmatprep.subr.mxu0 0.0
    %2326 = vmatpush1.xpose.msra.mxu0 0.0
    %2327 = vmatprep.subr.mxu0 0.0
    %2328 = vmatpush1.xpose.msra.mxu0 0.0
    %2329 = vmatprep.subr.mxu0 0.0
    %2330 = vmatpush1.xpose.msra.mxu0 0.0
    %2331 = vmatprep.subr.mxu0 0.0
    %2332 = vmatpush1.xpose.msra.mxu0 0.0
    %2333 = vmatprep.subr.mxu0 0.0
    %2334 = vmatpush1.xpose.msra.mxu0 0.0
    %2335 = vmatprep.subr.mxu0 0.0
    %2336 = vmatpush1.xpose.msra.mxu0 0.0
    %2337 = vmatprep.mubr.f32.mxu0 0.0
    %2338 = vmatmul.mubr.f32.gmra.mrb[0].mxu0 %v2265
    %v2339 = vpop.f32.mrb[0].mxu0
    %v2340 = vadd.f32 %v156, %v2339
    %v2341 = vpop.f32.mrb[0].mxu0
    %2342 = vmatprep.mubr.f32.mxu0 0.0
    %2343 = vmatmul.mubr.f32.gmra.mrb[0].mxu0 %v2267
    %v2344 = vpop.f32.mrb[0].mxu0
    %v2345 = vadd.f32 %v157, %v2344
    %v2346 = vpop.f32.mrb[0].mxu0
    %2347 = vdwg.mxu0
    %v2348 = vsel %vm554, %v2340, -inf
    %2349 = vmax.xlane.f32.xlu0 %v2348
    %v2350 = vpop.xlane.xlu0 %2349
    %v2351 = vsel %vm554, %v2345, -inf
    %2352 = vmax.xlane.f32.xlu0 %v2351
    %v2353 = vpop.xlane.xlu0 %2352
    %v2354 = vsub.f32 %v2340, %v2350
    %v2355 = vsub.f32 %v2345, %v2353
    %v2356 = vmul.f32 %v2354, 1.442695
    %v2357 = vpow.pop %v2356
    %v2358 = vmul.f32 %v2355, 1.442695
    %v2359 = vpow.pop %v2358
    %v2360 = vsel %vm554, %v2357, 0.0
    %2361 = vadd.xlane.f32.xlu0 %v2360
    %v2362 = vpop.xlane.xlu0 %2361
    %v2363 = vsel %vm554, %v2359, 0.0
    %2364 = vadd.xlane.f32.xlu0 %v2363
    %v2365 = vpop.xlane.xlu0 %2364
    %v2366 = vrcp.pop %v2362
    %v2367 = vrcp.pop %v2365
    %v2368 = vmul.f32 %v2357, %v2366
    %v2369 = vmul.f32 %v2359, %v2367
    %2370 = vrot.lane.b32.xlu0 %v1865, 56
    %v2371 = vpop.permute.xlu0 %2370
    %2372 = vrot.lane.b32.xlu0 %v1870, 56
    %v2373 = vpop.permute.xlu0 %2372
    %v2377 = vsel %vm554, %v2368, 0
    %v2380 = vsel %vm554, %v2369, 0
    %2382 = vmatprep.subr.mxu0 0.0
    %2383 = vmatpush1.msra.mxu0 %v2371
    %2384 = vmatprep.subr.mxu0 0.0
    %2385 = vmatpush1.msra.mxu0 %v2373
    %2386 = vmatprep.subr.mxu0 0.0
    %2387 = vmatpush1.msra.mxu0 0.0
    %2388 = vmatprep.subr.mxu0 0.0
    %2389 = vmatpush1.msra.mxu0 0.0
    %2390 = vmatprep.subr.mxu0 0.0
    %2391 = vmatpush1.msra.mxu0 0.0
    %2392 = vmatprep.subr.mxu0 0.0
    %2393 = vmatpush1.msra.mxu0 0.0
    %2394 = vmatprep.subr.mxu0 0.0
    %2395 = vmatpush1.msra.mxu0 0.0
    %2396 = vmatprep.subr.mxu0 0.0
    %2397 = vmatpush1.msra.mxu0 0.0
    %2398 = vmatprep.subr.mxu0 0.0
    %2399 = vmatpush1.msra.mxu0 0.0
    %2400 = vmatprep.subr.mxu0 0.0
    %2401 = vmatpush1.msra.mxu0 0.0
    %2402 = vmatprep.subr.mxu0 0.0
    %2403 = vmatpush1.msra.mxu0 0.0
    %2404 = vmatprep.subr.mxu0 0.0
    %2405 = vmatpush1.msra.mxu0 0.0
    %2406 = vmatprep.subr.mxu0 0.0
    %2407 = vmatpush1.msra.mxu0 0.0
    %2408 = vmatprep.subr.mxu0 0.0
    %2409 = vmatpush1.msra.mxu0 0.0
    %2410 = vmatprep.subr.mxu0 0.0
    %2411 = vmatpush1.msra.mxu0 0.0
    %2412 = vmatprep.subr.mxu0 0.0
    %2413 = vmatpush1.msra.mxu0 0.0
    %2414 = vmatprep.subr.mxu0 0.0
    %2415 = vmatpush1.msra.mxu0 0.0
    %2416 = vmatprep.subr.mxu0 0.0
    %2417 = vmatpush1.msra.mxu0 0.0
    %2418 = vmatprep.subr.mxu0 0.0
    %2419 = vmatpush1.msra.mxu0 0.0
    %2420 = vmatprep.subr.mxu0 0.0
    %2421 = vmatpush1.msra.mxu0 0.0
    %2422 = vmatprep.subr.mxu0 0.0
    %2423 = vmatpush1.msra.mxu0 0.0
    %2424 = vmatprep.subr.mxu0 0.0
    %2425 = vmatpush1.msra.mxu0 0.0
    %2426 = vmatprep.subr.mxu0 0.0
    %2427 = vmatpush1.msra.mxu0 0.0
    %2428 = vmatprep.subr.mxu0 0.0
    %2429 = vmatpush1.msra.mxu0 0.0
    %2430 = vmatprep.subr.mxu0 0.0
    %2431 = vmatpush1.msra.mxu0 0.0
    %2432 = vmatprep.subr.mxu0 0.0
    %2433 = vmatpush1.msra.mxu0 0.0
    %2434 = vmatprep.subr.mxu0 0.0
    %2435 = vmatpush1.msra.mxu0 0.0
    %2436 = vmatprep.subr.mxu0 0.0
    %2437 = vmatpush1.msra.mxu0 0.0
    %2438 = vmatprep.subr.mxu0 0.0
    %2439 = vmatpush1.msra.mxu0 0.0
    %2440 = vmatprep.subr.mxu0 0.0
    %2441 = vmatpush1.msra.mxu0 0.0
    %2442 = vmatprep.subr.mxu0 0.0
    %2443 = vmatpush1.msra.mxu0 0.0
    %2444 = vmatprep.subr.mxu0 0.0
    %2445 = vmatpush1.msra.mxu0 0.0
    %2446 = vmatprep.mubr.f32.mxu0 0.0
    %2447 = vmatmul.mubr.f32.gmra.mrb[0].mxu0 %v2377
    %v2448 = vpop.f32.mrb[0].mxu0
    %v2449 = vadd.f32 0.0, %v2448
    %v2450 = vpop.f32.mrb[0].mxu0
    %2451 = vmatprep.mubr.f32.mxu0 0.0
    %2452 = vmatmul.mubr.f32.gmra.mrb[0].mxu0 %v2380
    %v2453 = vpop.f32.mrb[0].mxu0
    %v2454 = vadd.f32 0.0, %v2453
    %v2455 = vpop.f32.mrb[0].mxu0
    %2456 = vdwg.mxu0
    %2457 = vrot.lane.b32.xlu0 %v1958, 112
    %v2458 = vpop.permute.xlu0 %2457
    %2459 = vrot.lane.b32.xlu0 %v1959, 112
    %v2460 = vpop.permute.xlu0 %2459
    %2461 = vrot.lane.b32.xlu0 %v2055, 80
    %v2462 = vpop.permute.xlu0 %2461
    %2463 = vrot.lane.b32.xlu0 %v2056, 80
    %v2464 = vpop.permute.xlu0 %2463
    %v2465 = vsel %vm468, %v2458, 0
    %v2467 = vsel %vm468, %v2460, 0
    %v2469 = vsel %vm468, %v2462, 0
    %v2471 = vsel %vm468, %v2464, 0
    %2473 = vmatprep.subr.mxu0 0.0
    %2474 = vmatpush1.xpose.msra.mxu0 %v2469
    %2475 = vmatprep.subr.mxu0 0.0
    %2476 = vmatpush1.xpose.msra.mxu0 %v2471
    %2477 = vmatprep.subr.mxu0 0.0
    %2478 = vmatpush1.xpose.msra.mxu0 0.0
    %2479 = vmatprep.subr.mxu0 0.0
    %2480 = vmatpush1.xpose.msra.mxu0 0.0
    %2481 = vmatprep.subr.mxu0 0.0
    %2482 = vmatpush1.xpose.msra.mxu0 0.0
    %2483 = vmatprep.subr.mxu0 0.0
    %2484 = vmatpush1.xpose.msra.mxu0 0.0
    %2485 = vmatprep.subr.mxu0 0.0
    %2486 = vmatpush1.xpose.msra.mxu0 0.0
    %2487 = vmatprep.subr.mxu0 0.0
    %2488 = vmatpush1.xpose.msra.mxu0 0.0
    %2489 = vmatprep.subr.mxu0 0.0
    %2490 = vmatpush1.xpose.msra.mxu0 0.0
    %2491 = vmatprep.subr.mxu0 0.0
    %2492 = vmatpush1.xpose.msra.mxu0 0.0
    %2493 = vmatprep.subr.mxu0 0.0
    %2494 = vmatpush1.xpose.msra.mxu0 0.0
    %2495 = vmatprep.subr.mxu0 0.0
    %2496 = vmatpush1.xpose.msra.mxu0 0.0
    %2497 = vmatprep.subr.mxu0 0.0
    %2498 = vmatpush1.xpose.msra.mxu0 0.0
    %2499 = vmatprep.subr.mxu0 0.0
    %2500 = vmatpush1.xpose.msra.mxu0 0.0
    %2501 = vmatprep.subr.mxu0 0.0
    %2502 = vmatpush1.xpose.msra.mxu0 0.0
    %2503 = vmatprep.subr.mxu0 0.0
    %2504 = vmatpush1.xpose.msra.mxu0 0.0
    %2505 = vmatprep.subr.mxu0 0.0
    %2506 = vmatpush1.xpose.msra.mxu0 0.0
    %2507 = vmatprep.subr.mxu0 0.0
    %2508 = vmatpush1.xpose.msra.mxu0 0.0
    %2509 = vmatprep.subr.mxu0 0.0
    %2510 = vmatpush1.xpose.msra.mxu0 0.0
    %2511 = vmatprep.subr.mxu0 0.0
    %2512 = vmatpush1.xpose.msra.mxu0 0.0
    %2513 = vmatprep.subr.mxu0 0.0
    %2514 = vmatpush1.xpose.msra.mxu0 0.0
    %2515 = vmatprep.subr.mxu0 0.0
    %2516 = vmatpush1.xpose.msra.mxu0 0.0
    %2517 = vmatprep.subr.mxu0 0.0
    %2518 = vmatpush1.xpose.msra.mxu0 0.0
    %2519 = vmatprep.subr.mxu0 0.0
    %2520 = vmatpush1.xpose.msra.mxu0 0.0
    %2521 = vmatprep.subr.mxu0 0.0
    %2522 = vmatpush1.xpose.msra.mxu0 0.0
    %2523 = vmatprep.subr.mxu0 0.0
    %2524 = vmatpush1.xpose.msra.mxu0 0.0
    %2525 = vmatprep.subr.mxu0 0.0
    %2526 = vmatpush1.xpose.msra.mxu0 0.0
    %2527 = vmatprep.subr.mxu0 0.0
    %2528 = vmatpush1.xpose.msra.mxu0 0.0
    %2529 = vmatprep.subr.mxu0 0.0
    %2530 = vmatpush1.xpose.msra.mxu0 0.0
    %2531 = vmatprep.subr.mxu0 0.0
    %2532 = vmatpush1.xpose.msra.mxu0 0.0
    %2533 = vmatprep.subr.mxu0 0.0
    %2534 = vmatpush1.xpose.msra.mxu0 0.0
    %2535 = vmatprep.subr.mxu0 0.0
    %2536 = vmatpush1.xpose.msra.mxu0 0.0
    %2537 = vmatprep.mubr.f32.mxu0 0.0
    %2538 = vmatmul.mubr.f32.gmra.mrb[0].mxu0 %v2465
    %v2539 = vpop.f32.mrb[0].mxu0
    %v2540 = vadd.f32 %v156, %v2539
    %v2541 = vpop.f32.mrb[0].mxu0
    %2542 = vmatprep.mubr.f32.mxu0 0.0
    %2543 = vmatmul.mubr.f32.gmra.mrb[0].mxu0 %v2467
    %v2544 = vpop.f32.mrb[0].mxu0
    %v2545 = vadd.f32 %v157, %v2544
    %v2546 = vpop.f32.mrb[0].mxu0
    %2547 = vdwg.mxu0
    %v2548 = vsel %vm554, %v2540, -inf
    %2549 = vmax.xlane.f32.xlu0 %v2548
    %v2550 = vpop.xlane.xlu0 %2549
    %v2551 = vsel %vm554, %v2545, -inf
    %2552 = vmax.xlane.f32.xlu0 %v2551
    %v2553 = vpop.xlane.xlu0 %2552
    %v2554 = vsub.f32 %v2540, %v2550
    %v2555 = vsub.f32 %v2545, %v2553
    %v2556 = vmul.f32 %v2554, 1.442695
    %v2557 = vpow.pop %v2556
    %v2558 = vmul.f32 %v2555, 1.442695
    %v2559 = vpow.pop %v2558
    %v2560 = vsel %vm554, %v2557, 0.0
    %2561 = vadd.xlane.f32.xlu0 %v2560
    %v2562 = vpop.xlane.xlu0 %2561
    %v2563 = vsel %vm554, %v2559, 0.0
    %2564 = vadd.xlane.f32.xlu0 %v2563
    %v2565 = vpop.xlane.xlu0 %2564
    %v2566 = vrcp.pop %v2562
    %v2567 = vrcp.pop %v2565
    %v2568 = vmul.f32 %v2557, %v2566
    %v2569 = vmul.f32 %v2559, %v2567
    %2570 = vrot.lane.b32.xlu0 %v1865, 48
    %v2571 = vpop.permute.xlu0 %2570
    %2572 = vrot.lane.b32.xlu0 %v1870, 48
    %v2573 = vpop.permute.xlu0 %2572
    %v2577 = vsel %vm554, %v2568, 0
    %v2580 = vsel %vm554, %v2569, 0
    %2582 = vmatprep.subr.mxu0 0.0
    %2583 = vmatpush1.msra.mxu0 %v2571
    %2584 = vmatprep.subr.mxu0 0.0
    %2585 = vmatpush1.msra.mxu0 %v2573
    %2586 = vmatprep.subr.mxu0 0.0
    %2587 = vmatpush1.msra.mxu0 0.0
    %2588 = vmatprep.subr.mxu0 0.0
    %2589 = vmatpush1.msra.mxu0 0.0
    %2590 = vmatprep.subr.mxu0 0.0
    %2591 = vmatpush1.msra.mxu0 0.0
    %2592 = vmatprep.subr.mxu0 0.0
    %2593 = vmatpush1.msra.mxu0 0.0
    %2594 = vmatprep.subr.mxu0 0.0
    %2595 = vmatpush1.msra.mxu0 0.0
    %2596 = vmatprep.subr.mxu0 0.0
    %2597 = vmatpush1.msra.mxu0 0.0
    %2598 = vmatprep.subr.mxu0 0.0
    %2599 = vmatpush1.msra.mxu0 0.0
    %2600 = vmatprep.subr.mxu0 0.0
    %2601 = vmatpush1.msra.mxu0 0.0
    %2602 = vmatprep.subr.mxu0 0.0
    %2603 = vmatpush1.msra.mxu0 0.0
    %2604 = vmatprep.subr.mxu0 0.0
    %2605 = vmatpush1.msra.mxu0 0.0
    %2606 = vmatprep.subr.mxu0 0.0
    %2607 = vmatpush1.msra.mxu0 0.0
    %2608 = vmatprep.subr.mxu0 0.0
    %2609 = vmatpush1.msra.mxu0 0.0
    %2610 = vmatprep.subr.mxu0 0.0
    %2611 = vmatpush1.msra.mxu0 0.0
    %2612 = vmatprep.subr.mxu0 0.0
    %2613 = vmatpush1.msra.mxu0 0.0
    %2614 = vmatprep.subr.mxu0 0.0
    %2615 = vmatpush1.msra.mxu0 0.0
    %2616 = vmatprep.subr.mxu0 0.0
    %2617 = vmatpush1.msra.mxu0 0.0
    %2618 = vmatprep.subr.mxu0 0.0
    %2619 = vmatpush1.msra.mxu0 0.0
    %2620 = vmatprep.subr.mxu0 0.0
    %2621 = vmatpush1.msra.mxu0 0.0
    %2622 = vmatprep.subr.mxu0 0.0
    %2623 = vmatpush1.msra.mxu0 0.0
    %2624 = vmatprep.subr.mxu0 0.0
    %2625 = vmatpush1.msra.mxu0 0.0
    %2626 = vmatprep.subr.mxu0 0.0
    %2627 = vmatpush1.msra.mxu0 0.0
    %2628 = vmatprep.subr.mxu0 0.0
    %2629 = vmatpush1.msra.mxu0 0.0
    %2630 = vmatprep.subr.mxu0 0.0
    %2631 = vmatpush1.msra.mxu0 0.0
    %2632 = vmatprep.subr.mxu0 0.0
    %2633 = vmatpush1.msra.mxu0 0.0
    %2634 = vmatprep.subr.mxu0 0.0
    %2635 = vmatpush1.msra.mxu0 0.0
    %2636 = vmatprep.subr.mxu0 0.0
    %2637 = vmatpush1.msra.mxu0 0.0
    %2638 = vmatprep.subr.mxu0 0.0
    %2639 = vmatpush1.msra.mxu0 0.0
    %2640 = vmatprep.subr.mxu0 0.0
    %2641 = vmatpush1.msra.mxu0 0.0
    %2642 = vmatprep.subr.mxu0 0.0
    %2643 = vmatpush1.msra.mxu0 0.0
    %2644 = vmatprep.subr.mxu0 0.0
    %2645 = vmatpush1.msra.mxu0 0.0
    %2646 = vmatprep.mubr.f32.mxu0 0.0
    %2647 = vmatmul.mubr.f32.gmra.mrb[0].mxu0 %v2577
    %v2648 = vpop.f32.mrb[0].mxu0
    %v2649 = vadd.f32 0.0, %v2648
    %v2650 = vpop.f32.mrb[0].mxu0
    %2651 = vmatprep.mubr.f32.mxu0 0.0
    %2652 = vmatmul.mubr.f32.gmra.mrb[0].mxu0 %v2580
    %v2653 = vpop.f32.mrb[0].mxu0
    %v2654 = vadd.f32 0.0, %v2653
    %v2655 = vpop.f32.mrb[0].mxu0
    %2656 = vdwg.mxu0
    %2657 = vrot.lane.b32.xlu0 %v1958, 104
    %v2658 = vpop.permute.xlu0 %2657
    %2659 = vrot.lane.b32.xlu0 %v1959, 104
    %v2660 = vpop.permute.xlu0 %2659
    %2661 = vrot.lane.b32.xlu0 %v2055, 72
    %v2662 = vpop.permute.xlu0 %2661
    %2663 = vrot.lane.b32.xlu0 %v2056, 72
    %v2664 = vpop.permute.xlu0 %2663
    %v2665 = vsel %vm468, %v2658, 0
    %v2667 = vsel %vm468, %v2660, 0
    %v2669 = vsel %vm468, %v2662, 0
    %v2671 = vsel %vm468, %v2664, 0
    %2673 = vmatprep.subr.mxu0 0.0
    %2674 = vmatpush1.xpose.msra.mxu0 %v2669
    %2675 = vmatprep.subr.mxu0 0.0
    %2676 = vmatpush1.xpose.msra.mxu0 %v2671
    %2677 = vmatprep.subr.mxu0 0.0
    %2678 = vmatpush1.xpose.msra.mxu0 0.0
    %2679 = vmatprep.subr.mxu0 0.0
    %2680 = vmatpush1.xpose.msra.mxu0 0.0
    %2681 = vmatprep.subr.mxu0 0.0
    %2682 = vmatpush1.xpose.msra.mxu0 0.0
    %2683 = vmatprep.subr.mxu0 0.0
    %2684 = vmatpush1.xpose.msra.mxu0 0.0
    %2685 = vmatprep.subr.mxu0 0.0
    %2686 = vmatpush1.xpose.msra.mxu0 0.0
    %2687 = vmatprep.subr.mxu0 0.0
    %2688 = vmatpush1.xpose.msra.mxu0 0.0
    %2689 = vmatprep.subr.mxu0 0.0
    %2690 = vmatpush1.xpose.msra.mxu0 0.0
    %2691 = vmatprep.subr.mxu0 0.0
    %2692 = vmatpush1.xpose.msra.mxu0 0.0
    %2693 = vmatprep.subr.mxu0 0.0
    %2694 = vmatpush1.xpose.msra.mxu0 0.0
    %2695 = vmatprep.subr.mxu0 0.0
    %2696 = vmatpush1.xpose.msra.mxu0 0.0
    %2697 = vmatprep.subr.mxu0 0.0
    %2698 = vmatpush1.xpose.msra.mxu0 0.0
    %2699 = vmatprep.subr.mxu0 0.0
    %2700 = vmatpush1.xpose.msra.mxu0 0.0
    %2701 = vmatprep.subr.mxu0 0.0
    %2702 = vmatpush1.xpose.msra.mxu0 0.0
    %2703 = vmatprep.subr.mxu0 0.0
    %2704 = vmatpush1.xpose.msra.mxu0 0.0
    %2705 = vmatprep.subr.mxu0 0.0
    %2706 = vmatpush1.xpose.msra.mxu0 0.0
    %2707 = vmatprep.subr.mxu0 0.0
    %2708 = vmatpush1.xpose.msra.mxu0 0.0
    %2709 = vmatprep.subr.mxu0 0.0
    %2710 = vmatpush1.xpose.msra.mxu0 0.0
    %2711 = vmatprep.subr.mxu0 0.0
    %2712 = vmatpush1.xpose.msra.mxu0 0.0
    %2713 = vmatprep.subr.mxu0 0.0
    %2714 = vmatpush1.xpose.msra.mxu0 0.0
    %2715 = vmatprep.subr.mxu0 0.0
    %2716 = vmatpush1.xpose.msra.mxu0 0.0
    %2717 = vmatprep.subr.mxu0 0.0
    %2718 = vmatpush1.xpose.msra.mxu0 0.0
    %2719 = vmatprep.subr.mxu0 0.0
    %2720 = vmatpush1.xpose.msra.mxu0 0.0
    %2721 = vmatprep.subr.mxu0 0.0
    %2722 = vmatpush1.xpose.msra.mxu0 0.0
    %2723 = vmatprep.subr.mxu0 0.0
    %2724 = vmatpush1.xpose.msra.mxu0 0.0
    %2725 = vmatprep.subr.mxu0 0.0
    %2726 = vmatpush1.xpose.msra.mxu0 0.0
    %2727 = vmatprep.subr.mxu0 0.0
    %2728 = vmatpush1.xpose.msra.mxu0 0.0
    %2729 = vmatprep.subr.mxu0 0.0
    %2730 = vmatpush1.xpose.msra.mxu0 0.0
    %2731 = vmatprep.subr.mxu0 0.0
    %2732 = vmatpush1.xpose.msra.mxu0 0.0
    %2733 = vmatprep.subr.mxu0 0.0
    %2734 = vmatpush1.xpose.msra.mxu0 0.0
    %2735 = vmatprep.subr.mxu0 0.0
    %2736 = vmatpush1.xpose.msra.mxu0 0.0
    %2737 = vmatprep.mubr.f32.mxu0 0.0
    %2738 = vmatmul.mubr.f32.gmra.mrb[0].mxu0 %v2665
    %v2739 = vpop.f32.mrb[0].mxu0
    %v2740 = vadd.f32 %v156, %v2739
    %v2741 = vpop.f32.mrb[0].mxu0
    %2742 = vmatprep.mubr.f32.mxu0 0.0
    %2743 = vmatmul.mubr.f32.gmra.mrb[0].mxu0 %v2667
    %v2744 = vpop.f32.mrb[0].mxu0
    %v2745 = vadd.f32 %v157, %v2744
    %v2746 = vpop.f32.mrb[0].mxu0
    %2747 = vdwg.mxu0
    %v2748 = vsel %vm554, %v2740, -inf
    %2749 = vmax.xlane.f32.xlu0 %v2748
    %v2750 = vpop.xlane.xlu0 %2749
    %v2751 = vsel %vm554, %v2745, -inf
    %2752 = vmax.xlane.f32.xlu0 %v2751
    %v2753 = vpop.xlane.xlu0 %2752
    %v2754 = vsub.f32 %v2740, %v2750
    %v2755 = vsub.f32 %v2745, %v2753
    %v2756 = vmul.f32 %v2754, 1.442695
    %v2757 = vpow.pop %v2756
    %v2758 = vmul.f32 %v2755, 1.442695
    %v2759 = vpow.pop %v2758
    %v2760 = vsel %vm554, %v2757, 0.0
    %2761 = vadd.xlane.f32.xlu0 %v2760
    %v2762 = vpop.xlane.xlu0 %2761
    %v2763 = vsel %vm554, %v2759, 0.0
    %2764 = vadd.xlane.f32.xlu0 %v2763
    %v2765 = vpop.xlane.xlu0 %2764
    %v2766 = vrcp.pop %v2762
    %v2767 = vrcp.pop %v2765
    %v2768 = vmul.f32 %v2757, %v2766
    %v2769 = vmul.f32 %v2759, %v2767
    %2770 = vrot.lane.b32.xlu0 %v1865, 40
    %v2771 = vpop.permute.xlu0 %2770
    %2772 = vrot.lane.b32.xlu0 %v1870, 40
    %v2773 = vpop.permute.xlu0 %2772
    %v2777 = vsel %vm554, %v2768, 0
    %v2780 = vsel %vm554, %v2769, 0
    %2782 = vmatprep.subr.mxu0 0.0
    %2783 = vmatpush1.msra.mxu0 %v2771
    %2784 = vmatprep.subr.mxu0 0.0
    %2785 = vmatpush1.msra.mxu0 %v2773
    %2786 = vmatprep.subr.mxu0 0.0
    %2787 = vmatpush1.msra.mxu0 0.0
    %2788 = vmatprep.subr.mxu0 0.0
    %2789 = vmatpush1.msra.mxu0 0.0
    %2790 = vmatprep.subr.mxu0 0.0
    %2791 = vmatpush1.msra.mxu0 0.0
    %2792 = vmatprep.subr.mxu0 0.0
    %2793 = vmatpush1.msra.mxu0 0.0
    %2794 = vmatprep.subr.mxu0 0.0
    %2795 = vmatpush1.msra.mxu0 0.0
    %2796 = vmatprep.subr.mxu0 0.0
    %2797 = vmatpush1.msra.mxu0 0.0
    %2798 = vmatprep.subr.mxu0 0.0
    %2799 = vmatpush1.msra.mxu0 0.0
    %2800 = vmatprep.subr.mxu0 0.0
    %2801 = vmatpush1.msra.mxu0 0.0
    %2802 = vmatprep.subr.mxu0 0.0
    %2803 = vmatpush1.msra.mxu0 0.0
    %2804 = vmatprep.subr.mxu0 0.0
    %2805 = vmatpush1.msra.mxu0 0.0
    %2806 = vmatprep.subr.mxu0 0.0
    %2807 = vmatpush1.msra.mxu0 0.0
    %2808 = vmatprep.subr.mxu0 0.0
    %2809 = vmatpush1.msra.mxu0 0.0
    %2810 = vmatprep.subr.mxu0 0.0
    %2811 = vmatpush1.msra.mxu0 0.0
    %2812 = vmatprep.subr.mxu0 0.0
    %2813 = vmatpush1.msra.mxu0 0.0
    %2814 = vmatprep.subr.mxu0 0.0
    %2815 = vmatpush1.msra.mxu0 0.0
    %2816 = vmatprep.subr.mxu0 0.0
    %2817 = vmatpush1.msra.mxu0 0.0
    %2818 = vmatprep.subr.mxu0 0.0
    %2819 = vmatpush1.msra.mxu0 0.0
    %2820 = vmatprep.subr.mxu0 0.0
    %2821 = vmatpush1.msra.mxu0 0.0
    %2822 = vmatprep.subr.mxu0 0.0
    %2823 = vmatpush1.msra.mxu0 0.0
    %2824 = vmatprep.subr.mxu0 0.0
    %2825 = vmatpush1.msra.mxu0 0.0
    %2826 = vmatprep.subr.mxu0 0.0
    %2827 = vmatpush1.msra.mxu0 0.0
    %2828 = vmatprep.subr.mxu0 0.0
    %2829 = vmatpush1.msra.mxu0 0.0
    %2830 = vmatprep.subr.mxu0 0.0
    %2831 = vmatpush1.msra.mxu0 0.0
    %2832 = vmatprep.subr.mxu0 0.0
    %2833 = vmatpush1.msra.mxu0 0.0
    %2834 = vmatprep.subr.mxu0 0.0
    %2835 = vmatpush1.msra.mxu0 0.0
    %2836 = vmatprep.subr.mxu0 0.0
    %2837 = vmatpush1.msra.mxu0 0.0
    %2838 = vmatprep.subr.mxu0 0.0
    %2839 = vmatpush1.msra.mxu0 0.0
    %2840 = vmatprep.subr.mxu0 0.0
    %2841 = vmatpush1.msra.mxu0 0.0
    %2842 = vmatprep.subr.mxu0 0.0
    %2843 = vmatpush1.msra.mxu0 0.0
    %2844 = vmatprep.subr.mxu0 0.0
    %2845 = vmatpush1.msra.mxu0 0.0
    %2846 = vmatprep.mubr.f32.mxu0 0.0
    %2847 = vmatmul.mubr.f32.gmra.mrb[0].mxu0 %v2777
    %v2848 = vpop.f32.mrb[0].mxu0
    %v2849 = vadd.f32 0.0, %v2848
    %v2850 = vpop.f32.mrb[0].mxu0
    %2851 = vmatprep.mubr.f32.mxu0 0.0
    %2852 = vmatmul.mubr.f32.gmra.mrb[0].mxu0 %v2780
    %v2853 = vpop.f32.mrb[0].mxu0
    %v2854 = vadd.f32 0.0, %v2853
    %v2855 = vpop.f32.mrb[0].mxu0
    %2856 = vdwg.mxu0
    %2859 = vrot.lane.b32.xlu0 %v2449, 8
    %v2860 = vpop.permute.xlu0 %2859
    %2861 = vrot.lane.b32.xlu0 %v2454, 8
    %v2862 = vpop.permute.xlu0 %2861
    %2867 = vrot.lane.b32.xlu0 %v2649, 16
    %v2868 = vpop.permute.xlu0 %2867
    %2869 = vrot.lane.b32.xlu0 %v2654, 16
    %v2870 = vpop.permute.xlu0 %2869
    %2875 = vrot.lane.b32.xlu0 %v2849, 24
    %v2876 = vpop.permute.xlu0 %2875
    %2877 = vrot.lane.b32.xlu0 %v2854, 24
    %v2878 = vpop.permute.xlu0 %2877
    %v2881 = vsel %vm468, %v2249, %v2860
    %v2882 = vsel %vm468, %v2254, %v2862
    %v2883 = vsel %vm554, %v2881, %v2868
    %v2884 = vsel %vm554, %v2882, %v2870
    %v2885 = vsel %vm1292, %v2883, %v2876
    %v2886 = vsel %vm1292, %v2884, %v2878
    %s2887 = scalar_lea.vmem %s7, 32
    %v2888 = vld [vmem:[%s2887] sm:$0xff]
    %v2889 = vld [vmem:[%s2887 + $0x8] sm:$0xff]
    %v2890 = vld [vmem:[%s2887 + $0x10] sm:$0xff]
    %v2891 = vld [vmem:[%s2887 + $0x18] sm:$0xff]
    %v2893 = vsel %vm161, %v2885, 0
    %v2896 = vsel %vm161, %v2886, 0
    %2898 = vmatprep.subr.mxu0 0.0
    %2899 = vmatpush1.msra.mxu0 %v2888
    %2900 = vmatprep.subr.mxu0 0.0
    %2901 = vmatpush1.msra.mxu0 %v2889
    %2902 = vmatprep.subr.mxu0 0.0
    %2903 = vmatpush1.msra.mxu0 %v2890
    %2904 = vmatprep.subr.mxu0 0.0
    %2905 = vmatpush1.msra.mxu0 %v2891
    %2906 = vmatprep.subr.mxu0 0.0
    %2907 = vmatpush1.msra.mxu0 0.0
    %2908 = vmatprep.subr.mxu0 0.0
    %2909 = vmatpush1.msra.mxu0 0.0
    %2910 = vmatprep.subr.mxu0 0.0
    %2911 = vmatpush1.msra.mxu0 0.0
    %2912 = vmatprep.subr.mxu0 0.0
    %2913 = vmatpush1.msra.mxu0 0.0
    %2914 = vmatprep.subr.mxu0 0.0
    %2915 = vmatpush1.msra.mxu0 0.0
    %2916 = vmatprep.subr.mxu0 0.0
    %2917 = vmatpush1.msra.mxu0 0.0
    %2918 = vmatprep.subr.mxu0 0.0
    %2919 = vmatpush1.msra.mxu0 0.0
    %2920 = vmatprep.subr.mxu0 0.0
    %2921 = vmatpush1.msra.mxu0 0.0
    %2922 = vmatprep.subr.mxu0 0.0
    %2923 = vmatpush1.msra.mxu0 0.0
    %2924 = vmatprep.subr.mxu0 0.0
    %2925 = vmatpush1.msra.mxu0 0.0
    %2926 = vmatprep.subr.mxu0 0.0
    %2927 = vmatpush1.msra.mxu0 0.0
    %2928 = vmatprep.subr.mxu0 0.0
    %2929 = vmatpush1.msra.mxu0 0.0
    %2930 = vmatprep.subr.mxu0 0.0
    %2931 = vmatpush1.msra.mxu0 0.0
    %2932 = vmatprep.subr.mxu0 0.0
    %2933 = vmatpush1.msra.mxu0 0.0
    %2934 = vmatprep.subr.mxu0 0.0
    %2935 = vmatpush1.msra.mxu0 0.0
    %2936 = vmatprep.subr.mxu0 0.0
    %2937 = vmatpush1.msra.mxu0 0.0
    %2938 = vmatprep.subr.mxu0 0.0
    %2939 = vmatpush1.msra.mxu0 0.0
    %2940 = vmatprep.subr.mxu0 0.0
    %2941 = vmatpush1.msra.mxu0 0.0
    %2942 = vmatprep.subr.mxu0 0.0
    %2943 = vmatpush1.msra.mxu0 0.0
    %2944 = vmatprep.subr.mxu0 0.0
    %2945 = vmatpush1.msra.mxu0 0.0
    %2946 = vmatprep.subr.mxu0 0.0
    %2947 = vmatpush1.msra.mxu0 0.0
    %2948 = vmatprep.subr.mxu0 0.0
    %2949 = vmatpush1.msra.mxu0 0.0
    %2950 = vmatprep.subr.mxu0 0.0
    %2951 = vmatpush1.msra.mxu0 0.0
    %2952 = vmatprep.subr.mxu0 0.0
    %2953 = vmatpush1.msra.mxu0 0.0
    %2954 = vmatprep.subr.mxu0 0.0
    %2955 = vmatpush1.msra.mxu0 0.0
    %2956 = vmatprep.subr.mxu0 0.0
    %2957 = vmatpush1.msra.mxu0 0.0
    %2958 = vmatprep.subr.mxu0 0.0
    %2959 = vmatpush1.msra.mxu0 0.0
    %2960 = vmatprep.subr.mxu0 0.0
    %2961 = vmatpush1.msra.mxu0 0.0
    %2962 = vmatprep.mubr.f32.mxu0 0.0
    %2963 = vmatmul.mubr.f32.gmra.mrb[0].mxu0 %v2893
    %v2964 = vpop.f32.mrb[0].mxu0
    %v2965 = vadd.f32 0.0, %v2964
    %v2966 = vpop.f32.mrb[0].mxu0
    %2967 = vmatprep.mubr.f32.mxu0 0.0
    %2968 = vmatmul.mubr.f32.gmra.mrb[0].mxu0 %v2896
    %v2969 = vpop.f32.mrb[0].mxu0
    %v2970 = vadd.f32 0.0, %v2969
    %v2971 = vpop.f32.mrb[0].mxu0
    %2972 = vdwg.mxu0
    %v2973 = vadd.f32 %v1759, %v2965
    %v2974 = vadd.f32 %v1760, %v2970
    %s2975 = scalar_lea.vmem [#allocation11], 1
    %v2976 = vld [vmem:[%s2975] sm:$0x1]
    %v2977 = vmul.f32 %v2973, %v2973
    %v2978 = vmul.f32 %v2974, %v2974
    %v2979 = vsel %vm161, %v2977, 0.0
    %2980 = vadd.xlane.f32.xlu0 %v2979
    %v2981 = vpop.xlane.xlu0 %2980
    %v2982 = vsel %vm161, %v2978, 0.0
    %2983 = vadd.xlane.f32.xlu0 %v2982
    %v2984 = vpop.xlane.xlu0 %2983
    %v2985 = vmul.f32 %v2981, %v168
    %v2986 = vmul.f32 %v2984, %v168
    %v2987 = vadd.f32 %v2985, 1e-06
    %v2988 = vadd.f32 %v2986, 1e-06
    %v2989 = vrsqrt.pop %v2987
    %v2990 = vrsqrt.pop %v2988
    %v2991 = vmul.f32 %v2973, %v2989
    %v2992 = vmul.f32 %v2974, %v2990
    %v2994 = vlaneseq
    %v2995 = vshrl.u32 %v2994, 7
    %v2996 = vsub.s32 0, %v2995
    %v2997 = vrot.slane %v2976, %v2996
    %v2999 = vmul.f32 %v2991, %v2997
    %v3000 = vmul.f32 %v2992, %v2997
    %s3001 = scalar_lea.vmem %s9, 32
    %v3002 = vld [vmem:[%s3001] sm:$0xff]
    %v3003 = vld [vmem:[%s3001 + $0x8] sm:$0xff]
    %v3004 = vld [vmem:[%s3001 + $0x10] sm:$0xff]
    %v3005 = vld [vmem:[%s3001 + $0x18] sm:$0xff]
    %v3007 = vsel %vm161, %v2999, 0
    %v3010 = vsel %vm161, %v3000, 0
    %3012 = vmatprep.subr.mxu0 0.0
    %3013 = vmatpush1.msra.mxu0 %v3002
    %3014 = vmatprep.subr.mxu0 0.0
    %3015 = vmatpush1.msra.mxu0 %v3003
    %3016 = vmatprep.subr.mxu0 0.0
    %3017 = vmatpush1.msra.mxu0 %v3004
    %3018 = vmatprep.subr.mxu0 0.0
    %3019 = vmatpush1.msra.mxu0 %v3005
    %3020 = vmatprep.subr.mxu0 0.0
    %3021 = vmatpush1.msra.mxu0 0.0
    %3022 = vmatprep.subr.mxu0 0.0
    %3023 = vmatpush1.msra.mxu0 0.0
    %3024 = vmatprep.subr.mxu0 0.0
    %3025 = vmatpush1.msra.mxu0 0.0
    %3026 = vmatprep.subr.mxu0 0.0
    %3027 = vmatpush1.msra.mxu0 0.0
    %3028 = vmatprep.subr.mxu0 0.0
    %3029 = vmatpush1.msra.mxu0 0.0
    %3030 = vmatprep.subr.mxu0 0.0
    %3031 = vmatpush1.msra.mxu0 0.0
    %3032 = vmatprep.subr.mxu0 0.0
    %3033 = vmatpush1.msra.mxu0 0.0
    %3034 = vmatprep.subr.mxu0 0.0
    %3035 = vmatpush1.msra.mxu0 0.0
    %3036 = vmatprep.subr.mxu0 0.0
    %3037 = vmatpush1.msra.mxu0 0.0
    %3038 = vmatprep.subr.mxu0 0.0
    %3039 = vmatpush1.msra.mxu0 0.0
    %3040 = vmatprep.subr.mxu0 0.0
    %3041 = vmatpush1.msra.mxu0 0.0
    %3042 = vmatprep.subr.mxu0 0.0
    %3043 = vmatpush1.msra.mxu0 0.0
    %3044 = vmatprep.subr.mxu0 0.0
    %3045 = vmatpush1.msra.mxu0 0.0
    %3046 = vmatprep.subr.mxu0 0.0
    %3047 = vmatpush1.msra.mxu0 0.0
    %3048 = vmatprep.subr.mxu0 0.0
    %3049 = vmatpush1.msra.mxu0 0.0
    %3050 = vmatprep.subr.mxu0 0.0
    %3051 = vmatpush1.msra.mxu0 0.0
    %3052 = vmatprep.subr.mxu0 0.0
    %3053 = vmatpush1.msra.mxu0 0.0
    %3054 = vmatprep.subr.mxu0 0.0
    %3055 = vmatpush1.msra.mxu0 0.0
    %3056 = vmatprep.subr.mxu0 0.0
    %3057 = vmatpush1.msra.mxu0 0.0
    %3058 = vmatprep.subr.mxu0 0.0
    %3059 = vmatpush1.msra.mxu0 0.0
    %3060 = vmatprep.subr.mxu0 0.0
    %3061 = vmatpush1.msra.mxu0 0.0
    %3062 = vmatprep.subr.mxu0 0.0
    %3063 = vmatpush1.msra.mxu0 0.0
    %3064 = vmatprep.subr.mxu0 0.0
    %3065 = vmatpush1.msra.mxu0 0.0
    %3066 = vmatprep.subr.mxu0 0.0
    %3067 = vmatpush1.msra.mxu0 0.0
    %3068 = vmatprep.subr.mxu0 0.0
    %3069 = vmatpush1.msra.mxu0 0.0
    %3070 = vmatprep.subr.mxu0 0.0
    %3071 = vmatpush1.msra.mxu0 0.0
    %3072 = vmatprep.subr.mxu0 0.0
    %3073 = vmatpush1.msra.mxu0 0.0
    %3074 = vmatprep.subr.mxu0 0.0
    %3075 = vmatpush1.msra.mxu0 0.0
    %3076 = vmatprep.mubr.f32.mxu0 0.0
    %3077 = vmatmul.mubr.f32.gmra.mrb[0].mxu0 %v3007
    %v3078 = vpop.f32.mrb[0].mxu0
    %v3079 = vadd.f32 0.0, %v3078
    %v3080 = vpop.f32.mrb[0].mxu0
    %3081 = vmatprep.mubr.f32.mxu0 0.0
    %3082 = vmatmul.mubr.f32.gmra.mrb[0].mxu0 %v3010
    %v3083 = vpop.f32.mrb[0].mxu0
    %v3084 = vadd.f32 0.0, %v3083
    %v3085 = vpop.f32.mrb[0].mxu0
    %3086 = vdwg.mxu0
    %s3087 = scalar_lea.vmem [#allocation13], 8
    %v3088 = vld [vmem:[%s3087] sm:$0xff]
    %v3090 = vsel %vm468, %v3079, 0
    %v3093 = vsel %vm468, %v3084, 0
    %3095 = vmatprep.subr.mxu0 0.0
    %3096 = vmatpush1.msra.mxu0 %v3088
    %3097 = vmatprep.subr.mxu0 0.0
    %3098 = vmatpush1.msra.mxu0 0.0
    %3099 = vmatprep.subr.mxu0 0.0
    %3100 = vmatpush1.msra.mxu0 0.0
    %3101 = vmatprep.subr.mxu0 0.0
    %3102 = vmatpush1.msra.mxu0 0.0
    %3103 = vmatprep.subr.mxu0 0.0
    %3104 = vmatpush1.msra.mxu0 0.0
    %3105 = vmatprep.subr.mxu0 0.0
    %3106 = vmatpush1.msra.mxu0 0.0
    %3107 = vmatprep.subr.mxu0 0.0
    %3108 = vmatpush1.msra.mxu0 0.0
    %3109 = vmatprep.subr.mxu0 0.0
    %3110 = vmatpush1.msra.mxu0 0.0
    %3111 = vmatprep.subr.mxu0 0.0
    %3112 = vmatpush1.msra.mxu0 0.0
    %3113 = vmatprep.subr.mxu0 0.0
    %3114 = vmatpush1.msra.mxu0 0.0
    %3115 = vmatprep.subr.mxu0 0.0
    %3116 = vmatpush1.msra.mxu0 0.0
    %3117 = vmatprep.subr.mxu0 0.0
    %3118 = vmatpush1.msra.mxu0 0.0
    %3119 = vmatprep.subr.mxu0 0.0
    %3120 = vmatpush1.msra.mxu0 0.0
    %3121 = vmatprep.subr.mxu0 0.0
    %3122 = vmatpush1.msra.mxu0 0.0
    %3123 = vmatprep.subr.mxu0 0.0
    %3124 = vmatpush1.msra.mxu0 0.0
    %3125 = vmatprep.subr.mxu0 0.0
    %3126 = vmatpush1.msra.mxu0 0.0
    %3127 = vmatprep.subr.mxu0 0.0
    %3128 = vmatpush1.msra.mxu0 0.0
    %3129 = vmatprep.subr.mxu0 0.0
    %3130 = vmatpush1.msra.mxu0 0.0
    %3131 = vmatprep.subr.mxu0 0.0
    %3132 = vmatpush1.msra.mxu0 0.0
    %3133 = vmatprep.subr.mxu0 0.0
    %3134 = vmatpush1.msra.mxu0 0.0
    %3135 = vmatprep.subr.mxu0 0.0
    %3136 = vmatpush1.msra.mxu0 0.0
    %3137 = vmatprep.subr.mxu0 0.0
    %3138 = vmatpush1.msra.mxu0 0.0
    %3139 = vmatprep.subr.mxu0 0.0
    %3140 = vmatpush1.msra.mxu0 0.0
    %3141 = vmatprep.subr.mxu0 0.0
    %3142 = vmatpush1.msra.mxu0 0.0
    %3143 = vmatprep.subr.mxu0 0.0
    %3144 = vmatpush1.msra.mxu0 0.0
    %3145 = vmatprep.subr.mxu0 0.0
    %3146 = vmatpush1.msra.mxu0 0.0
    %3147 = vmatprep.subr.mxu0 0.0
    %3148 = vmatpush1.msra.mxu0 0.0
    %3149 = vmatprep.subr.mxu0 0.0
    %3150 = vmatpush1.msra.mxu0 0.0
    %3151 = vmatprep.subr.mxu0 0.0
    %3152 = vmatpush1.msra.mxu0 0.0
    %3153 = vmatprep.subr.mxu0 0.0
    %3154 = vmatpush1.msra.mxu0 0.0
    %3155 = vmatprep.subr.mxu0 0.0
    %3156 = vmatpush1.msra.mxu0 0.0
    %3157 = vmatprep.subr.mxu0 0.0
    %3158 = vmatpush1.msra.mxu0 0.0
    %3159 = vmatprep.mubr.f32.mxu0 0.0
    %3160 = vmatmul.mubr.f32.gmra.mrb[0].mxu0 %v3090
    %v3161 = vpop.f32.mrb[0].mxu0
    %v3162 = vadd.f32 0.0, %v3161
    %v3163 = vpop.f32.mrb[0].mxu0
    %3164 = vmatprep.mubr.f32.mxu0 0.0
    %3165 = vmatmul.mubr.f32.gmra.mrb[0].mxu0 %v3093
    %v3166 = vpop.f32.mrb[0].mxu0
    %v3167 = vadd.f32 0.0, %v3166
    %v3168 = vpop.f32.mrb[0].mxu0
    %3169 = vdwg.mxu0
    %s3170 = scalar_lea.vmem %s11, 32
    %v3171 = vld [vmem:[%s3170] sm:$0xff]
    %v3172 = vld [vmem:[%s3170 + $0x8] sm:$0xff]
    %v3173 = vld [vmem:[%s3170 + $0x10] sm:$0xff]
    %v3174 = vld [vmem:[%s3170 + $0x18] sm:$0xff]
    %3175 = vmatprep.subr.mxu0 0.0
    %3176 = vmatpush1.msra.mxu0 %v3171
    %3177 = vmatprep.subr.mxu0 0.0
    %3178 = vmatpush1.msra.mxu0 %v3172
    %3179 = vmatprep.subr.mxu0 0.0
    %3180 = vmatpush1.msra.mxu0 %v3173
    %3181 = vmatprep.subr.mxu0 0.0
    %3182 = vmatpush1.msra.mxu0 %v3174
    %3183 = vmatprep.subr.mxu0 0.0
    %3184 = vmatpush1.msra.mxu0 0.0
    %3185 = vmatprep.subr.mxu0 0.0
    %3186 = vmatpush1.msra.mxu0 0.0
    %3187 = vmatprep.subr.mxu0 0.0
    %3188 = vmatpush1.msra.mxu0 0.0
    %3189 = vmatprep.subr.mxu0 0.0
    %3190 = vmatpush1.msra.mxu0 0.0
    %3191 = vmatprep.subr.mxu0 0.0
    %3192 = vmatpush1.msra.mxu0 0.0
    %3193 = vmatprep.subr.mxu0 0.0
    %3194 = vmatpush1.msra.mxu0 0.0
    %3195 = vmatprep.subr.mxu0 0.0
    %3196 = vmatpush1.msra.mxu0 0.0
    %3197 = vmatprep.subr.mxu0 0.0
    %3198 = vmatpush1.msra.mxu0 0.0
    %3199 = vmatprep.subr.mxu0 0.0
    %3200 = vmatpush1.msra.mxu0 0.0
    %3201 = vmatprep.subr.mxu0 0.0
    %3202 = vmatpush1.msra.mxu0 0.0
    %3203 = vmatprep.subr.mxu0 0.0
    %3204 = vmatpush1.msra.mxu0 0.0
    %3205 = vmatprep.subr.mxu0 0.0
    %3206 = vmatpush1.msra.mxu0 0.0
    %3207 = vmatprep.subr.mxu0 0.0
    %3208 = vmatpush1.msra.mxu0 0.0
    %3209 = vmatprep.subr.mxu0 0.0
    %3210 = vmatpush1.msra.mxu0 0.0
    %3211 = vmatprep.subr.mxu0 0.0
    %3212 = vmatpush1.msra.mxu0 0.0
    %3213 = vmatprep.subr.mxu0 0.0
    %3214 = vmatpush1.msra.mxu0 0.0
    %3215 = vmatprep.subr.mxu0 0.0
    %3216 = vmatpush1.msra.mxu0 0.0
    %3217 = vmatprep.subr.mxu0 0.0
    %3218 = vmatpush1.msra.mxu0 0.0
    %3219 = vmatprep.subr.mxu0 0.0
    %3220 = vmatpush1.msra.mxu0 0.0
    %3221 = vmatprep.subr.mxu0 0.0
    %3222 = vmatpush1.msra.mxu0 0.0
    %3223 = vmatprep.subr.mxu0 0.0
    %3224 = vmatpush1.msra.mxu0 0.0
    %3225 = vmatprep.subr.mxu0 0.0
    %3226 = vmatpush1.msra.mxu0 0.0
    %3227 = vmatprep.subr.mxu0 0.0
    %3228 = vmatpush1.msra.mxu0 0.0
    %3229 = vmatprep.subr.mxu0 0.0
    %3230 = vmatpush1.msra.mxu0 0.0
    %3231 = vmatprep.subr.mxu0 0.0
    %3232 = vmatpush1.msra.mxu0 0.0
    %3233 = vmatprep.subr.mxu0 0.0
    %3234 = vmatpush1.msra.mxu0 0.0
    %3235 = vmatprep.subr.mxu0 0.0
    %3236 = vmatpush1.msra.mxu0 0.0
    %3237 = vmatprep.subr.mxu0 0.0
    %3238 = vmatpush1.msra.mxu0 0.0
    %3239 = vmatprep.mubr.f32.mxu0 0.0
    %3240 = vmatmul.mubr.f32.gmra.mrb[0].mxu0 %v3007
    %v3241 = vpop.f32.mrb[0].mxu0
    %v3242 = vadd.f32 0.0, %v3241
    %v3243 = vpop.f32.mrb[0].mxu0
    %3244 = vmatprep.mubr.f32.mxu0 0.0
    %3245 = vmatmul.mubr.f32.gmra.mrb[0].mxu0 %v3010
    %v3246 = vpop.f32.mrb[0].mxu0
    %v3247 = vadd.f32 0.0, %v3246
    %v3248 = vpop.f32.mrb[0].mxu0
    %3249 = vdwg.mxu0
    %v3250 = vxor.u32 %v3162, 2147483648
    %v3251 = vxor.u32 %v3167, 2147483648
    %v3252 = vmul.f32 %v3250, 1.442695
    %v3253 = vpow.pop %v3252
    %v3254 = vmul.f32 %v3251, 1.442695
    %v3255 = vpow.pop %v3254
    %v3256 = vadd.f32 %v3253, 1.0
    %v3257 = vadd.f32 %v3255, 1.0
    %v3258 = vrcp.pop %v3256
    %v3259 = vmul.f32 1.0, %v3258
    %v3260 = vrcp.pop %v3257
    %v3261 = vmul.f32 1.0, %v3260
    %v3262 = vmul.f32 %v3162, %v3259
    %v3263 = vmul.f32 %v3167, %v3261
    %v3264 = vmul.f32 %v3262, %v3242
    %v3265 = vmul.f32 %v3263, %v3247
    %s3266 = scalar_lea.vmem %s12, 64
    %v3267 = vld [vmem:[%s3266] sm:$0xff]
    %v3268 = vld [vmem:[%s3266 + $0x8] sm:$0xff]
    %v3269 = vld [vmem:[%s3266 + $0x10] sm:$0xff]
    %v3270 = vld [vmem:[%s3266 + $0x18] sm:$0xff]
    %v3271 = vld [vmem:[%s3266 + $0x20] sm:$0xff]
    %v3272 = vld [vmem:[%s3266 + $0x28] sm:$0xff]
    %v3273 = vld [vmem:[%s3266 + $0x30] sm:$0xff]
    %v3274 = vld [vmem:[%s3266 + $0x38] sm:$0xff]
    %v3276 = vsel %vm1677, %v3264, 0
    %v3279 = vsel %vm1677, %v3265, 0
    %3281 = vmatprep.subr.mxu0 0.0
    %3282 = vmatpush1.msra.mxu0 %v3267
    %3283 = vmatprep.subr.mxu0 0.0
    %3284 = vmatpush1.msra.mxu0 %v3268
    %3285 = vmatprep.subr.mxu0 0.0
    %3286 = vmatpush1.msra.mxu0 %v3269
    %3287 = vmatprep.subr.mxu0 0.0
    %3288 = vmatpush1.msra.mxu0 %v3270
    %3289 = vmatprep.subr.mxu0 0.0
    %3290 = vmatpush1.msra.mxu0 %v3271
    %3291 = vmatprep.subr.mxu0 0.0
    %3292 = vmatpush1.msra.mxu0 %v3272
    %3293 = vmatprep.subr.mxu0 0.0
    %3294 = vmatpush1.msra.mxu0 %v3273
    %3295 = vmatprep.subr.mxu0 0.0
    %3296 = vmatpush1.msra.mxu0 %v3274
    %3297 = vmatprep.subr.mxu0 0.0
    %3298 = vmatpush1.msra.mxu0 0.0
    %3299 = vmatprep.subr.mxu0 0.0
    %3300 = vmatpush1.msra.mxu0 0.0
    %3301 = vmatprep.subr.mxu0 0.0
    %3302 = vmatpush1.msra.mxu0 0.0
    %3303 = vmatprep.subr.mxu0 0.0
    %3304 = vmatpush1.msra.mxu0 0.0
    %3305 = vmatprep.subr.mxu0 0.0
    %3306 = vmatpush1.msra.mxu0 0.0
    %3307 = vmatprep.subr.mxu0 0.0
    %3308 = vmatpush1.msra.mxu0 0.0
    %3309 = vmatprep.subr.mxu0 0.0
    %3310 = vmatpush1.msra.mxu0 0.0
    %3311 = vmatprep.subr.mxu0 0.0
    %3312 = vmatpush1.msra.mxu0 0.0
    %3313 = vmatprep.subr.mxu0 0.0
    %3314 = vmatpush1.msra.mxu0 0.0
    %3315 = vmatprep.subr.mxu0 0.0
    %3316 = vmatpush1.msra.mxu0 0.0
    %3317 = vmatprep.subr.mxu0 0.0
    %3318 = vmatpush1.msra.mxu0 0.0
    %3319 = vmatprep.subr.mxu0 0.0
    %3320 = vmatpush1.msra.mxu0 0.0
    %3321 = vmatprep.subr.mxu0 0.0
    %3322 = vmatpush1.msra.mxu0 0.0
    %3323 = vmatprep.subr.mxu0 0.0
    %3324 = vmatpush1.msra.mxu0 0.0
    %3325 = vmatprep.subr.mxu0 0.0
    %3326 = vmatpush1.msra.mxu0 0.0
    %3327 = vmatprep.subr.mxu0 0.0
    %3328 = vmatpush1.msra.mxu0 0.0
    %3329 = vmatprep.subr.mxu0 0.0
    %3330 = vmatpush1.msra.mxu0 0.0
    %3331 = vmatprep.subr.mxu0 0.0
    %3332 = vmatpush1.msra.mxu0 0.0
    %3333 = vmatprep.subr.mxu0 0.0
    %3334 = vmatpush1.msra.mxu0 0.0
    %3335 = vmatprep.subr.mxu0 0.0
    %3336 = vmatpush1.msra.mxu0 0.0
    %3337 = vmatprep.subr.mxu0 0.0
    %3338 = vmatpush1.msra.mxu0 0.0
    %3339 = vmatprep.subr.mxu0 0.0
    %3340 = vmatpush1.msra.mxu0 0.0
    %3341 = vmatprep.subr.mxu0 0.0
    %3342 = vmatpush1.msra.mxu0 0.0
    %3343 = vmatprep.subr.mxu0 0.0
    %3344 = vmatpush1.msra.mxu0 0.0
    %3345 = vmatprep.mubr.f32.mxu0 0.0
    %3346 = vmatmul.mubr.f32.gmra.mrb[0].mxu0 %v3276
    %v3347 = vpop.f32.mrb[0].mxu0
    %v3348 = vadd.f32 0.0, %v3347
    %v3349 = vpop.f32.mrb[0].mxu0
    %3350 = vmatprep.mubr.f32.mxu0 0.0
    %3351 = vmatmul.mubr.f32.gmra.mrb[0].mxu0 %v3279
    %v3352 = vpop.f32.mrb[0].mxu0
    %v3353 = vadd.f32 0.0, %v3352
    %v3354 = vpop.f32.mrb[0].mxu0
    %3355 = vdwg.mxu0
    %v3356 = vadd.f32 %v2973, %v3348
    %v3357 = vadd.f32 %v2974, %v3353
    %v3358 = vld [vmem:[%s13] sm:$0x1]
    %v3359 = vmul.f32 %v3356, %v3356
    %v3360 = vmul.f32 %v3357, %v3357
    %v3361 = vsel %vm161, %v3359, 0.0
    %3362 = vadd.xlane.f32.xlu0 %v3361
    %v3363 = vpop.xlane.xlu0 %3362
    %v3364 = vsel %vm161, %v3360, 0.0
    %3365 = vadd.xlane.f32.xlu0 %v3364
    %v3366 = vpop.xlane.xlu0 %3365
    %v3367 = vmul.f32 %v3363, %v168
    %v3368 = vmul.f32 %v3366, %v168
    %v3369 = vadd.f32 %v3367, 1e-06
    %v3370 = vadd.f32 %v3368, 1e-06
    %v3371 = vrsqrt.pop %v3369
    %v3372 = vrsqrt.pop %v3370
    %v3373 = vmul.f32 %v3356, %v3371
    %v3374 = vmul.f32 %v3357, %v3372
    %v3376 = vlaneseq
    %v3377 = vshrl.u32 %v3376, 7
    %v3378 = vsub.s32 0, %v3377
    %v3379 = vrot.slane %v3358, %v3378
    %v3381 = vmul.f32 %v3373, %v3379
    %v3382 = vmul.f32 %v3374, %v3379
    %v3383 = vld [vmem:[%s14] sm:$0xff]
    %v3384 = vld [vmem:[%s14 + $0x8] sm:$0xff]
    %v3385 = vld [vmem:[%s14 + $0x10] sm:$0xff]
    %v3386 = vld [vmem:[%s14 + $0x18] sm:$0xff]
    %v3388 = vsel %vm161, %v3381, 0
    %v3391 = vsel %vm161, %v3382, 0
    %3393 = vmatprep.subr.mxu0 0.0
    %3394 = vmatpush1.msra.mxu0 %v3383
    %3395 = vmatprep.subr.mxu0 0.0
    %3396 = vmatpush1.msra.mxu0 %v3384
    %3397 = vmatprep.subr.mxu0 0.0
    %3398 = vmatpush1.msra.mxu0 %v3385
    %3399 = vmatprep.subr.mxu0 0.0
    %3400 = vmatpush1.msra.mxu0 %v3386
    %3401 = vmatprep.subr.mxu0 0.0
    %3402 = vmatpush1.msra.mxu0 0.0
    %3403 = vmatprep.subr.mxu0 0.0
    %3404 = vmatpush1.msra.mxu0 0.0
    %3405 = vmatprep.subr.mxu0 0.0
    %3406 = vmatpush1.msra.mxu0 0.0
    %3407 = vmatprep.subr.mxu0 0.0
    %3408 = vmatpush1.msra.mxu0 0.0
    %3409 = vmatprep.subr.mxu0 0.0
    %3410 = vmatpush1.msra.mxu0 0.0
    %3411 = vmatprep.subr.mxu0 0.0
    %3412 = vmatpush1.msra.mxu0 0.0
    %3413 = vmatprep.subr.mxu0 0.0
    %3414 = vmatpush1.msra.mxu0 0.0
    %3415 = vmatprep.subr.mxu0 0.0
    %3416 = vmatpush1.msra.mxu0 0.0
    %3417 = vmatprep.subr.mxu0 0.0
    %3418 = vmatpush1.msra.mxu0 0.0
    %3419 = vmatprep.subr.mxu0 0.0
    %3420 = vmatpush1.msra.mxu0 0.0
    %3421 = vmatprep.subr.mxu0 0.0
    %3422 = vmatpush1.msra.mxu0 0.0
    %3423 = vmatprep.subr.mxu0 0.0
    %3424 = vmatpush1.msra.mxu0 0.0
    %3425 = vmatprep.subr.mxu0 0.0
    %3426 = vmatpush1.msra.mxu0 0.0
    %3427 = vmatprep.subr.mxu0 0.0
    %3428 = vmatpush1.msra.mxu0 0.0
    %3429 = vmatprep.subr.mxu0 0.0
    %3430 = vmatpush1.msra.mxu0 0.0
    %3431 = vmatprep.subr.mxu0 0.0
    %3432 = vmatpush1.msra.mxu0 0.0
    %3433 = vmatprep.subr.mxu0 0.0
    %3434 = vmatpush1.msra.mxu0 0.0
    %3435 = vmatprep.subr.mxu0 0.0
    %3436 = vmatpush1.msra.mxu0 0.0
    %3437 = vmatprep.subr.mxu0 0.0
    %3438 = vmatpush1.msra.mxu0 0.0
    %3439 = vmatprep.subr.mxu0 0.0
    %3440 = vmatpush1.msra.mxu0 0.0
    %3441 = vmatprep.subr.mxu0 0.0
    %3442 = vmatpush1.msra.mxu0 0.0
    %3443 = vmatprep.subr.mxu0 0.0
    %3444 = vmatpush1.msra.mxu0 0.0
    %3445 = vmatprep.subr.mxu0 0.0
    %3446 = vmatpush1.msra.mxu0 0.0
    %3447 = vmatprep.subr.mxu0 0.0
    %3448 = vmatpush1.msra.mxu0 0.0
    %3449 = vmatprep.subr.mxu0 0.0
    %3450 = vmatpush1.msra.mxu0 0.0
    %3451 = vmatprep.subr.mxu0 0.0
    %3452 = vmatpush1.msra.mxu0 0.0
    %3453 = vmatprep.subr.mxu0 0.0
    %3454 = vmatpush1.msra.mxu0 0.0
    %3455 = vmatprep.subr.mxu0 0.0
    %3456 = vmatpush1.msra.mxu0 0.0
    %3457 = vmatprep.mubr.f32.mxu0 0.0
    %3458 = vmatmul.mubr.f32.gmra.mrb[0].mxu0 %v3388
    %v3459 = vpop.f32.mrb[0].mxu0
    %v3460 = vadd.f32 0.0, %v3459
    %v3461 = vpop.f32.mrb[0].mxu0
    %3462 = vmatprep.mubr.f32.mxu0 0.0
    %3463 = vmatmul.mubr.f32.gmra.mrb[0].mxu0 %v3391
    %v3464 = vpop.f32.mrb[0].mxu0
    %v3465 = vadd.f32 0.0, %v3464
    %v3466 = vpop.f32.mrb[0].mxu0
    %3467 = vdwg.mxu0
    %3468 = vst [vmem:[#allocation14] sm:$0xff] %v3460
    %3469 = vst [vmem:[#allocation14 + $0x8] sm:$0xff] %v3465
    // Predicated region
    $region90: #{tpu_custom_call.1} parent=1 // pred_check
      _
    $region91: #{tpu_custom_call.1} parent=1 // pred_check_branch
      %3471 = sbr.rel (0) target = $region93
    $region92: #{tpu_custom_call.1} parent=1 // pred_region
      %s3473 = ssub.s32 256, 256
      %3474 = vsyncadd [#allocation4], %s3473
      %s3475 = sshll.u32 [#allocation14], 4
      %s3476 = int_to_ptr.vmem [resolvable:$true] %s3475
      %3481 = dma.vmem_to_hbm [thread:$0]  %s3476, 256, %s15, [#allocation4], 128, 128, 8
    $region93: #{tpu_custom_call.1} parent=1 // pred_fallthru
      _
    // Predicated region
    $region94: #{tpu_custom_call.1} parent=1 // pred_check
      _
    $region95: #{tpu_custom_call.1} parent=1 // pred_check_branch
      %3483 = sbr.rel (0) target = $region97
    $region96: #{tpu_custom_call.1} parent=1 // pred_region
      %3484 = dma.done [#allocation4], 256
    $region97: #{tpu_custom_call.1} parent=1 // pred_fallthru
      _
    %3485 = vsyncpa [#allocation3], 1
    %3486 = vsyncpa [#allocation6], 1
    %3487 = vsyncpa [#allocation9], 1
    %3488 = vsyncpa [#allocation12], 1
    %3489 = vsyncpa [#allocation4], 1

</llo_original>
